<compile_context>
chip_gen: v7x
topology: tpu7x:2x2x1
jax: 0.10.0
libtpu: 0.0.40
codegen_flags: <defaults>
</compile_context>

<pallas_src>
import functools

import jax
import jax.numpy as jnp
from jax.experimental import pallas as pl
from jax.experimental.pallas import tpu as pltpu


# ------------------------------ fused kernel --------------------------------

def _vit_fused_kernel(
    patches_ref,                       # (BB, Np, pd) f32; row0=cls slot(0), 1..n real, rest pad(0)
    pe_ln1_g_ref, pe_ln1_b_ref,        # (1, pd) f32
    pe_w_ref, pe_b_ref,                # (pd, D) bf16, (1, D) f32
    pe_ln2_g_ref, pe_ln2_b_ref,        # (1, D) f32
    cls_ref,                           # (1, D) f32
    pos_ref,                           # (Np, D) f32 (pad rows zero)
    attn_ln_g_ref, attn_ln_b_ref,      # (L, 1, D) f32
    w_qkv_ref,                         # (L, D, 3*H*dh) bf16   [Q heads | K heads | V heads]
    w_out_ref,                         # (L, H*dh, D) bf16
    attn_out_b_ref,                    # (L, 1, D) f32
    ff_ln_g_ref, ff_ln_b_ref,          # (L, 1, D) f32
    ff_w1_ref, ff_b1_ref,              # (L, D, F) bf16, (L, 1, F) f32
    ff_w2_ref, ff_b2_ref,              # (L, F, D) bf16, (L, 1, D) f32
    final_ln_g_ref, final_ln_b_ref,    # (1, D) f32
    head_w_ref, head_b_ref,            # (D, Cp) bf16, (1, Cp) f32
    out_ref,                           # (1, BB, Cp) f32
    *, pool, heads, dim_head, n_real,
):
    BB, Np, pd = patches_ref.shape
    L = w_qkv_ref.shape[0]
    D = pos_ref.shape[1]
    H, dh = heads, dim_head
    HDH = H * dh
    T = BB * Np
    scale = float(dh) ** -0.5

    def ln(x, g, b, eps=1e-5):
        mu = jnp.mean(x, axis=-1, keepdims=True)
        var = jnp.mean(jnp.square(x - mu), axis=-1, keepdims=True)
        return (x - mu) * jax.lax.rsqrt(var + eps) * g + b

    def gelu(x):  # exact erf GELU (torch.nn.GELU default), f32
        return 0.5 * x * (1.0 + jax.lax.erf(x * 0.7071067811865476))

    def mm(a, w):  # bf16 operands, f32 MXU accumulation
        return jnp.dot(a.astype(jnp.bfloat16), w.astype(jnp.bfloat16),
                       preferred_element_type=jnp.float32)

    # ---- patch embedding on the whole batch stacked: (BB*Np, pd) ----
    p = patches_ref[...].reshape(T, pd).astype(jnp.float32)
    y = ln(p, pe_ln1_g_ref[...], pe_ln1_b_ref[...])
    y = mm(y, pe_w_ref[...]) + pe_b_ref[...]
    y = ln(y, pe_ln2_g_ref[...], pe_ln2_b_ref[...])                      # (T, D)

    # ---- cls token (row 0 of every image) + positional embedding ----
    y3 = y.reshape(BB, Np, D)
    is_cls = jax.lax.broadcasted_iota(jnp.int32, (BB, Np, D), 1) == 0
    x3 = jnp.where(is_cls, cls_ref[...].reshape(1, 1, D), y3)
    x3 = x3 + pos_ref[...].reshape(1, Np, D)
    x = x3.reshape(T, D)                                                 # (T, D)

    # additive key-padding mask (pad tokens >= n_real never attended to)
    kiota = jax.lax.broadcasted_iota(jnp.int32, (Np, Np), 1)
    attn_bias = jnp.where(kiota < n_real, 0.0, -1e30).astype(jnp.float32)

    # ---- transformer layers (statically unrolled; L is small) ----
    # TODO(synk): for larger depth/dim, stream per-layer weights via a depth
    # grid axis (or lax.fori_loop + emit_pipeline) instead of keeping all
    # layers resident in VMEM (mandatory on v7x's 64 MiB VMEM once dim grows).
    for l in range(L):
        # --- attention block ---
        yn = ln(x, attn_ln_g_ref[l], attn_ln_b_ref[l])                   # (T, D)
        qkv = mm(yn, w_qkv_ref[l])                                       # (T, 3*H*dh)
        qkv3 = qkv.reshape(BB, Np, 3 * HDH)
        o_heads = []
        for h in range(H):
            q = qkv3[:, :, h * dh:(h + 1) * dh]                          # (BB, Np, dh)
            k = qkv3[:, :, HDH + h * dh:HDH + (h + 1) * dh]
            v = qkv3[:, :, 2 * HDH + h * dh:2 * HDH + (h + 1) * dh]
            s = jnp.einsum('bqd,bkd->bqk',
                           q.astype(jnp.bfloat16), k.astype(jnp.bfloat16),
                           preferred_element_type=jnp.float32) * scale   # (BB, Np, Np)
            s = s + attn_bias
            s = s - jnp.max(s, axis=-1, keepdims=True)
            e = jnp.exp(s)
            attn = e * pl.reciprocal(jnp.sum(e, axis=-1, keepdims=True), approx=True)
            o_h = jnp.einsum('bqk,bkd->bqd',
                             attn.astype(jnp.bfloat16), v.astype(jnp.bfloat16),
                             preferred_element_type=jnp.float32)         # (BB, Np, dh)
            o_heads.append(o_h)
        o = jnp.concatenate(o_heads, axis=-1).reshape(T, HDH)            # (T, H*dh)
        x = x + mm(o, w_out_ref[l]) + attn_out_b_ref[l]                  # residual

        # --- feed-forward block ---
        yn = ln(x, ff_ln_g_ref[l], ff_ln_b_ref[l])
        hmid = gelu(mm(yn, ff_w1_ref[l]) + ff_b1_ref[l])                 # (T, F)
        x = x + mm(hmid, ff_w2_ref[l]) + ff_b2_ref[l]                    # residual

    # ---- final norm, pool, classification head ----
    xf = ln(x, final_ln_g_ref[...], final_ln_b_ref[...]).reshape(BB, Np, D)
    if pool == "mean":
        pooled = jnp.sum(xf[:, :n_real, :], axis=1) * (1.0 / float(n_real))  # (BB, D)
    else:  # 'cls'
        pooled = xf[:, 0, :]                                                 # (BB, D)
    logits = mm(pooled, head_w_ref[...]) + head_b_ref[...]                   # (BB, Cp)
    out_ref[0] = logits.astype(out_ref.dtype)


# ------------------------------- model glue ---------------------------------

class ViTConfig:
    image_size = 16
    patch_size = 4
    num_classes = 10
    dim = 32
    depth = 2
    heads = 4
    dim_head = 8
    mlp_dim = 64
    channels = 4
    pool = "cls"


def init_params(cfg, key):
    h = cfg.image_size // cfg.patch_size
    n = h * h
    N = n + 1
    patch_dim = cfg.channels * cfg.patch_size * cfg.patch_size
    D, H, dh, F, L = cfg.dim, cfg.heads, cfg.dim_head, cfg.mlp_dim, cfg.depth

    ks = jax.random.split(key, 8)

    def nrm(k, shape, scale=0.02):
        return (scale * jax.random.normal(k, shape)).astype(jnp.float32)

    return {
        # patch embedding: LN(patch_dim) -> Linear(patch_dim, dim) -> LN(dim)
        "pe_ln1_g": jnp.ones((patch_dim,), jnp.float32),
        "pe_ln1_b": jnp.zeros((patch_dim,), jnp.float32),
        "pe_w": nrm(ks[0], (patch_dim, D)),
        "pe_b": jnp.zeros((D,), jnp.float32),
        "pe_ln2_g": jnp.ones((D,), jnp.float32),
        "pe_ln2_b": jnp.zeros((D,), jnp.float32),
        # tokens
        "cls_token": nrm(ks[1], (1, 1, D), scale=1.0),
        "pos_embedding": nrm(ks[2], (1, N, D), scale=1.0),
        # transformer layers stacked along depth; QKV packed [Q heads|K heads|V heads]
        "attn_ln_g": jnp.ones((L, D), jnp.float32),
        "attn_ln_b": jnp.zeros((L, D), jnp.float32),
        "w_qkv": nrm(ks[3], (L, D, 3 * H * dh)),
        "w_out": nrm(ks[4], (L, H * dh, D)),
        "attn_out_b": jnp.zeros((L, D), jnp.float32),
        "ff_ln_g": jnp.ones((L, D), jnp.float32),
        "ff_ln_b": jnp.zeros((L, D), jnp.float32),
        "ff_w1": nrm(ks[5], (L, D, F)),
        "ff_b1": jnp.zeros((L, F), jnp.float32),
        "ff_w2": nrm(ks[6], (L, F, D)),
        "ff_b2": jnp.zeros((L, D), jnp.float32),
        # final norm + head
        "final_ln_g": jnp.ones((D,), jnp.float32),
        "final_ln_b": jnp.zeros((D,), jnp.float32),
        "head_w": nrm(ks[7], (D, cfg.num_classes)),
        "head_b": jnp.zeros((cfg.num_classes,), jnp.float32),
    }


def vit_forward(img, params, cfg, *, images_per_step=None):
    B, C, Hi, Wi = img.shape
    ph = pw = cfg.patch_size
    gh, gw = Hi // ph, Wi // pw
    n = gh * gw
    N = n + 1                                   # real tokens (cls + patches)
    Np = ((N + 7) // 8) * 8                     # tokens padded to sublane multiple
    patch_dim = C * ph * pw
    D, Ccls = cfg.dim, cfg.num_classes
    Cp = ((Ccls + 127) // 128) * 128            # lane-dense classifier output

    # images per grid step (v7x: set to B//2 to feed both TensorCores)
    BB = B if images_per_step is None else images_per_step
    assert B % BB == 0
    G = B // BB

    # --- layout plumbing (host side) ---
    # Rearrange 'b c (h p1) (w p2) -> b (h w) (p1 p2 c)'
    x = img.reshape(B, C, gh, ph, gw, pw).transpose(0, 2, 4, 3, 5, 1)
    x = x.reshape(B, n, patch_dim).astype(jnp.float32)
    # row 0 = cls slot (filled in-kernel), rows 1..n = patches, rest = pad
    patches = jnp.zeros((B, Np, patch_dim), jnp.float32).at[:, 1:n + 1, :].set(x)

    pos = jnp.zeros((Np, D), jnp.float32).at[:N, :].set(params["pos_embedding"][0])
    cls = params["cls_token"].reshape(1, D).astype(jnp.float32)

    bf = jnp.bfloat16
    head_w = jnp.zeros((D, Cp), jnp.float32).at[:, :Ccls].set(params["head_w"]).astype(bf)
    head_b = jnp.zeros((1, Cp), jnp.float32).at[:, :Ccls].set(params["head_b"][None])

    L = cfg.depth
    inputs = [
        patches,
        params["pe_ln1_g"].reshape(1, patch_dim), params["pe_ln1_b"].reshape(1, patch_dim),
        params["pe_w"].astype(bf), params["pe_b"].reshape(1, D),
        params["pe_ln2_g"].reshape(1, D), params["pe_ln2_b"].reshape(1, D),
        cls, pos,
        params["attn_ln_g"].reshape(L, 1, D), params["attn_ln_b"].reshape(L, 1, D),
        params["w_qkv"].astype(bf), params["w_out"].astype(bf),
        params["attn_out_b"].reshape(L, 1, D),
        params["ff_ln_g"].reshape(L, 1, D), params["ff_ln_b"].reshape(L, 1, D),
        params["ff_w1"].astype(bf), params["ff_b1"].reshape(L, 1, cfg.mlp_dim),
        params["ff_w2"].astype(bf), params["ff_b2"].reshape(L, 1, D),
        params["final_ln_g"].reshape(1, D), params["final_ln_b"].reshape(1, D),
        head_w, head_b,
    ]

    def full_spec(a):
        zeros = (0,) * a.ndim
        return pl.BlockSpec(a.shape, lambda b, _z=zeros: _z)

    in_specs = [pl.BlockSpec((BB, Np, patch_dim), lambda b: (b, 0, 0))]
    in_specs += [full_spec(a) for a in inputs[1:]]

    kern = functools.partial(_vit_fused_kernel, pool=cfg.pool,
                             heads=cfg.heads, dim_head=cfg.dim_head, n_real=N)

    out = pl.pallas_call(
        kern,
        out_shape=jax.ShapeDtypeStruct((G, BB, Cp), jnp.float32),
        grid=(G,),
        in_specs=in_specs,
        out_specs=pl.BlockSpec((1, BB, Cp), lambda b: (b, 0, 0)),
        compiler_params=pltpu.CompilerParams(
            dimension_semantics=("parallel",)),
    )(*inputs)

    return out.reshape(B, Cp)[:, :Ccls]                                  # (B, n_cls)


# ---------------------------------- main -------------------------------------

if __name__ == "__main__":
    cfg = ViTConfig()
    key = jax.random.PRNGKey(0)
    k_img, k_par = jax.random.split(key)

    img = jax.random.normal(
        k_img, (2, cfg.channels, cfg.image_size, cfg.image_size), dtype=jnp.float32
    )
    params = init_params(cfg, k_par)

    fwd = jax.jit(functools.partial(vit_forward, cfg=cfg))
    out = fwd(img, params)
    out = jax.block_until_ready(out)
    assert out.shape == (2, cfg.num_classes), out.shape
    assert bool(jnp.all(jnp.isfinite(out)))
    print("KERNEL_OK")
</pallas_src>

<mosaic_0001>
module attributes {stable_mosaic.version = 11 : i64} {
  func.func @_vit_fused_kernel(%arg0: i32, %arg1: memref<2x24x64xf32, #tpu.memory_space<vmem>>, %arg2: memref<1x64xf32, #tpu.memory_space<vmem>>, %arg3: memref<1x64xf32, #tpu.memory_space<vmem>>, %arg4: memref<64x32xbf16, #tpu.memory_space<vmem>>, %arg5: memref<1x32xf32, #tpu.memory_space<vmem>>, %arg6: memref<1x32xf32, #tpu.memory_space<vmem>>, %arg7: memref<1x32xf32, #tpu.memory_space<vmem>>, %arg8: memref<1x32xf32, #tpu.memory_space<vmem>>, %arg9: memref<24x32xf32, #tpu.memory_space<vmem>>, %arg10: memref<2x1x32xf32, #tpu.memory_space<vmem>>, %arg11: memref<2x1x32xf32, #tpu.memory_space<vmem>>, %arg12: memref<2x32x96xbf16, #tpu.memory_space<vmem>>, %arg13: memref<2x32x32xbf16, #tpu.memory_space<vmem>>, %arg14: memref<2x1x32xf32, #tpu.memory_space<vmem>>, %arg15: memref<2x1x32xf32, #tpu.memory_space<vmem>>, %arg16: memref<2x1x32xf32, #tpu.memory_space<vmem>>, %arg17: memref<2x32x64xbf16, #tpu.memory_space<vmem>>, %arg18: memref<2x1x64xf32, #tpu.memory_space<vmem>>, %arg19: memref<2x64x32xbf16, #tpu.memory_space<vmem>>, %arg20: memref<2x1x32xf32, #tpu.memory_space<vmem>>, %arg21: memref<1x32xf32, #tpu.memory_space<vmem>>, %arg22: memref<1x32xf32, #tpu.memory_space<vmem>>, %arg23: memref<32x128xbf16, #tpu.memory_space<vmem>>, %arg24: memref<1x128xf32, #tpu.memory_space<vmem>>, %arg25: memref<1x2x128xf32, #tpu.memory_space<vmem>>) attributes {dimension_semantics = [#tpu.dimension_semantics<parallel>], iteration_bounds = array<i64: 1>, scalar_prefetch = 0 : i64, scratch_operands = 0 : i64, tpu.core_type = #tpu.core_type<tc>, window_params = [{transform_indices = @transform_0, window_bounds = array<i64: 2, 24, 64>}, {pipeline_mode = #tpu.pipeline_mode<synchronous>, transform_indices = @transform_1, window_bounds = array<i64: 1, 64>}, {pipeline_mode = #tpu.pipeline_mode<synchronous>, transform_indices = @transform_2, window_bounds = array<i64: 1, 64>}, {pipeline_mode = #tpu.pipeline_mode<synchronous>, transform_indices = @transform_3, window_bounds = array<i64: 64, 32>}, {pipeline_mode = #tpu.pipeline_mode<synchronous>, transform_indices = @transform_4, window_bounds = array<i64: 1, 32>}, {pipeline_mode = #tpu.pipeline_mode<synchronous>, transform_indices = @transform_5, window_bounds = array<i64: 1, 32>}, {pipeline_mode = #tpu.pipeline_mode<synchronous>, transform_indices = @transform_6, window_bounds = array<i64: 1, 32>}, {pipeline_mode = #tpu.pipeline_mode<synchronous>, transform_indices = @transform_7, window_bounds = array<i64: 1, 32>}, {pipeline_mode = #tpu.pipeline_mode<synchronous>, transform_indices = @transform_8, window_bounds = array<i64: 24, 32>}, {pipeline_mode = #tpu.pipeline_mode<synchronous>, transform_indices = @transform_9, window_bounds = array<i64: 2, 1, 32>}, {pipeline_mode = #tpu.pipeline_mode<synchronous>, transform_indices = @transform_10, window_bounds = array<i64: 2, 1, 32>}, {pipeline_mode = #tpu.pipeline_mode<synchronous>, transform_indices = @transform_11, window_bounds = array<i64: 2, 32, 96>}, {pipeline_mode = #tpu.pipeline_mode<synchronous>, transform_indices = @transform_12, window_bounds = array<i64: 2, 32, 32>}, {pipeline_mode = #tpu.pipeline_mode<synchronous>, transform_indices = @transform_13, window_bounds = array<i64: 2, 1, 32>}, {pipeline_mode = #tpu.pipeline_mode<synchronous>, transform_indices = @transform_14, window_bounds = array<i64: 2, 1, 32>}, {pipeline_mode = #tpu.pipeline_mode<synchronous>, transform_indices = @transform_15, window_bounds = array<i64: 2, 1, 32>}, {pipeline_mode = #tpu.pipeline_mode<synchronous>, transform_indices = @transform_16, window_bounds = array<i64: 2, 32, 64>}, {pipeline_mode = #tpu.pipeline_mode<synchronous>, transform_indices = @transform_17, window_bounds = array<i64: 2, 1, 64>}, {pipeline_mode = #tpu.pipeline_mode<synchronous>, transform_indices = @transform_18, window_bounds = array<i64: 2, 64, 32>}, {pipeline_mode = #tpu.pipeline_mode<synchronous>, transform_indices = @transform_19, window_bounds = array<i64: 2, 1, 32>}, {pipeline_mode = #tpu.pipeline_mode<synchronous>, transform_indices = @transform_20, window_bounds = array<i64: 1, 32>}, {pipeline_mode = #tpu.pipeline_mode<synchronous>, transform_indices = @transform_21, window_bounds = array<i64: 1, 32>}, {pipeline_mode = #tpu.pipeline_mode<synchronous>, transform_indices = @transform_22, window_bounds = array<i64: 32, 128>}, {pipeline_mode = #tpu.pipeline_mode<synchronous>, transform_indices = @transform_23, window_bounds = array<i64: 1, 128>}, {transform_indices = @transform_24, window_bounds = array<i64: 1, 2, 128>}]} {
    %c0 = arith.constant 0 : index
    %c0_0 = arith.constant 0 : index
    %c0_1 = arith.constant 0 : index
    %0 = vector.load %arg1[%c0, %c0_0, %c0_1] : memref<2x24x64xf32, #tpu.memory_space<vmem>>, vector<2x24x64xf32>
    %1 = vector.shape_cast %0 : vector<2x24x64xf32> to vector<48x64xf32>
    %c0_2 = arith.constant 0 : index
    %c0_3 = arith.constant 0 : index
    %2 = vector.load %arg2[%c0_2, %c0_3] : memref<1x64xf32, #tpu.memory_space<vmem>>, vector<1x64xf32>
    %c0_4 = arith.constant 0 : index
    %c0_5 = arith.constant 0 : index
    %3 = vector.load %arg3[%c0_4, %c0_5] : memref<1x64xf32, #tpu.memory_space<vmem>>, vector<1x64xf32>
    %cst = arith.constant dense<0.000000e+00> : vector<48xf32>
    %4 = vector.multi_reduction <add>, %1, %cst [1] : vector<48x64xf32> to vector<48xf32>
    %5 = vector.shape_cast %4 : vector<48xf32> to vector<48x1xf32>
    %cst_6 = arith.constant 6.400000e+01 : f32
    %6 = vector.broadcast %cst_6 : f32 to vector<48x1xf32>
    %7 = arith.divf %5, %6 : vector<48x1xf32>
    %8 = vector.broadcast %7 : vector<48x1xf32> to vector<48x64xf32>
    %9 = arith.subf %1, %8 : vector<48x64xf32>
    %10 = arith.mulf %9, %9 : vector<48x64xf32>
    %cst_7 = arith.constant dense<0.000000e+00> : vector<48xf32>
    %11 = vector.multi_reduction <add>, %10, %cst_7 [1] : vector<48x64xf32> to vector<48xf32>
    %12 = vector.shape_cast %11 : vector<48xf32> to vector<48x1xf32>
    %cst_8 = arith.constant 6.400000e+01 : f32
    %13 = vector.broadcast %cst_8 : f32 to vector<48x1xf32>
    %14 = arith.divf %12, %13 : vector<48x1xf32>
    %15 = vector.broadcast %7 : vector<48x1xf32> to vector<48x64xf32>
    %16 = arith.subf %1, %15 : vector<48x64xf32>
    %cst_9 = arith.constant 9.99999974E-6 : f32
    %17 = vector.broadcast %cst_9 : f32 to vector<48x1xf32>
    %18 = arith.addf %14, %17 : vector<48x1xf32>
    %19 = math.rsqrt %18 : vector<48x1xf32>
    %20 = vector.broadcast %19 : vector<48x1xf32> to vector<48x64xf32>
    %21 = arith.mulf %16, %20 : vector<48x64xf32>
    %22 = vector.broadcast %2 : vector<1x64xf32> to vector<48x64xf32>
    %23 = arith.mulf %21, %22 : vector<48x64xf32>
    %24 = vector.broadcast %3 : vector<1x64xf32> to vector<48x64xf32>
    %25 = arith.addf %23, %24 : vector<48x64xf32>
    %c0_10 = arith.constant 0 : index
    %c0_11 = arith.constant 0 : index
    %26 = vector.load %arg4[%c0_10, %c0_11] : memref<64x32xbf16, #tpu.memory_space<vmem>>, vector<64x32xbf16>
    %27 = arith.truncf %25 : vector<48x64xf32> to vector<48x64xbf16>
    %cst_12 = arith.constant dense<0.000000e+00> : vector<48x32xf32>
    %28 = tpu.matmul %27, %26, %cst_12 {dimension_numbers = #tpu.dot_dimension_numbers<[1], [0], [0], [1], [0, 0, 1, 1], [], []>} : vector<48x64xbf16>, vector<64x32xbf16>, vector<48x32xf32> -> vector<48x32xf32>
    %c0_13 = arith.constant 0 : index
    %c0_14 = arith.constant 0 : index
    %29 = vector.load %arg5[%c0_13, %c0_14] : memref<1x32xf32, #tpu.memory_space<vmem>>, vector<1x32xf32>
    %30 = vector.broadcast %29 : vector<1x32xf32> to vector<48x32xf32>
    %31 = arith.addf %28, %30 : vector<48x32xf32>
    %c0_15 = arith.constant 0 : index
    %c0_16 = arith.constant 0 : index
    %32 = vector.load %arg6[%c0_15, %c0_16] : memref<1x32xf32, #tpu.memory_space<vmem>>, vector<1x32xf32>
    %c0_17 = arith.constant 0 : index
    %c0_18 = arith.constant 0 : index
    %33 = vector.load %arg7[%c0_17, %c0_18] : memref<1x32xf32, #tpu.memory_space<vmem>>, vector<1x32xf32>
    %cst_19 = arith.constant dense<0.000000e+00> : vector<48xf32>
    %34 = vector.multi_reduction <add>, %31, %cst_19 [1] : vector<48x32xf32> to vector<48xf32>
    %35 = vector.shape_cast %34 : vector<48xf32> to vector<48x1xf32>
    %cst_20 = arith.constant 3.200000e+01 : f32
    %36 = vector.broadcast %cst_20 : f32 to vector<48x1xf32>
    %37 = arith.divf %35, %36 : vector<48x1xf32>
    %38 = vector.broadcast %37 : vector<48x1xf32> to vector<48x32xf32>
    %39 = arith.subf %31, %38 : vector<48x32xf32>
    %40 = arith.mulf %39, %39 : vector<48x32xf32>
    %cst_21 = arith.constant dense<0.000000e+00> : vector<48xf32>
    %41 = vector.multi_reduction <add>, %40, %cst_21 [1] : vector<48x32xf32> to vector<48xf32>
    %42 = vector.shape_cast %41 : vector<48xf32> to vector<48x1xf32>
    %cst_22 = arith.constant 3.200000e+01 : f32
    %43 = vector.broadcast %cst_22 : f32 to vector<48x1xf32>
    %44 = arith.divf %42, %43 : vector<48x1xf32>
    %45 = vector.broadcast %37 : vector<48x1xf32> to vector<48x32xf32>
    %46 = arith.subf %31, %45 : vector<48x32xf32>
    %cst_23 = arith.constant 9.99999974E-6 : f32
    %47 = vector.broadcast %cst_23 : f32 to vector<48x1xf32>
    %48 = arith.addf %44, %47 : vector<48x1xf32>
    %49 = math.rsqrt %48 : vector<48x1xf32>
    %50 = vector.broadcast %49 : vector<48x1xf32> to vector<48x32xf32>
    %51 = arith.mulf %46, %50 : vector<48x32xf32>
    %52 = vector.broadcast %32 : vector<1x32xf32> to vector<48x32xf32>
    %53 = arith.mulf %51, %52 : vector<48x32xf32>
    %54 = vector.broadcast %33 : vector<1x32xf32> to vector<48x32xf32>
    %55 = arith.addf %53, %54 : vector<48x32xf32>
    %56 = vector.shape_cast %55 : vector<48x32xf32> to vector<2x24x32xf32>
    %57 = tpu.iota {dimensions = array<i32: 1>} : vector<2x24x32xi32>
    %c0_i32 = arith.constant 0 : i32
    %58 = vector.broadcast %c0_i32 : i32 to vector<2x24x32xi32>
    %59 = arith.cmpi eq, %57, %58 : vector<2x24x32xi32>
    %c0_24 = arith.constant 0 : index
    %c0_25 = arith.constant 0 : index
    %60 = vector.load %arg8[%c0_24, %c0_25] : memref<1x32xf32, #tpu.memory_space<vmem>>, vector<1x32xf32>
    %61 = vector.shape_cast %60 : vector<1x32xf32> to vector<1x1x32xf32>
    %62 = vector.shape_cast %61 : vector<1x1x32xf32> to vector<1x1x32xf32>
    %63 = vector.broadcast %62 : vector<1x1x32xf32> to vector<2x24x32xf32>
    %64 = arith.select %59, %63, %56 : vector<2x24x32xi1>, vector<2x24x32xf32>
    %c0_26 = arith.constant 0 : index
    %c0_27 = arith.constant 0 : index
    %65 = vector.load %arg9[%c0_26, %c0_27] : memref<24x32xf32, #tpu.memory_space<vmem>>, vector<24x32xf32>
    %66 = vector.shape_cast %65 : vector<24x32xf32> to vector<1x24x32xf32>
    %67 = vector.broadcast %66 : vector<1x24x32xf32> to vector<2x24x32xf32>
    %68 = arith.addf %64, %67 : vector<2x24x32xf32>
    %69 = vector.shape_cast %68 : vector<2x24x32xf32> to vector<48x32xf32>
    %70 = tpu.iota {dimensions = array<i32: 1>} : vector<24x24xi32>
    %c17_i32 = arith.constant 17 : i32
    %71 = vector.broadcast %c17_i32 : i32 to vector<24x24xi32>
    %72 = arith.cmpi slt, %70, %71 : vector<24x24xi32>
    %cst_28 = arith.constant 0.000000e+00 : f32
    %cst_29 = arith.constant -1.000000e+30 : f32
    %73 = vector.broadcast %cst_28 : f32 to vector<24x24xf32>
    %74 = vector.broadcast %cst_29 : f32 to vector<24x24xf32>
    %75 = arith.select %72, %73, %74 : vector<24x24xi1>, vector<24x24xf32>
    %c0_30 = arith.constant 0 : index
    %c0_31 = arith.constant 0 : index
    %c0_32 = arith.constant 0 : index
    %76 = vector.load %arg10[%c0_30, %c0_31, %c0_32] : memref<2x1x32xf32, #tpu.memory_space<vmem>>, vector<1x1x32xf32>
    %77 = vector.shape_cast %76 : vector<1x1x32xf32> to vector<1x32xf32>
    %c0_33 = arith.constant 0 : index
    %c0_34 = arith.constant 0 : index
    %c0_35 = arith.constant 0 : index
    %78 = vector.load %arg11[%c0_33, %c0_34, %c0_35] : memref<2x1x32xf32, #tpu.memory_space<vmem>>, vector<1x1x32xf32>
    %79 = vector.shape_cast %78 : vector<1x1x32xf32> to vector<1x32xf32>
    %cst_36 = arith.constant dense<0.000000e+00> : vector<48xf32>
    %80 = vector.multi_reduction <add>, %69, %cst_36 [1] : vector<48x32xf32> to vector<48xf32>
    %81 = vector.shape_cast %80 : vector<48xf32> to vector<48x1xf32>
    %cst_37 = arith.constant 3.200000e+01 : f32
    %82 = vector.broadcast %cst_37 : f32 to vector<48x1xf32>
    %83 = arith.divf %81, %82 : vector<48x1xf32>
    %84 = vector.broadcast %83 : vector<48x1xf32> to vector<48x32xf32>
    %85 = arith.subf %69, %84 : vector<48x32xf32>
    %86 = arith.mulf %85, %85 : vector<48x32xf32>
    %cst_38 = arith.constant dense<0.000000e+00> : vector<48xf32>
    %87 = vector.multi_reduction <add>, %86, %cst_38 [1] : vector<48x32xf32> to vector<48xf32>
    %88 = vector.shape_cast %87 : vector<48xf32> to vector<48x1xf32>
    %cst_39 = arith.constant 3.200000e+01 : f32
    %89 = vector.broadcast %cst_39 : f32 to vector<48x1xf32>
    %90 = arith.divf %88, %89 : vector<48x1xf32>
    %91 = vector.broadcast %83 : vector<48x1xf32> to vector<48x32xf32>
    %92 = arith.subf %69, %91 : vector<48x32xf32>
    %cst_40 = arith.constant 9.99999974E-6 : f32
    %93 = vector.broadcast %cst_40 : f32 to vector<48x1xf32>
    %94 = arith.addf %90, %93 : vector<48x1xf32>
    %95 = math.rsqrt %94 : vector<48x1xf32>
    %96 = vector.broadcast %95 : vector<48x1xf32> to vector<48x32xf32>
    %97 = arith.mulf %92, %96 : vector<48x32xf32>
    %98 = vector.broadcast %77 : vector<1x32xf32> to vector<48x32xf32>
    %99 = arith.mulf %97, %98 : vector<48x32xf32>
    %100 = vector.broadcast %79 : vector<1x32xf32> to vector<48x32xf32>
    %101 = arith.addf %99, %100 : vector<48x32xf32>
    %c0_41 = arith.constant 0 : index
    %c0_42 = arith.constant 0 : index
    %c0_43 = arith.constant 0 : index
    %102 = vector.load %arg12[%c0_41, %c0_42, %c0_43] : memref<2x32x96xbf16, #tpu.memory_space<vmem>>, vector<1x32x96xbf16>
    %103 = vector.shape_cast %102 : vector<1x32x96xbf16> to vector<32x96xbf16>
    %104 = arith.truncf %101 : vector<48x32xf32> to vector<48x32xbf16>
    %cst_44 = arith.constant dense<0.000000e+00> : vector<48x96xf32>
    %105 = tpu.matmul %104, %103, %cst_44 {dimension_numbers = #tpu.dot_dimension_numbers<[1], [0], [0], [1], [0, 0, 1, 1], [], []>} : vector<48x32xbf16>, vector<32x96xbf16>, vector<48x96xf32> -> vector<48x96xf32>
    %106 = vector.shape_cast %105 : vector<48x96xf32> to vector<2x24x96xf32>
    %107 = vector.extract_strided_slice %106 {offsets = [0, 0, 0], sizes = [2, 24, 8], strides = [1, 1, 1]} : vector<2x24x96xf32> to vector<2x24x8xf32>
    %108 = vector.extract_strided_slice %106 {offsets = [0, 0, 32], sizes = [2, 24, 8], strides = [1, 1, 1]} : vector<2x24x96xf32> to vector<2x24x8xf32>
    %109 = vector.extract_strided_slice %106 {offsets = [0, 0, 64], sizes = [2, 24, 8], strides = [1, 1, 1]} : vector<2x24x96xf32> to vector<2x24x8xf32>
    %110 = arith.truncf %107 : vector<2x24x8xf32> to vector<2x24x8xbf16>
    %111 = arith.truncf %108 : vector<2x24x8xf32> to vector<2x24x8xbf16>
    "tpu.trace_start"() <{level = 10 : i32, message = "bqd,bkd->bqk"}> : () -> ()
    %cst_45 = arith.constant dense<0.000000e+00> : vector<2x24x24xf32>
    %112 = tpu.matmul %110, %111, %cst_45 {dimension_numbers = #tpu.dot_dimension_numbers<[2], [2], [1], [1], [0, 0, 0, 1, 1, 1], [0], [0]>} : vector<2x24x8xbf16>, vector<2x24x8xbf16>, vector<2x24x24xf32> -> vector<2x24x24xf32>
    "tpu.trace_stop"() : () -> ()
    %cst_46 = arith.constant 0.353553385 : f32
    %113 = vector.broadcast %cst_46 : f32 to vector<2x24x24xf32>
    %114 = arith.mulf %112, %113 : vector<2x24x24xf32>
    %115 = vector.shape_cast %75 : vector<24x24xf32> to vector<1x24x24xf32>
    %116 = vector.broadcast %115 : vector<1x24x24xf32> to vector<2x24x24xf32>
    %117 = arith.addf %114, %116 : vector<2x24x24xf32>
    %cst_47 = arith.constant dense<0xFF800000> : vector<2x24xf32>
    %118 = vector.multi_reduction <maximumf>, %117, %cst_47 [2] : vector<2x24x24xf32> to vector<2x24xf32>
    %119 = vector.shape_cast %118 : vector<2x24xf32> to vector<2x24x1xf32>
    %120 = vector.broadcast %119 : vector<2x24x1xf32> to vector<2x24x24xf32>
    %121 = arith.subf %117, %120 : vector<2x24x24xf32>
    %122 = math.exp %121 : vector<2x24x24xf32>
    %cst_48 = arith.constant dense<0.000000e+00> : vector<2x24xf32>
    %123 = vector.multi_reduction <add>, %122, %cst_48 [2] : vector<2x24x24xf32> to vector<2x24xf32>
    %124 = vector.shape_cast %123 : vector<2x24xf32> to vector<2x24x1xf32>
    %125 = tpu.reciprocal %124 {approx = true} : vector<2x24x1xf32> -> vector<2x24x1xf32>
    %126 = vector.broadcast %125 : vector<2x24x1xf32> to vector<2x24x24xf32>
    %127 = arith.mulf %122, %126 : vector<2x24x24xf32>
    %128 = arith.truncf %127 : vector<2x24x24xf32> to vector<2x24x24xbf16>
    %129 = arith.truncf %109 : vector<2x24x8xf32> to vector<2x24x8xbf16>
    "tpu.trace_start"() <{level = 10 : i32, message = "bqk,bkd->bqd"}> : () -> ()
    %cst_49 = arith.constant dense<0.000000e+00> : vector<2x24x8xf32>
    %130 = tpu.matmul %128, %129, %cst_49 {dimension_numbers = #tpu.dot_dimension_numbers<[2], [1], [1], [2], [0, 0, 0, 1, 1, 2], [0], [0]>} : vector<2x24x24xbf16>, vector<2x24x8xbf16>, vector<2x24x8xf32> -> vector<2x24x8xf32>
    "tpu.trace_stop"() : () -> ()
    %131 = vector.extract_strided_slice %106 {offsets = [0, 0, 8], sizes = [2, 24, 8], strides = [1, 1, 1]} : vector<2x24x96xf32> to vector<2x24x8xf32>
    %132 = vector.extract_strided_slice %106 {offsets = [0, 0, 40], sizes = [2, 24, 8], strides = [1, 1, 1]} : vector<2x24x96xf32> to vector<2x24x8xf32>
    %133 = vector.extract_strided_slice %106 {offsets = [0, 0, 72], sizes = [2, 24, 8], strides = [1, 1, 1]} : vector<2x24x96xf32> to vector<2x24x8xf32>
    %134 = arith.truncf %131 : vector<2x24x8xf32> to vector<2x24x8xbf16>
    %135 = arith.truncf %132 : vector<2x24x8xf32> to vector<2x24x8xbf16>
    "tpu.trace_start"() <{level = 10 : i32, message = "bqd,bkd->bqk"}> : () -> ()
    %cst_50 = arith.constant dense<0.000000e+00> : vector<2x24x24xf32>
    %136 = tpu.matmul %134, %135, %cst_50 {dimension_numbers = #tpu.dot_dimension_numbers<[2], [2], [1], [1], [0, 0, 0, 1, 1, 1], [0], [0]>} : vector<2x24x8xbf16>, vector<2x24x8xbf16>, vector<2x24x24xf32> -> vector<2x24x24xf32>
    "tpu.trace_stop"() : () -> ()
    %cst_51 = arith.constant 0.353553385 : f32
    %137 = vector.broadcast %cst_51 : f32 to vector<2x24x24xf32>
    %138 = arith.mulf %136, %137 : vector<2x24x24xf32>
    %139 = vector.shape_cast %75 : vector<24x24xf32> to vector<1x24x24xf32>
    %140 = vector.broadcast %139 : vector<1x24x24xf32> to vector<2x24x24xf32>
    %141 = arith.addf %138, %140 : vector<2x24x24xf32>
    %cst_52 = arith.constant dense<0xFF800000> : vector<2x24xf32>
    %142 = vector.multi_reduction <maximumf>, %141, %cst_52 [2] : vector<2x24x24xf32> to vector<2x24xf32>
    %143 = vector.shape_cast %142 : vector<2x24xf32> to vector<2x24x1xf32>
    %144 = vector.broadcast %143 : vector<2x24x1xf32> to vector<2x24x24xf32>
    %145 = arith.subf %141, %144 : vector<2x24x24xf32>
    %146 = math.exp %145 : vector<2x24x24xf32>
    %cst_53 = arith.constant dense<0.000000e+00> : vector<2x24xf32>
    %147 = vector.multi_reduction <add>, %146, %cst_53 [2] : vector<2x24x24xf32> to vector<2x24xf32>
    %148 = vector.shape_cast %147 : vector<2x24xf32> to vector<2x24x1xf32>
    %149 = tpu.reciprocal %148 {approx = true} : vector<2x24x1xf32> -> vector<2x24x1xf32>
    %150 = vector.broadcast %149 : vector<2x24x1xf32> to vector<2x24x24xf32>
    %151 = arith.mulf %146, %150 : vector<2x24x24xf32>
    %152 = arith.truncf %151 : vector<2x24x24xf32> to vector<2x24x24xbf16>
    %153 = arith.truncf %133 : vector<2x24x8xf32> to vector<2x24x8xbf16>
    "tpu.trace_start"() <{level = 10 : i32, message = "bqk,bkd->bqd"}> : () -> ()
    %cst_54 = arith.constant dense<0.000000e+00> : vector<2x24x8xf32>
    %154 = tpu.matmul %152, %153, %cst_54 {dimension_numbers = #tpu.dot_dimension_numbers<[2], [1], [1], [2], [0, 0, 0, 1, 1, 2], [0], [0]>} : vector<2x24x24xbf16>, vector<2x24x8xbf16>, vector<2x24x8xf32> -> vector<2x24x8xf32>
    "tpu.trace_stop"() : () -> ()
    %155 = vector.extract_strided_slice %106 {offsets = [0, 0, 16], sizes = [2, 24, 8], strides = [1, 1, 1]} : vector<2x24x96xf32> to vector<2x24x8xf32>
    %156 = vector.extract_strided_slice %106 {offsets = [0, 0, 48], sizes = [2, 24, 8], strides = [1, 1, 1]} : vector<2x24x96xf32> to vector<2x24x8xf32>
    %157 = vector.extract_strided_slice %106 {offsets = [0, 0, 80], sizes = [2, 24, 8], strides = [1, 1, 1]} : vector<2x24x96xf32> to vector<2x24x8xf32>
    %158 = arith.truncf %155 : vector<2x24x8xf32> to vector<2x24x8xbf16>
    %159 = arith.truncf %156 : vector<2x24x8xf32> to vector<2x24x8xbf16>
    "tpu.trace_start"() <{level = 10 : i32, message = "bqd,bkd->bqk"}> : () -> ()
    %cst_55 = arith.constant dense<0.000000e+00> : vector<2x24x24xf32>
    %160 = tpu.matmul %158, %159, %cst_55 {dimension_numbers = #tpu.dot_dimension_numbers<[2], [2], [1], [1], [0, 0, 0, 1, 1, 1], [0], [0]>} : vector<2x24x8xbf16>, vector<2x24x8xbf16>, vector<2x24x24xf32> -> vector<2x24x24xf32>
    "tpu.trace_stop"() : () -> ()
    %cst_56 = arith.constant 0.353553385 : f32
    %161 = vector.broadcast %cst_56 : f32 to vector<2x24x24xf32>
    %162 = arith.mulf %160, %161 : vector<2x24x24xf32>
    %163 = vector.shape_cast %75 : vector<24x24xf32> to vector<1x24x24xf32>
    %164 = vector.broadcast %163 : vector<1x24x24xf32> to vector<2x24x24xf32>
    %165 = arith.addf %162, %164 : vector<2x24x24xf32>
    %cst_57 = arith.constant dense<0xFF800000> : vector<2x24xf32>
    %166 = vector.multi_reduction <maximumf>, %165, %cst_57 [2] : vector<2x24x24xf32> to vector<2x24xf32>
    %167 = vector.shape_cast %166 : vector<2x24xf32> to vector<2x24x1xf32>
    %168 = vector.broadcast %167 : vector<2x24x1xf32> to vector<2x24x24xf32>
    %169 = arith.subf %165, %168 : vector<2x24x24xf32>
    %170 = math.exp %169 : vector<2x24x24xf32>
    %cst_58 = arith.constant dense<0.000000e+00> : vector<2x24xf32>
    %171 = vector.multi_reduction <add>, %170, %cst_58 [2] : vector<2x24x24xf32> to vector<2x24xf32>
    %172 = vector.shape_cast %171 : vector<2x24xf32> to vector<2x24x1xf32>
    %173 = tpu.reciprocal %172 {approx = true} : vector<2x24x1xf32> -> vector<2x24x1xf32>
    %174 = vector.broadcast %173 : vector<2x24x1xf32> to vector<2x24x24xf32>
    %175 = arith.mulf %170, %174 : vector<2x24x24xf32>
    %176 = arith.truncf %175 : vector<2x24x24xf32> to vector<2x24x24xbf16>
    %177 = arith.truncf %157 : vector<2x24x8xf32> to vector<2x24x8xbf16>
    "tpu.trace_start"() <{level = 10 : i32, message = "bqk,bkd->bqd"}> : () -> ()
    %cst_59 = arith.constant dense<0.000000e+00> : vector<2x24x8xf32>
    %178 = tpu.matmul %176, %177, %cst_59 {dimension_numbers = #tpu.dot_dimension_numbers<[2], [1], [1], [2], [0, 0, 0, 1, 1, 2], [0], [0]>} : vector<2x24x24xbf16>, vector<2x24x8xbf16>, vector<2x24x8xf32> -> vector<2x24x8xf32>
    "tpu.trace_stop"() : () -> ()
    %179 = vector.extract_strided_slice %106 {offsets = [0, 0, 24], sizes = [2, 24, 8], strides = [1, 1, 1]} : vector<2x24x96xf32> to vector<2x24x8xf32>
    %180 = vector.extract_strided_slice %106 {offsets = [0, 0, 56], sizes = [2, 24, 8], strides = [1, 1, 1]} : vector<2x24x96xf32> to vector<2x24x8xf32>
    %181 = vector.extract_strided_slice %106 {offsets = [0, 0, 88], sizes = [2, 24, 8], strides = [1, 1, 1]} : vector<2x24x96xf32> to vector<2x24x8xf32>
    %182 = arith.truncf %179 : vector<2x24x8xf32> to vector<2x24x8xbf16>
    %183 = arith.truncf %180 : vector<2x24x8xf32> to vector<2x24x8xbf16>
    "tpu.trace_start"() <{level = 10 : i32, message = "bqd,bkd->bqk"}> : () -> ()
    %cst_60 = arith.constant dense<0.000000e+00> : vector<2x24x24xf32>
    %184 = tpu.matmul %182, %183, %cst_60 {dimension_numbers = #tpu.dot_dimension_numbers<[2], [2], [1], [1], [0, 0, 0, 1, 1, 1], [0], [0]>} : vector<2x24x8xbf16>, vector<2x24x8xbf16>, vector<2x24x24xf32> -> vector<2x24x24xf32>
    "tpu.trace_stop"() : () -> ()
    %cst_61 = arith.constant 0.353553385 : f32
    %185 = vector.broadcast %cst_61 : f32 to vector<2x24x24xf32>
    %186 = arith.mulf %184, %185 : vector<2x24x24xf32>
    %187 = vector.shape_cast %75 : vector<24x24xf32> to vector<1x24x24xf32>
    %188 = vector.broadcast %187 : vector<1x24x24xf32> to vector<2x24x24xf32>
    %189 = arith.addf %186, %188 : vector<2x24x24xf32>
    %cst_62 = arith.constant dense<0xFF800000> : vector<2x24xf32>
    %190 = vector.multi_reduction <maximumf>, %189, %cst_62 [2] : vector<2x24x24xf32> to vector<2x24xf32>
    %191 = vector.shape_cast %190 : vector<2x24xf32> to vector<2x24x1xf32>
    %192 = vector.broadcast %191 : vector<2x24x1xf32> to vector<2x24x24xf32>
    %193 = arith.subf %189, %192 : vector<2x24x24xf32>
    %194 = math.exp %193 : vector<2x24x24xf32>
    %cst_63 = arith.constant dense<0.000000e+00> : vector<2x24xf32>
    %195 = vector.multi_reduction <add>, %194, %cst_63 [2] : vector<2x24x24xf32> to vector<2x24xf32>
    %196 = vector.shape_cast %195 : vector<2x24xf32> to vector<2x24x1xf32>
    %197 = tpu.reciprocal %196 {approx = true} : vector<2x24x1xf32> -> vector<2x24x1xf32>
    %198 = vector.broadcast %197 : vector<2x24x1xf32> to vector<2x24x24xf32>
    %199 = arith.mulf %194, %198 : vector<2x24x24xf32>
    %200 = arith.truncf %199 : vector<2x24x24xf32> to vector<2x24x24xbf16>
    %201 = arith.truncf %181 : vector<2x24x8xf32> to vector<2x24x8xbf16>
    "tpu.trace_start"() <{level = 10 : i32, message = "bqk,bkd->bqd"}> : () -> ()
    %cst_64 = arith.constant dense<0.000000e+00> : vector<2x24x8xf32>
    %202 = tpu.matmul %200, %201, %cst_64 {dimension_numbers = #tpu.dot_dimension_numbers<[2], [1], [1], [2], [0, 0, 0, 1, 1, 2], [0], [0]>} : vector<2x24x24xbf16>, vector<2x24x8xbf16>, vector<2x24x8xf32> -> vector<2x24x8xf32>
    "tpu.trace_stop"() : () -> ()
    %203 = tpu.concatenate %130, %154, %178, %202 in 2 : vector<2x24x8xf32>, vector<2x24x8xf32>, vector<2x24x8xf32>, vector<2x24x8xf32> -> vector<2x24x32xf32>
    %204 = vector.shape_cast %203 : vector<2x24x32xf32> to vector<48x32xf32>
    %c0_65 = arith.constant 0 : index
    %c0_66 = arith.constant 0 : index
    %c0_67 = arith.constant 0 : index
    %205 = vector.load %arg13[%c0_65, %c0_66, %c0_67] : memref<2x32x32xbf16, #tpu.memory_space<vmem>>, vector<1x32x32xbf16>
    %206 = vector.shape_cast %205 : vector<1x32x32xbf16> to vector<32x32xbf16>
    %207 = arith.truncf %204 : vector<48x32xf32> to vector<48x32xbf16>
    %cst_68 = arith.constant dense<0.000000e+00> : vector<48x32xf32>
    %208 = tpu.matmul %207, %206, %cst_68 {dimension_numbers = #tpu.dot_dimension_numbers<[1], [0], [0], [1], [0, 0, 1, 1], [], []>} : vector<48x32xbf16>, vector<32x32xbf16>, vector<48x32xf32> -> vector<48x32xf32>
    %209 = arith.addf %69, %208 : vector<48x32xf32>
    %c0_69 = arith.constant 0 : index
    %c0_70 = arith.constant 0 : index
    %c0_71 = arith.constant 0 : index
    %210 = vector.load %arg14[%c0_69, %c0_70, %c0_71] : memref<2x1x32xf32, #tpu.memory_space<vmem>>, vector<1x1x32xf32>
    %211 = vector.shape_cast %210 : vector<1x1x32xf32> to vector<1x32xf32>
    %212 = vector.broadcast %211 : vector<1x32xf32> to vector<48x32xf32>
    %213 = arith.addf %209, %212 : vector<48x32xf32>
    %c0_72 = arith.constant 0 : index
    %c0_73 = arith.constant 0 : index
    %c0_74 = arith.constant 0 : index
    %214 = vector.load %arg15[%c0_72, %c0_73, %c0_74] : memref<2x1x32xf32, #tpu.memory_space<vmem>>, vector<1x1x32xf32>
    %215 = vector.shape_cast %214 : vector<1x1x32xf32> to vector<1x32xf32>
    %c0_75 = arith.constant 0 : index
    %c0_76 = arith.constant 0 : index
    %c0_77 = arith.constant 0 : index
    %216 = vector.load %arg16[%c0_75, %c0_76, %c0_77] : memref<2x1x32xf32, #tpu.memory_space<vmem>>, vector<1x1x32xf32>
    %217 = vector.shape_cast %216 : vector<1x1x32xf32> to vector<1x32xf32>
    %cst_78 = arith.constant dense<0.000000e+00> : vector<48xf32>
    %218 = vector.multi_reduction <add>, %213, %cst_78 [1] : vector<48x32xf32> to vector<48xf32>
    %219 = vector.shape_cast %218 : vector<48xf32> to vector<48x1xf32>
    %cst_79 = arith.constant 3.200000e+01 : f32
    %220 = vector.broadcast %cst_79 : f32 to vector<48x1xf32>
    %221 = arith.divf %219, %220 : vector<48x1xf32>
    %222 = vector.broadcast %221 : vector<48x1xf32> to vector<48x32xf32>
    %223 = arith.subf %213, %222 : vector<48x32xf32>
    %224 = arith.mulf %223, %223 : vector<48x32xf32>
    %cst_80 = arith.constant dense<0.000000e+00> : vector<48xf32>
    %225 = vector.multi_reduction <add>, %224, %cst_80 [1] : vector<48x32xf32> to vector<48xf32>
    %226 = vector.shape_cast %225 : vector<48xf32> to vector<48x1xf32>
    %cst_81 = arith.constant 3.200000e+01 : f32
    %227 = vector.broadcast %cst_81 : f32 to vector<48x1xf32>
    %228 = arith.divf %226, %227 : vector<48x1xf32>
    %229 = vector.broadcast %221 : vector<48x1xf32> to vector<48x32xf32>
    %230 = arith.subf %213, %229 : vector<48x32xf32>
    %cst_82 = arith.constant 9.99999974E-6 : f32
    %231 = vector.broadcast %cst_82 : f32 to vector<48x1xf32>
    %232 = arith.addf %228, %231 : vector<48x1xf32>
    %233 = math.rsqrt %232 : vector<48x1xf32>
    %234 = vector.broadcast %233 : vector<48x1xf32> to vector<48x32xf32>
    %235 = arith.mulf %230, %234 : vector<48x32xf32>
    %236 = vector.broadcast %215 : vector<1x32xf32> to vector<48x32xf32>
    %237 = arith.mulf %235, %236 : vector<48x32xf32>
    %238 = vector.broadcast %217 : vector<1x32xf32> to vector<48x32xf32>
    %239 = arith.addf %237, %238 : vector<48x32xf32>
    %c0_83 = arith.constant 0 : index
    %c0_84 = arith.constant 0 : index
    %c0_85 = arith.constant 0 : index
    %240 = vector.load %arg17[%c0_83, %c0_84, %c0_85] : memref<2x32x64xbf16, #tpu.memory_space<vmem>>, vector<1x32x64xbf16>
    %241 = vector.shape_cast %240 : vector<1x32x64xbf16> to vector<32x64xbf16>
    %242 = arith.truncf %239 : vector<48x32xf32> to vector<48x32xbf16>
    %cst_86 = arith.constant dense<0.000000e+00> : vector<48x64xf32>
    %243 = tpu.matmul %242, %241, %cst_86 {dimension_numbers = #tpu.dot_dimension_numbers<[1], [0], [0], [1], [0, 0, 1, 1], [], []>} : vector<48x32xbf16>, vector<32x64xbf16>, vector<48x64xf32> -> vector<48x64xf32>
    %c0_87 = arith.constant 0 : index
    %c0_88 = arith.constant 0 : index
    %c0_89 = arith.constant 0 : index
    %244 = vector.load %arg18[%c0_87, %c0_88, %c0_89] : memref<2x1x64xf32, #tpu.memory_space<vmem>>, vector<1x1x64xf32>
    %245 = vector.shape_cast %244 : vector<1x1x64xf32> to vector<1x64xf32>
    %246 = vector.broadcast %245 : vector<1x64xf32> to vector<48x64xf32>
    %247 = arith.addf %243, %246 : vector<48x64xf32>
    %cst_90 = arith.constant 5.000000e-01 : f32
    %248 = vector.broadcast %cst_90 : f32 to vector<48x64xf32>
    %249 = arith.mulf %248, %247 : vector<48x64xf32>
    %cst_91 = arith.constant 0.707106769 : f32
    %250 = vector.broadcast %cst_91 : f32 to vector<48x64xf32>
    %251 = arith.mulf %247, %250 : vector<48x64xf32>
    %252 = math.erf %251 : vector<48x64xf32>
    %cst_92 = arith.constant 1.000000e+00 : f32
    %253 = vector.broadcast %cst_92 : f32 to vector<48x64xf32>
    %254 = arith.addf %253, %252 : vector<48x64xf32>
    %255 = arith.mulf %249, %254 : vector<48x64xf32>
    %c0_93 = arith.constant 0 : index
    %c0_94 = arith.constant 0 : index
    %c0_95 = arith.constant 0 : index
    %256 = vector.load %arg19[%c0_93, %c0_94, %c0_95] : memref<2x64x32xbf16, #tpu.memory_space<vmem>>, vector<1x64x32xbf16>
    %257 = vector.shape_cast %256 : vector<1x64x32xbf16> to vector<64x32xbf16>
    %258 = arith.truncf %255 : vector<48x64xf32> to vector<48x64xbf16>
    %cst_96 = arith.constant dense<0.000000e+00> : vector<48x32xf32>
    %259 = tpu.matmul %258, %257, %cst_96 {dimension_numbers = #tpu.dot_dimension_numbers<[1], [0], [0], [1], [0, 0, 1, 1], [], []>} : vector<48x64xbf16>, vector<64x32xbf16>, vector<48x32xf32> -> vector<48x32xf32>
    %260 = arith.addf %213, %259 : vector<48x32xf32>
    %c0_97 = arith.constant 0 : index
    %c0_98 = arith.constant 0 : index
    %c0_99 = arith.constant 0 : index
    %261 = vector.load %arg20[%c0_97, %c0_98, %c0_99] : memref<2x1x32xf32, #tpu.memory_space<vmem>>, vector<1x1x32xf32>
    %262 = vector.shape_cast %261 : vector<1x1x32xf32> to vector<1x32xf32>
    %263 = vector.broadcast %262 : vector<1x32xf32> to vector<48x32xf32>
    %264 = arith.addf %260, %263 : vector<48x32xf32>
    %c1 = arith.constant 1 : index
    %c0_100 = arith.constant 0 : index
    %c0_101 = arith.constant 0 : index
    %265 = vector.load %arg10[%c1, %c0_100, %c0_101] : memref<2x1x32xf32, #tpu.memory_space<vmem>>, vector<1x1x32xf32>
    %266 = vector.shape_cast %265 : vector<1x1x32xf32> to vector<1x32xf32>
    %c1_102 = arith.constant 1 : index
    %c0_103 = arith.constant 0 : index
    %c0_104 = arith.constant 0 : index
    %267 = vector.load %arg11[%c1_102, %c0_103, %c0_104] : memref<2x1x32xf32, #tpu.memory_space<vmem>>, vector<1x1x32xf32>
    %268 = vector.shape_cast %267 : vector<1x1x32xf32> to vector<1x32xf32>
    %cst_105 = arith.constant dense<0.000000e+00> : vector<48xf32>
    %269 = vector.multi_reduction <add>, %264, %cst_105 [1] : vector<48x32xf32> to vector<48xf32>
    %270 = vector.shape_cast %269 : vector<48xf32> to vector<48x1xf32>
    %cst_106 = arith.constant 3.200000e+01 : f32
    %271 = vector.broadcast %cst_106 : f32 to vector<48x1xf32>
    %272 = arith.divf %270, %271 : vector<48x1xf32>
    %273 = vector.broadcast %272 : vector<48x1xf32> to vector<48x32xf32>
    %274 = arith.subf %264, %273 : vector<48x32xf32>
    %275 = arith.mulf %274, %274 : vector<48x32xf32>
    %cst_107 = arith.constant dense<0.000000e+00> : vector<48xf32>
    %276 = vector.multi_reduction <add>, %275, %cst_107 [1] : vector<48x32xf32> to vector<48xf32>
    %277 = vector.shape_cast %276 : vector<48xf32> to vector<48x1xf32>
    %cst_108 = arith.constant 3.200000e+01 : f32
    %278 = vector.broadcast %cst_108 : f32 to vector<48x1xf32>
    %279 = arith.divf %277, %278 : vector<48x1xf32>
    %280 = vector.broadcast %272 : vector<48x1xf32> to vector<48x32xf32>
    %281 = arith.subf %264, %280 : vector<48x32xf32>
    %cst_109 = arith.constant 9.99999974E-6 : f32
    %282 = vector.broadcast %cst_109 : f32 to vector<48x1xf32>
    %283 = arith.addf %279, %282 : vector<48x1xf32>
    %284 = math.rsqrt %283 : vector<48x1xf32>
    %285 = vector.broadcast %284 : vector<48x1xf32> to vector<48x32xf32>
    %286 = arith.mulf %281, %285 : vector<48x32xf32>
    %287 = vector.broadcast %266 : vector<1x32xf32> to vector<48x32xf32>
    %288 = arith.mulf %286, %287 : vector<48x32xf32>
    %289 = vector.broadcast %268 : vector<1x32xf32> to vector<48x32xf32>
    %290 = arith.addf %288, %289 : vector<48x32xf32>
    %c1_110 = arith.constant 1 : index
    %c0_111 = arith.constant 0 : index
    %c0_112 = arith.constant 0 : index
    %291 = vector.load %arg12[%c1_110, %c0_111, %c0_112] : memref<2x32x96xbf16, #tpu.memory_space<vmem>>, vector<1x32x96xbf16>
    %292 = vector.shape_cast %291 : vector<1x32x96xbf16> to vector<32x96xbf16>
    %293 = arith.truncf %290 : vector<48x32xf32> to vector<48x32xbf16>
    %cst_113 = arith.constant dense<0.000000e+00> : vector<48x96xf32>
    %294 = tpu.matmul %293, %292, %cst_113 {dimension_numbers = #tpu.dot_dimension_numbers<[1], [0], [0], [1], [0, 0, 1, 1], [], []>} : vector<48x32xbf16>, vector<32x96xbf16>, vector<48x96xf32> -> vector<48x96xf32>
    %295 = vector.shape_cast %294 : vector<48x96xf32> to vector<2x24x96xf32>
    %296 = vector.extract_strided_slice %295 {offsets = [0, 0, 0], sizes = [2, 24, 8], strides = [1, 1, 1]} : vector<2x24x96xf32> to vector<2x24x8xf32>
    %297 = vector.extract_strided_slice %295 {offsets = [0, 0, 32], sizes = [2, 24, 8], strides = [1, 1, 1]} : vector<2x24x96xf32> to vector<2x24x8xf32>
    %298 = vector.extract_strided_slice %295 {offsets = [0, 0, 64], sizes = [2, 24, 8], strides = [1, 1, 1]} : vector<2x24x96xf32> to vector<2x24x8xf32>
    %299 = arith.truncf %296 : vector<2x24x8xf32> to vector<2x24x8xbf16>
    %300 = arith.truncf %297 : vector<2x24x8xf32> to vector<2x24x8xbf16>
    "tpu.trace_start"() <{level = 10 : i32, message = "bqd,bkd->bqk"}> : () -> ()
    %cst_114 = arith.constant dense<0.000000e+00> : vector<2x24x24xf32>
    %301 = tpu.matmul %299, %300, %cst_114 {dimension_numbers = #tpu.dot_dimension_numbers<[2], [2], [1], [1], [0, 0, 0, 1, 1, 1], [0], [0]>} : vector<2x24x8xbf16>, vector<2x24x8xbf16>, vector<2x24x24xf32> -> vector<2x24x24xf32>
    "tpu.trace_stop"() : () -> ()
    %cst_115 = arith.constant 0.353553385 : f32
    %302 = vector.broadcast %cst_115 : f32 to vector<2x24x24xf32>
    %303 = arith.mulf %301, %302 : vector<2x24x24xf32>
    %304 = vector.shape_cast %75 : vector<24x24xf32> to vector<1x24x24xf32>
    %305 = vector.broadcast %304 : vector<1x24x24xf32> to vector<2x24x24xf32>
    %306 = arith.addf %303, %305 : vector<2x24x24xf32>
    %cst_116 = arith.constant dense<0xFF800000> : vector<2x24xf32>
    %307 = vector.multi_reduction <maximumf>, %306, %cst_116 [2] : vector<2x24x24xf32> to vector<2x24xf32>
    %308 = vector.shape_cast %307 : vector<2x24xf32> to vector<2x24x1xf32>
    %309 = vector.broadcast %308 : vector<2x24x1xf32> to vector<2x24x24xf32>
    %310 = arith.subf %306, %309 : vector<2x24x24xf32>
    %311 = math.exp %310 : vector<2x24x24xf32>
    %cst_117 = arith.constant dense<0.000000e+00> : vector<2x24xf32>
    %312 = vector.multi_reduction <add>, %311, %cst_117 [2] : vector<2x24x24xf32> to vector<2x24xf32>
    %313 = vector.shape_cast %312 : vector<2x24xf32> to vector<2x24x1xf32>
    %314 = tpu.reciprocal %313 {approx = true} : vector<2x24x1xf32> -> vector<2x24x1xf32>
    %315 = vector.broadcast %314 : vector<2x24x1xf32> to vector<2x24x24xf32>
    %316 = arith.mulf %311, %315 : vector<2x24x24xf32>
    %317 = arith.truncf %316 : vector<2x24x24xf32> to vector<2x24x24xbf16>
    %318 = arith.truncf %298 : vector<2x24x8xf32> to vector<2x24x8xbf16>
    "tpu.trace_start"() <{level = 10 : i32, message = "bqk,bkd->bqd"}> : () -> ()
    %cst_118 = arith.constant dense<0.000000e+00> : vector<2x24x8xf32>
    %319 = tpu.matmul %317, %318, %cst_118 {dimension_numbers = #tpu.dot_dimension_numbers<[2], [1], [1], [2], [0, 0, 0, 1, 1, 2], [0], [0]>} : vector<2x24x24xbf16>, vector<2x24x8xbf16>, vector<2x24x8xf32> -> vector<2x24x8xf32>
    "tpu.trace_stop"() : () -> ()
    %320 = vector.extract_strided_slice %295 {offsets = [0, 0, 8], sizes = [2, 24, 8], strides = [1, 1, 1]} : vector<2x24x96xf32> to vector<2x24x8xf32>
    %321 = vector.extract_strided_slice %295 {offsets = [0, 0, 40], sizes = [2, 24, 8], strides = [1, 1, 1]} : vector<2x24x96xf32> to vector<2x24x8xf32>
    %322 = vector.extract_strided_slice %295 {offsets = [0, 0, 72], sizes = [2, 24, 8], strides = [1, 1, 1]} : vector<2x24x96xf32> to vector<2x24x8xf32>
    %323 = arith.truncf %320 : vector<2x24x8xf32> to vector<2x24x8xbf16>
    %324 = arith.truncf %321 : vector<2x24x8xf32> to vector<2x24x8xbf16>
    "tpu.trace_start"() <{level = 10 : i32, message = "bqd,bkd->bqk"}> : () -> ()
    %cst_119 = arith.constant dense<0.000000e+00> : vector<2x24x24xf32>
    %325 = tpu.matmul %323, %324, %cst_119 {dimension_numbers = #tpu.dot_dimension_numbers<[2], [2], [1], [1], [0, 0, 0, 1, 1, 1], [0], [0]>} : vector<2x24x8xbf16>, vector<2x24x8xbf16>, vector<2x24x24xf32> -> vector<2x24x24xf32>
    "tpu.trace_stop"() : () -> ()
    %cst_120 = arith.constant 0.353553385 : f32
    %326 = vector.broadcast %cst_120 : f32 to vector<2x24x24xf32>
    %327 = arith.mulf %325, %326 : vector<2x24x24xf32>
    %328 = vector.shape_cast %75 : vector<24x24xf32> to vector<1x24x24xf32>
    %329 = vector.broadcast %328 : vector<1x24x24xf32> to vector<2x24x24xf32>
    %330 = arith.addf %327, %329 : vector<2x24x24xf32>
    %cst_121 = arith.constant dense<0xFF800000> : vector<2x24xf32>
    %331 = vector.multi_reduction <maximumf>, %330, %cst_121 [2] : vector<2x24x24xf32> to vector<2x24xf32>
    %332 = vector.shape_cast %331 : vector<2x24xf32> to vector<2x24x1xf32>
    %333 = vector.broadcast %332 : vector<2x24x1xf32> to vector<2x24x24xf32>
    %334 = arith.subf %330, %333 : vector<2x24x24xf32>
    %335 = math.exp %334 : vector<2x24x24xf32>
    %cst_122 = arith.constant dense<0.000000e+00> : vector<2x24xf32>
    %336 = vector.multi_reduction <add>, %335, %cst_122 [2] : vector<2x24x24xf32> to vector<2x24xf32>
    %337 = vector.shape_cast %336 : vector<2x24xf32> to vector<2x24x1xf32>
    %338 = tpu.reciprocal %337 {approx = true} : vector<2x24x1xf32> -> vector<2x24x1xf32>
    %339 = vector.broadcast %338 : vector<2x24x1xf32> to vector<2x24x24xf32>
    %340 = arith.mulf %335, %339 : vector<2x24x24xf32>
    %341 = arith.truncf %340 : vector<2x24x24xf32> to vector<2x24x24xbf16>
    %342 = arith.truncf %322 : vector<2x24x8xf32> to vector<2x24x8xbf16>
    "tpu.trace_start"() <{level = 10 : i32, message = "bqk,bkd->bqd"}> : () -> ()
    %cst_123 = arith.constant dense<0.000000e+00> : vector<2x24x8xf32>
    %343 = tpu.matmul %341, %342, %cst_123 {dimension_numbers = #tpu.dot_dimension_numbers<[2], [1], [1], [2], [0, 0, 0, 1, 1, 2], [0], [0]>} : vector<2x24x24xbf16>, vector<2x24x8xbf16>, vector<2x24x8xf32> -> vector<2x24x8xf32>
    "tpu.trace_stop"() : () -> ()
    %344 = vector.extract_strided_slice %295 {offsets = [0, 0, 16], sizes = [2, 24, 8], strides = [1, 1, 1]} : vector<2x24x96xf32> to vector<2x24x8xf32>
    %345 = vector.extract_strided_slice %295 {offsets = [0, 0, 48], sizes = [2, 24, 8], strides = [1, 1, 1]} : vector<2x24x96xf32> to vector<2x24x8xf32>
    %346 = vector.extract_strided_slice %295 {offsets = [0, 0, 80], sizes = [2, 24, 8], strides = [1, 1, 1]} : vector<2x24x96xf32> to vector<2x24x8xf32>
    %347 = arith.truncf %344 : vector<2x24x8xf32> to vector<2x24x8xbf16>
    %348 = arith.truncf %345 : vector<2x24x8xf32> to vector<2x24x8xbf16>
    "tpu.trace_start"() <{level = 10 : i32, message = "bqd,bkd->bqk"}> : () -> ()
    %cst_124 = arith.constant dense<0.000000e+00> : vector<2x24x24xf32>
    %349 = tpu.matmul %347, %348, %cst_124 {dimension_numbers = #tpu.dot_dimension_numbers<[2], [2], [1], [1], [0, 0, 0, 1, 1, 1], [0], [0]>} : vector<2x24x8xbf16>, vector<2x24x8xbf16>, vector<2x24x24xf32> -> vector<2x24x24xf32>
    "tpu.trace_stop"() : () -> ()
    %cst_125 = arith.constant 0.353553385 : f32
    %350 = vector.broadcast %cst_125 : f32 to vector<2x24x24xf32>
    %351 = arith.mulf %349, %350 : vector<2x24x24xf32>
    %352 = vector.shape_cast %75 : vector<24x24xf32> to vector<1x24x24xf32>
    %353 = vector.broadcast %352 : vector<1x24x24xf32> to vector<2x24x24xf32>
    %354 = arith.addf %351, %353 : vector<2x24x24xf32>
    %cst_126 = arith.constant dense<0xFF800000> : vector<2x24xf32>
    %355 = vector.multi_reduction <maximumf>, %354, %cst_126 [2] : vector<2x24x24xf32> to vector<2x24xf32>
    %356 = vector.shape_cast %355 : vector<2x24xf32> to vector<2x24x1xf32>
    %357 = vector.broadcast %356 : vector<2x24x1xf32> to vector<2x24x24xf32>
    %358 = arith.subf %354, %357 : vector<2x24x24xf32>
    %359 = math.exp %358 : vector<2x24x24xf32>
    %cst_127 = arith.constant dense<0.000000e+00> : vector<2x24xf32>
    %360 = vector.multi_reduction <add>, %359, %cst_127 [2] : vector<2x24x24xf32> to vector<2x24xf32>
    %361 = vector.shape_cast %360 : vector<2x24xf32> to vector<2x24x1xf32>
    %362 = tpu.reciprocal %361 {approx = true} : vector<2x24x1xf32> -> vector<2x24x1xf32>
    %363 = vector.broadcast %362 : vector<2x24x1xf32> to vector<2x24x24xf32>
    %364 = arith.mulf %359, %363 : vector<2x24x24xf32>
    %365 = arith.truncf %364 : vector<2x24x24xf32> to vector<2x24x24xbf16>
    %366 = arith.truncf %346 : vector<2x24x8xf32> to vector<2x24x8xbf16>
    "tpu.trace_start"() <{level = 10 : i32, message = "bqk,bkd->bqd"}> : () -> ()
    %cst_128 = arith.constant dense<0.000000e+00> : vector<2x24x8xf32>
    %367 = tpu.matmul %365, %366, %cst_128 {dimension_numbers = #tpu.dot_dimension_numbers<[2], [1], [1], [2], [0, 0, 0, 1, 1, 2], [0], [0]>} : vector<2x24x24xbf16>, vector<2x24x8xbf16>, vector<2x24x8xf32> -> vector<2x24x8xf32>
    "tpu.trace_stop"() : () -> ()
    %368 = vector.extract_strided_slice %295 {offsets = [0, 0, 24], sizes = [2, 24, 8], strides = [1, 1, 1]} : vector<2x24x96xf32> to vector<2x24x8xf32>
    %369 = vector.extract_strided_slice %295 {offsets = [0, 0, 56], sizes = [2, 24, 8], strides = [1, 1, 1]} : vector<2x24x96xf32> to vector<2x24x8xf32>
    %370 = vector.extract_strided_slice %295 {offsets = [0, 0, 88], sizes = [2, 24, 8], strides = [1, 1, 1]} : vector<2x24x96xf32> to vector<2x24x8xf32>
    %371 = arith.truncf %368 : vector<2x24x8xf32> to vector<2x24x8xbf16>
    %372 = arith.truncf %369 : vector<2x24x8xf32> to vector<2x24x8xbf16>
    "tpu.trace_start"() <{level = 10 : i32, message = "bqd,bkd->bqk"}> : () -> ()
    %cst_129 = arith.constant dense<0.000000e+00> : vector<2x24x24xf32>
    %373 = tpu.matmul %371, %372, %cst_129 {dimension_numbers = #tpu.dot_dimension_numbers<[2], [2], [1], [1], [0, 0, 0, 1, 1, 1], [0], [0]>} : vector<2x24x8xbf16>, vector<2x24x8xbf16>, vector<2x24x24xf32> -> vector<2x24x24xf32>
    "tpu.trace_stop"() : () -> ()
    %cst_130 = arith.constant 0.353553385 : f32
    %374 = vector.broadcast %cst_130 : f32 to vector<2x24x24xf32>
    %375 = arith.mulf %373, %374 : vector<2x24x24xf32>
    %376 = vector.shape_cast %75 : vector<24x24xf32> to vector<1x24x24xf32>
    %377 = vector.broadcast %376 : vector<1x24x24xf32> to vector<2x24x24xf32>
    %378 = arith.addf %375, %377 : vector<2x24x24xf32>
    %cst_131 = arith.constant dense<0xFF800000> : vector<2x24xf32>
    %379 = vector.multi_reduction <maximumf>, %378, %cst_131 [2] : vector<2x24x24xf32> to vector<2x24xf32>
    %380 = vector.shape_cast %379 : vector<2x24xf32> to vector<2x24x1xf32>
    %381 = vector.broadcast %380 : vector<2x24x1xf32> to vector<2x24x24xf32>
    %382 = arith.subf %378, %381 : vector<2x24x24xf32>
    %383 = math.exp %382 : vector<2x24x24xf32>
    %cst_132 = arith.constant dense<0.000000e+00> : vector<2x24xf32>
    %384 = vector.multi_reduction <add>, %383, %cst_132 [2] : vector<2x24x24xf32> to vector<2x24xf32>
    %385 = vector.shape_cast %384 : vector<2x24xf32> to vector<2x24x1xf32>
    %386 = tpu.reciprocal %385 {approx = true} : vector<2x24x1xf32> -> vector<2x24x1xf32>
    %387 = vector.broadcast %386 : vector<2x24x1xf32> to vector<2x24x24xf32>
    %388 = arith.mulf %383, %387 : vector<2x24x24xf32>
    %389 = arith.truncf %388 : vector<2x24x24xf32> to vector<2x24x24xbf16>
    %390 = arith.truncf %370 : vector<2x24x8xf32> to vector<2x24x8xbf16>
    "tpu.trace_start"() <{level = 10 : i32, message = "bqk,bkd->bqd"}> : () -> ()
    %cst_133 = arith.constant dense<0.000000e+00> : vector<2x24x8xf32>
    %391 = tpu.matmul %389, %390, %cst_133 {dimension_numbers = #tpu.dot_dimension_numbers<[2], [1], [1], [2], [0, 0, 0, 1, 1, 2], [0], [0]>} : vector<2x24x24xbf16>, vector<2x24x8xbf16>, vector<2x24x8xf32> -> vector<2x24x8xf32>
    "tpu.trace_stop"() : () -> ()
    %392 = tpu.concatenate %319, %343, %367, %391 in 2 : vector<2x24x8xf32>, vector<2x24x8xf32>, vector<2x24x8xf32>, vector<2x24x8xf32> -> vector<2x24x32xf32>
    %393 = vector.shape_cast %392 : vector<2x24x32xf32> to vector<48x32xf32>
    %c1_134 = arith.constant 1 : index
    %c0_135 = arith.constant 0 : index
    %c0_136 = arith.constant 0 : index
    %394 = vector.load %arg13[%c1_134, %c0_135, %c0_136] : memref<2x32x32xbf16, #tpu.memory_space<vmem>>, vector<1x32x32xbf16>
    %395 = vector.shape_cast %394 : vector<1x32x32xbf16> to vector<32x32xbf16>
    %396 = arith.truncf %393 : vector<48x32xf32> to vector<48x32xbf16>
    %cst_137 = arith.constant dense<0.000000e+00> : vector<48x32xf32>
    %397 = tpu.matmul %396, %395, %cst_137 {dimension_numbers = #tpu.dot_dimension_numbers<[1], [0], [0], [1], [0, 0, 1, 1], [], []>} : vector<48x32xbf16>, vector<32x32xbf16>, vector<48x32xf32> -> vector<48x32xf32>
    %398 = arith.addf %264, %397 : vector<48x32xf32>
    %c1_138 = arith.constant 1 : index
    %c0_139 = arith.constant 0 : index
    %c0_140 = arith.constant 0 : index
    %399 = vector.load %arg14[%c1_138, %c0_139, %c0_140] : memref<2x1x32xf32, #tpu.memory_space<vmem>>, vector<1x1x32xf32>
    %400 = vector.shape_cast %399 : vector<1x1x32xf32> to vector<1x32xf32>
    %401 = vector.broadcast %400 : vector<1x32xf32> to vector<48x32xf32>
    %402 = arith.addf %398, %401 : vector<48x32xf32>
    %c1_141 = arith.constant 1 : index
    %c0_142 = arith.constant 0 : index
    %c0_143 = arith.constant 0 : index
    %403 = vector.load %arg15[%c1_141, %c0_142, %c0_143] : memref<2x1x32xf32, #tpu.memory_space<vmem>>, vector<1x1x32xf32>
    %404 = vector.shape_cast %403 : vector<1x1x32xf32> to vector<1x32xf32>
    %c1_144 = arith.constant 1 : index
    %c0_145 = arith.constant 0 : index
    %c0_146 = arith.constant 0 : index
    %405 = vector.load %arg16[%c1_144, %c0_145, %c0_146] : memref<2x1x32xf32, #tpu.memory_space<vmem>>, vector<1x1x32xf32>
    %406 = vector.shape_cast %405 : vector<1x1x32xf32> to vector<1x32xf32>
    %cst_147 = arith.constant dense<0.000000e+00> : vector<48xf32>
    %407 = vector.multi_reduction <add>, %402, %cst_147 [1] : vector<48x32xf32> to vector<48xf32>
    %408 = vector.shape_cast %407 : vector<48xf32> to vector<48x1xf32>
    %cst_148 = arith.constant 3.200000e+01 : f32
    %409 = vector.broadcast %cst_148 : f32 to vector<48x1xf32>
    %410 = arith.divf %408, %409 : vector<48x1xf32>
    %411 = vector.broadcast %410 : vector<48x1xf32> to vector<48x32xf32>
    %412 = arith.subf %402, %411 : vector<48x32xf32>
    %413 = arith.mulf %412, %412 : vector<48x32xf32>
    %cst_149 = arith.constant dense<0.000000e+00> : vector<48xf32>
    %414 = vector.multi_reduction <add>, %413, %cst_149 [1] : vector<48x32xf32> to vector<48xf32>
    %415 = vector.shape_cast %414 : vector<48xf32> to vector<48x1xf32>
    %cst_150 = arith.constant 3.200000e+01 : f32
    %416 = vector.broadcast %cst_150 : f32 to vector<48x1xf32>
    %417 = arith.divf %415, %416 : vector<48x1xf32>
    %418 = vector.broadcast %410 : vector<48x1xf32> to vector<48x32xf32>
    %419 = arith.subf %402, %418 : vector<48x32xf32>
    %cst_151 = arith.constant 9.99999974E-6 : f32
    %420 = vector.broadcast %cst_151 : f32 to vector<48x1xf32>
    %421 = arith.addf %417, %420 : vector<48x1xf32>
    %422 = math.rsqrt %421 : vector<48x1xf32>
    %423 = vector.broadcast %422 : vector<48x1xf32> to vector<48x32xf32>
    %424 = arith.mulf %419, %423 : vector<48x32xf32>
    %425 = vector.broadcast %404 : vector<1x32xf32> to vector<48x32xf32>
    %426 = arith.mulf %424, %425 : vector<48x32xf32>
    %427 = vector.broadcast %406 : vector<1x32xf32> to vector<48x32xf32>
    %428 = arith.addf %426, %427 : vector<48x32xf32>
    %c1_152 = arith.constant 1 : index
    %c0_153 = arith.constant 0 : index
    %c0_154 = arith.constant 0 : index
    %429 = vector.load %arg17[%c1_152, %c0_153, %c0_154] : memref<2x32x64xbf16, #tpu.memory_space<vmem>>, vector<1x32x64xbf16>
    %430 = vector.shape_cast %429 : vector<1x32x64xbf16> to vector<32x64xbf16>
    %431 = arith.truncf %428 : vector<48x32xf32> to vector<48x32xbf16>
    %cst_155 = arith.constant dense<0.000000e+00> : vector<48x64xf32>
    %432 = tpu.matmul %431, %430, %cst_155 {dimension_numbers = #tpu.dot_dimension_numbers<[1], [0], [0], [1], [0, 0, 1, 1], [], []>} : vector<48x32xbf16>, vector<32x64xbf16>, vector<48x64xf32> -> vector<48x64xf32>
    %c1_156 = arith.constant 1 : index
    %c0_157 = arith.constant 0 : index
    %c0_158 = arith.constant 0 : index
    %433 = vector.load %arg18[%c1_156, %c0_157, %c0_158] : memref<2x1x64xf32, #tpu.memory_space<vmem>>, vector<1x1x64xf32>
    %434 = vector.shape_cast %433 : vector<1x1x64xf32> to vector<1x64xf32>
    %435 = vector.broadcast %434 : vector<1x64xf32> to vector<48x64xf32>
    %436 = arith.addf %432, %435 : vector<48x64xf32>
    %cst_159 = arith.constant 5.000000e-01 : f32
    %437 = vector.broadcast %cst_159 : f32 to vector<48x64xf32>
    %438 = arith.mulf %437, %436 : vector<48x64xf32>
    %cst_160 = arith.constant 0.707106769 : f32
    %439 = vector.broadcast %cst_160 : f32 to vector<48x64xf32>
    %440 = arith.mulf %436, %439 : vector<48x64xf32>
    %441 = math.erf %440 : vector<48x64xf32>
    %cst_161 = arith.constant 1.000000e+00 : f32
    %442 = vector.broadcast %cst_161 : f32 to vector<48x64xf32>
    %443 = arith.addf %442, %441 : vector<48x64xf32>
    %444 = arith.mulf %438, %443 : vector<48x64xf32>
    %c1_162 = arith.constant 1 : index
    %c0_163 = arith.constant 0 : index
    %c0_164 = arith.constant 0 : index
    %445 = vector.load %arg19[%c1_162, %c0_163, %c0_164] : memref<2x64x32xbf16, #tpu.memory_space<vmem>>, vector<1x64x32xbf16>
    %446 = vector.shape_cast %445 : vector<1x64x32xbf16> to vector<64x32xbf16>
    %447 = arith.truncf %444 : vector<48x64xf32> to vector<48x64xbf16>
    %cst_165 = arith.constant dense<0.000000e+00> : vector<48x32xf32>
    %448 = tpu.matmul %447, %446, %cst_165 {dimension_numbers = #tpu.dot_dimension_numbers<[1], [0], [0], [1], [0, 0, 1, 1], [], []>} : vector<48x64xbf16>, vector<64x32xbf16>, vector<48x32xf32> -> vector<48x32xf32>
    %449 = arith.addf %402, %448 : vector<48x32xf32>
    %c1_166 = arith.constant 1 : index
    %c0_167 = arith.constant 0 : index
    %c0_168 = arith.constant 0 : index
    %450 = vector.load %arg20[%c1_166, %c0_167, %c0_168] : memref<2x1x32xf32, #tpu.memory_space<vmem>>, vector<1x1x32xf32>
    %451 = vector.shape_cast %450 : vector<1x1x32xf32> to vector<1x32xf32>
    %452 = vector.broadcast %451 : vector<1x32xf32> to vector<48x32xf32>
    %453 = arith.addf %449, %452 : vector<48x32xf32>
    %c0_169 = arith.constant 0 : index
    %c0_170 = arith.constant 0 : index
    %454 = vector.load %arg21[%c0_169, %c0_170] : memref<1x32xf32, #tpu.memory_space<vmem>>, vector<1x32xf32>
    %c0_171 = arith.constant 0 : index
    %c0_172 = arith.constant 0 : index
    %455 = vector.load %arg22[%c0_171, %c0_172] : memref<1x32xf32, #tpu.memory_space<vmem>>, vector<1x32xf32>
    %cst_173 = arith.constant dense<0.000000e+00> : vector<48xf32>
    %456 = vector.multi_reduction <add>, %453, %cst_173 [1] : vector<48x32xf32> to vector<48xf32>
    %457 = vector.shape_cast %456 : vector<48xf32> to vector<48x1xf32>
    %cst_174 = arith.constant 3.200000e+01 : f32
    %458 = vector.broadcast %cst_174 : f32 to vector<48x1xf32>
    %459 = arith.divf %457, %458 : vector<48x1xf32>
    %460 = vector.broadcast %459 : vector<48x1xf32> to vector<48x32xf32>
    %461 = arith.subf %453, %460 : vector<48x32xf32>
    %462 = arith.mulf %461, %461 : vector<48x32xf32>
    %cst_175 = arith.constant dense<0.000000e+00> : vector<48xf32>
    %463 = vector.multi_reduction <add>, %462, %cst_175 [1] : vector<48x32xf32> to vector<48xf32>
    %464 = vector.shape_cast %463 : vector<48xf32> to vector<48x1xf32>
    %cst_176 = arith.constant 3.200000e+01 : f32
    %465 = vector.broadcast %cst_176 : f32 to vector<48x1xf32>
    %466 = arith.divf %464, %465 : vector<48x1xf32>
    %467 = vector.broadcast %459 : vector<48x1xf32> to vector<48x32xf32>
    %468 = arith.subf %453, %467 : vector<48x32xf32>
    %cst_177 = arith.constant 9.99999974E-6 : f32
    %469 = vector.broadcast %cst_177 : f32 to vector<48x1xf32>
    %470 = arith.addf %466, %469 : vector<48x1xf32>
    %471 = math.rsqrt %470 : vector<48x1xf32>
    %472 = vector.broadcast %471 : vector<48x1xf32> to vector<48x32xf32>
    %473 = arith.mulf %468, %472 : vector<48x32xf32>
    %474 = vector.broadcast %454 : vector<1x32xf32> to vector<48x32xf32>
    %475 = arith.mulf %473, %474 : vector<48x32xf32>
    %476 = vector.broadcast %455 : vector<1x32xf32> to vector<48x32xf32>
    %477 = arith.addf %475, %476 : vector<48x32xf32>
    %478 = vector.shape_cast %477 : vector<48x32xf32> to vector<2x24x32xf32>
    %479 = vector.extract_strided_slice %478 {offsets = [0, 0, 0], sizes = [2, 1, 32], strides = [1, 1, 1]} : vector<2x24x32xf32> to vector<2x1x32xf32>
    %480 = vector.shape_cast %479 : vector<2x1x32xf32> to vector<2x32xf32>
    %c0_178 = arith.constant 0 : index
    %c0_179 = arith.constant 0 : index
    %481 = vector.load %arg23[%c0_178, %c0_179] : memref<32x128xbf16, #tpu.memory_space<vmem>>, vector<32x128xbf16>
    %482 = arith.truncf %480 : vector<2x32xf32> to vector<2x32xbf16>
    %cst_180 = arith.constant dense<0.000000e+00> : vector<2x128xf32>
    %483 = tpu.matmul %482, %481, %cst_180 {dimension_numbers = #tpu.dot_dimension_numbers<[1], [0], [0], [1], [0, 0, 1, 1], [], []>} : vector<2x32xbf16>, vector<32x128xbf16>, vector<2x128xf32> -> vector<2x128xf32>
    %c0_181 = arith.constant 0 : index
    %c0_182 = arith.constant 0 : index
    %484 = vector.load %arg24[%c0_181, %c0_182] : memref<1x128xf32, #tpu.memory_space<vmem>>, vector<1x128xf32>
    %485 = vector.broadcast %484 : vector<1x128xf32> to vector<2x128xf32>
    %486 = arith.addf %483, %485 : vector<2x128xf32>
    %c0_183 = arith.constant 0 : index
    %c0_184 = arith.constant 0 : index
    %c0_185 = arith.constant 0 : index
    %487 = vector.load %arg25[%c0_183, %c0_184, %c0_185] : memref<1x2x128xf32, #tpu.memory_space<vmem>>, vector<1x2x128xf32>
    %488 = vector.shape_cast %487 : vector<1x2x128xf32> to vector<2x128xf32>
    %489 = vector.shape_cast %486 : vector<2x128xf32> to vector<1x2x128xf32>
    tpu.vector_store %arg25[%c0_183, %c0_184, %c0_185], %489 {strides = array<i32>} : memref<1x2x128xf32, #tpu.memory_space<vmem>>, vector<1x2x128xf32>,
    return
  }
  func.func @transform_0(%arg0: i32) -> (i32, i32, i32) {
    %c0_i32 = arith.constant 0 : i32
    %c0_i32_0 = arith.constant 0 : i32
    %c0_i32_1 = arith.constant 0 : i32
    return %arg0, %c0_i32, %c0_i32_0 : i32, i32, i32
  }
  func.func @transform_1(%arg0: i32) -> (i32, i32) {
    %c0_i32 = arith.constant 0 : i32
    %c0_i32_0 = arith.constant 0 : i32
    %c0_i32_1 = arith.constant 0 : i32
    return %c0_i32, %c0_i32_0 : i32, i32
  }
  func.func @transform_2(%arg0: i32) -> (i32, i32) {
    %c0_i32 = arith.constant 0 : i32
    %c0_i32_0 = arith.constant 0 : i32
    %c0_i32_1 = arith.constant 0 : i32
    return %c0_i32, %c0_i32_0 : i32, i32
  }
  func.func @transform_3(%arg0: i32) -> (i32, i32) {
    %c0_i32 = arith.constant 0 : i32
    %c0_i32_0 = arith.constant 0 : i32
    %c0_i32_1 = arith.constant 0 : i32
    return %c0_i32, %c0_i32_0 : i32, i32
  }
  func.func @transform_4(%arg0: i32) -> (i32, i32) {
    %c0_i32 = arith.constant 0 : i32
    %c0_i32_0 = arith.constant 0 : i32
    %c0_i32_1 = arith.constant 0 : i32
    return %c0_i32, %c0_i32_0 : i32, i32
  }
  func.func @transform_5(%arg0: i32) -> (i32, i32) {
    %c0_i32 = arith.constant 0 : i32
    %c0_i32_0 = arith.constant 0 : i32
    %c0_i32_1 = arith.constant 0 : i32
    return %c0_i32, %c0_i32_0 : i32, i32
  }
  func.func @transform_6(%arg0: i32) -> (i32, i32) {
    %c0_i32 = arith.constant 0 : i32
    %c0_i32_0 = arith.constant 0 : i32
    %c0_i32_1 = arith.constant 0 : i32
    return %c0_i32, %c0_i32_0 : i32, i32
  }
  func.func @transform_7(%arg0: i32) -> (i32, i32) {
    %c0_i32 = arith.constant 0 : i32
    %c0_i32_0 = arith.constant 0 : i32
    %c0_i32_1 = arith.constant 0 : i32
    return %c0_i32, %c0_i32_0 : i32, i32
  }
  func.func @transform_8(%arg0: i32) -> (i32, i32) {
    %c0_i32 = arith.constant 0 : i32
    %c0_i32_0 = arith.constant 0 : i32
    %c0_i32_1 = arith.constant 0 : i32
    return %c0_i32, %c0_i32_0 : i32, i32
  }
  func.func @transform_9(%arg0: i32) -> (i32, i32, i32) {
    %c0_i32 = arith.constant 0 : i32
    %c0_i32_0 = arith.constant 0 : i32
    %c0_i32_1 = arith.constant 0 : i32
    %c0_i32_2 = arith.constant 0 : i32
    return %c0_i32, %c0_i32_0, %c0_i32_1 : i32, i32, i32
  }
  func.func @transform_10(%arg0: i32) -> (i32, i32, i32) {
    %c0_i32 = arith.constant 0 : i32
    %c0_i32_0 = arith.constant 0 : i32
    %c0_i32_1 = arith.constant 0 : i32
    %c0_i32_2 = arith.constant 0 : i32
    return %c0_i32, %c0_i32_0, %c0_i32_1 : i32, i32, i32
  }
  func.func @transform_11(%arg0: i32) -> (i32, i32, i32) {
    %c0_i32 = arith.constant 0 : i32
    %c0_i32_0 = arith.constant 0 : i32
    %c0_i32_1 = arith.constant 0 : i32
    %c0_i32_2 = arith.constant 0 : i32
    return %c0_i32, %c0_i32_0, %c0_i32_1 : i32, i32, i32
  }
  func.func @transform_12(%arg0: i32) -> (i32, i32, i32) {
    %c0_i32 = arith.constant 0 : i32
    %c0_i32_0 = arith.constant 0 : i32
    %c0_i32_1 = arith.constant 0 : i32
    %c0_i32_2 = arith.constant 0 : i32
    return %c0_i32, %c0_i32_0, %c0_i32_1 : i32, i32, i32
  }
  func.func @transform_13(%arg0: i32) -> (i32, i32, i32) {
    %c0_i32 = arith.constant 0 : i32
    %c0_i32_0 = arith.constant 0 : i32
    %c0_i32_1 = arith.constant 0 : i32
    %c0_i32_2 = arith.constant 0 : i32
    return %c0_i32, %c0_i32_0, %c0_i32_1 : i32, i32, i32
  }
  func.func @transform_14(%arg0: i32) -> (i32, i32, i32) {
    %c0_i32 = arith.constant 0 : i32
    %c0_i32_0 = arith.constant 0 : i32
    %c0_i32_1 = arith.constant 0 : i32
    %c0_i32_2 = arith.constant 0 : i32
    return %c0_i32, %c0_i32_0, %c0_i32_1 : i32, i32, i32
  }
  func.func @transform_15(%arg0: i32) -> (i32, i32, i32) {
    %c0_i32 = arith.constant 0 : i32
    %c0_i32_0 = arith.constant 0 : i32
    %c0_i32_1 = arith.constant 0 : i32
    %c0_i32_2 = arith.constant 0 : i32
    return %c0_i32, %c0_i32_0, %c0_i32_1 : i32, i32, i32
  }
  func.func @transform_16(%arg0: i32) -> (i32, i32, i32) {
    %c0_i32 = arith.constant 0 : i32
    %c0_i32_0 = arith.constant 0 : i32
    %c0_i32_1 = arith.constant 0 : i32
    %c0_i32_2 = arith.constant 0 : i32
    return %c0_i32, %c0_i32_0, %c0_i32_1 : i32, i32, i32
  }
  func.func @transform_17(%arg0: i32) -> (i32, i32, i32) {
    %c0_i32 = arith.constant 0 : i32
    %c0_i32_0 = arith.constant 0 : i32
    %c0_i32_1 = arith.constant 0 : i32
    %c0_i32_2 = arith.constant 0 : i32
    return %c0_i32, %c0_i32_0, %c0_i32_1 : i32, i32, i32
  }
  func.func @transform_18(%arg0: i32) -> (i32, i32, i32) {
    %c0_i32 = arith.constant 0 : i32
    %c0_i32_0 = arith.constant 0 : i32
    %c0_i32_1 = arith.constant 0 : i32
    %c0_i32_2 = arith.constant 0 : i32
    return %c0_i32, %c0_i32_0, %c0_i32_1 : i32, i32, i32
  }
  func.func @transform_19(%arg0: i32) -> (i32, i32, i32) {
    %c0_i32 = arith.constant 0 : i32
    %c0_i32_0 = arith.constant 0 : i32
    %c0_i32_1 = arith.constant 0 : i32
    %c0_i32_2 = arith.constant 0 : i32
    return %c0_i32, %c0_i32_0, %c0_i32_1 : i32, i32, i32
  }
  func.func @transform_20(%arg0: i32) -> (i32, i32) {
    %c0_i32 = arith.constant 0 : i32
    %c0_i32_0 = arith.constant 0 : i32
    %c0_i32_1 = arith.constant 0 : i32
    return %c0_i32, %c0_i32_0 : i32, i32
  }
  func.func @transform_21(%arg0: i32) -> (i32, i32) {
    %c0_i32 = arith.constant 0 : i32
    %c0_i32_0 = arith.constant 0 : i32
    %c0_i32_1 = arith.constant 0 : i32
    return %c0_i32, %c0_i32_0 : i32, i32
  }
  func.func @transform_22(%arg0: i32) -> (i32, i32) {
    %c0_i32 = arith.constant 0 : i32
    %c0_i32_0 = arith.constant 0 : i32
    %c0_i32_1 = arith.constant 0 : i32
    return %c0_i32, %c0_i32_0 : i32, i32
  }
  func.func @transform_23(%arg0: i32) -> (i32, i32) {
    %c0_i32 = arith.constant 0 : i32
    %c0_i32_0 = arith.constant 0 : i32
    %c0_i32_1 = arith.constant 0 : i32
    return %c0_i32, %c0_i32_0 : i32, i32
  }
  func.func @transform_24(%arg0: i32) -> (i32, i32, i32) {
    %c0_i32 = arith.constant 0 : i32
    %c0_i32_0 = arith.constant 0 : i32
    %c0_i32_1 = arith.constant 0 : i32
    return %arg0, %c0_i32, %c0_i32_0 : i32, i32, i32
  }
}

</mosaic_0001>

<llo_original>
// kernel: vit_forward.1
$region0: #{vit_forward.1}
  #allocation0 [shape = 'u32[]', space=smem, size = 0x4, offset = 0x4, fixed_abs, tag = 'smem constant byte address 0x4 - core index']
  #allocation1 [shape = 'u32[144,128]{1,0:T(1,128)}', space=vmem, size = 0x12000, scoped, tag = 'internal scratch']
  %s0 = inlined_call_operand.vmem [shape: f32[2,24,64], index: 0, kind: input, shape index: {}]
  %s1 = inlined_call_operand.vmem [shape: f32[1,64], index: 1, kind: input, shape index: {}]
  %s2 = inlined_call_operand.vmem [shape: f32[1,64], index: 2, kind: input, shape index: {}]
  %s3 = inlined_call_operand.vmem [shape: bf16[64,32], index: 3, kind: input, shape index: {}]
  %s4 = inlined_call_operand.vmem [shape: f32[1,32], index: 4, kind: input, shape index: {}]
  %s5 = inlined_call_operand.vmem [shape: f32[1,32], index: 5, kind: input, shape index: {}]
  %s6 = inlined_call_operand.vmem [shape: f32[1,32], index: 6, kind: input, shape index: {}]
  %s7 = inlined_call_operand.vmem [shape: f32[1,32], index: 7, kind: input, shape index: {}]
  %s8 = inlined_call_operand.vmem [shape: f32[24,32], index: 8, kind: input, shape index: {}]
  %s9 = inlined_call_operand.vmem [shape: f32[2,1,32], index: 9, kind: input, shape index: {}]
  %s10 = inlined_call_operand.vmem [shape: f32[2,1,32], index: 10, kind: input, shape index: {}]
  %s11 = inlined_call_operand.vmem [shape: bf16[2,32,96], index: 11, kind: input, shape index: {}]
  %s12 = inlined_call_operand.vmem [shape: bf16[2,32,32], index: 12, kind: input, shape index: {}]
  %s13 = inlined_call_operand.vmem [shape: f32[2,1,32], index: 13, kind: input, shape index: {}]
  %s14 = inlined_call_operand.vmem [shape: f32[2,1,32], index: 14, kind: input, shape index: {}]
  %s15 = inlined_call_operand.vmem [shape: f32[2,1,32], index: 15, kind: input, shape index: {}]
  %s16 = inlined_call_operand.vmem [shape: bf16[2,32,64], index: 16, kind: input, shape index: {}]
  %s17 = inlined_call_operand.vmem [shape: f32[2,1,64], index: 17, kind: input, shape index: {}]
  %s18 = inlined_call_operand.vmem [shape: bf16[2,64,32], index: 18, kind: input, shape index: {}]
  %s19 = inlined_call_operand.vmem [shape: f32[2,1,32], index: 19, kind: input, shape index: {}]
  %s20 = inlined_call_operand.vmem [shape: f32[1,32], index: 20, kind: input, shape index: {}]
  %s21 = inlined_call_operand.vmem [shape: f32[1,32], index: 21, kind: input, shape index: {}]
  %s22 = inlined_call_operand.vmem [shape: bf16[32,128], index: 22, kind: input, shape index: {}]
  %s23 = inlined_call_operand.vmem [shape: f32[1,128], index: 23, kind: input, shape index: {}]
  %s24 = inlined_call_operand.hbm [shape: f32[1,2,128], index: 24, kind: output, shape index: {}]
  %s25 = sld [smem:[#allocation0]]
  $region106: #{vit_forward.1} parent=0
    _
  %s27 = ssub.s32 1, %s25
  %s28 = scalar_select 0, %s27, %s25
  $region1: #{vit_forward.1} parent=0
    #allocation2 [shape = 'u8[1024]{0}', space=vmem, size = 0x400, scoped, tag = 'output window, operand 0, single buffered']
    #allocation3 [shape = 's32[1]{0}', space=sflag, size = 0x4, scoped, tag = 'scoped memory for vit_forward.1']
    %29 = vsyncpa [#allocation3], 0
    // Predicated region
    $region2: #{vit_forward.1} parent=1 // pred_check
      _
    $region3: #{vit_forward.1} parent=1 // pred_check_branch
      %31 = sbr.rel (0) target = $region5
    $region4: #{vit_forward.1} parent=1 // pred_region
      _
    $region5: #{vit_forward.1} parent=1 // pred_fallthru
      _
    // Predicated region
    $region6: #{vit_forward.1} parent=1 // pred_check
      _
    $region7: #{vit_forward.1} parent=1 // pred_check_branch
      %33 = sbr.rel (0) target = $region9
    $region8: #{vit_forward.1} parent=1 // pred_region
      _
    $region9: #{vit_forward.1} parent=1 // pred_fallthru
      _
    // Predicated region
    $region10: #{vit_forward.1} parent=1 // pred_check
      _
    $region11: #{vit_forward.1} parent=1 // pred_check_branch
      %35 = sbr.rel (0) target = $region13
    $region12: #{vit_forward.1} parent=1 // pred_region
      _
    $region13: #{vit_forward.1} parent=1 // pred_fallthru
      _
    // Predicated region
    $region14: #{vit_forward.1} parent=1 // pred_check
      _
    $region15: #{vit_forward.1} parent=1 // pred_check_branch
      %37 = sbr.rel (0) target = $region17
    $region16: #{vit_forward.1} parent=1 // pred_region
      _
    $region17: #{vit_forward.1} parent=1 // pred_fallthru
      _
    // Predicated region
    $region18: #{vit_forward.1} parent=1 // pred_check
      _
    $region19: #{vit_forward.1} parent=1 // pred_check_branch
      %39 = sbr.rel (0) target = $region21
    $region20: #{vit_forward.1} parent=1 // pred_region
      _
    $region21: #{vit_forward.1} parent=1 // pred_fallthru
      _
    // Predicated region
    $region22: #{vit_forward.1} parent=1 // pred_check
      _
    $region23: #{vit_forward.1} parent=1 // pred_check_branch
      %41 = sbr.rel (0) target = $region25
    $region24: #{vit_forward.1} parent=1 // pred_region
      _
    $region25: #{vit_forward.1} parent=1 // pred_fallthru
      _
    // Predicated region
    $region26: #{vit_forward.1} parent=1 // pred_check
      _
    $region27: #{vit_forward.1} parent=1 // pred_check_branch
      %43 = sbr.rel (0) target = $region29
    $region28: #{vit_forward.1} parent=1 // pred_region
      _
    $region29: #{vit_forward.1} parent=1 // pred_fallthru
      _
    // Predicated region
    $region30: #{vit_forward.1} parent=1 // pred_check
      _
    $region31: #{vit_forward.1} parent=1 // pred_check_branch
      %45 = sbr.rel (0) target = $region33
    $region32: #{vit_forward.1} parent=1 // pred_region
      _
    $region33: #{vit_forward.1} parent=1 // pred_fallthru
      _
    // Predicated region
    $region34: #{vit_forward.1} parent=1 // pred_check
      _
    $region35: #{vit_forward.1} parent=1 // pred_check_branch
      %47 = sbr.rel (0) target = $region37
    $region36: #{vit_forward.1} parent=1 // pred_region
      _
    $region37: #{vit_forward.1} parent=1 // pred_fallthru
      _
    // Predicated region
    $region38: #{vit_forward.1} parent=1 // pred_check
      _
    $region39: #{vit_forward.1} parent=1 // pred_check_branch
      %49 = sbr.rel (0) target = $region41
    $region40: #{vit_forward.1} parent=1 // pred_region
      _
    $region41: #{vit_forward.1} parent=1 // pred_fallthru
      _
    // Predicated region
    $region42: #{vit_forward.1} parent=1 // pred_check
      _
    $region43: #{vit_forward.1} parent=1 // pred_check_branch
      %51 = sbr.rel (0) target = $region45
    $region44: #{vit_forward.1} parent=1 // pred_region
      _
    $region45: #{vit_forward.1} parent=1 // pred_fallthru
      _
    // Predicated region
    $region46: #{vit_forward.1} parent=1 // pred_check
      _
    $region47: #{vit_forward.1} parent=1 // pred_check_branch
      %53 = sbr.rel (0) target = $region49
    $region48: #{vit_forward.1} parent=1 // pred_region
      _
    $region49: #{vit_forward.1} parent=1 // pred_fallthru
      _
    // Predicated region
    $region50: #{vit_forward.1} parent=1 // pred_check
      _
    $region51: #{vit_forward.1} parent=1 // pred_check_branch
      %55 = sbr.rel (0) target = $region53
    $region52: #{vit_forward.1} parent=1 // pred_region
      _
    $region53: #{vit_forward.1} parent=1 // pred_fallthru
      _
    // Predicated region
    $region54: #{vit_forward.1} parent=1 // pred_check
      _
    $region55: #{vit_forward.1} parent=1 // pred_check_branch
      %57 = sbr.rel (0) target = $region57
    $region56: #{vit_forward.1} parent=1 // pred_region
      _
    $region57: #{vit_forward.1} parent=1 // pred_fallthru
      _
    // Predicated region
    $region58: #{vit_forward.1} parent=1 // pred_check
      _
    $region59: #{vit_forward.1} parent=1 // pred_check_branch
      %59 = sbr.rel (0) target = $region61
    $region60: #{vit_forward.1} parent=1 // pred_region
      _
    $region61: #{vit_forward.1} parent=1 // pred_fallthru
      _
    // Predicated region
    $region62: #{vit_forward.1} parent=1 // pred_check
      _
    $region63: #{vit_forward.1} parent=1 // pred_check_branch
      %61 = sbr.rel (0) target = $region65
    $region64: #{vit_forward.1} parent=1 // pred_region
      _
    $region65: #{vit_forward.1} parent=1 // pred_fallthru
      _
    // Predicated region
    $region66: #{vit_forward.1} parent=1 // pred_check
      _
    $region67: #{vit_forward.1} parent=1 // pred_check_branch
      %63 = sbr.rel (0) target = $region69
    $region68: #{vit_forward.1} parent=1 // pred_region
      _
    $region69: #{vit_forward.1} parent=1 // pred_fallthru
      _
    // Predicated region
    $region70: #{vit_forward.1} parent=1 // pred_check
      _
    $region71: #{vit_forward.1} parent=1 // pred_check_branch
      %65 = sbr.rel (0) target = $region73
    $region72: #{vit_forward.1} parent=1 // pred_region
      _
    $region73: #{vit_forward.1} parent=1 // pred_fallthru
      _
    // Predicated region
    $region74: #{vit_forward.1} parent=1 // pred_check
      _
    $region75: #{vit_forward.1} parent=1 // pred_check_branch
      %67 = sbr.rel (0) target = $region77
    $region76: #{vit_forward.1} parent=1 // pred_region
      _
    $region77: #{vit_forward.1} parent=1 // pred_fallthru
      _
    // Predicated region
    $region78: #{vit_forward.1} parent=1 // pred_check
      _
    $region79: #{vit_forward.1} parent=1 // pred_check_branch
      %69 = sbr.rel (0) target = $region81
    $region80: #{vit_forward.1} parent=1 // pred_region
      _
    $region81: #{vit_forward.1} parent=1 // pred_fallthru
      _
    // Predicated region
    $region82: #{vit_forward.1} parent=1 // pred_check
      _
    $region83: #{vit_forward.1} parent=1 // pred_check_branch
      %71 = sbr.rel (0) target = $region85
    $region84: #{vit_forward.1} parent=1 // pred_region
      _
    $region85: #{vit_forward.1} parent=1 // pred_fallthru
      _
    // Predicated region
    $region86: #{vit_forward.1} parent=1 // pred_check
      _
    $region87: #{vit_forward.1} parent=1 // pred_check_branch
      %73 = sbr.rel (0) target = $region89
    $region88: #{vit_forward.1} parent=1 // pred_region
      _
    $region89: #{vit_forward.1} parent=1 // pred_fallthru
      _
    // Predicated region
    $region90: #{vit_forward.1} parent=1 // pred_check
      _
    $region91: #{vit_forward.1} parent=1 // pred_check_branch
      %75 = sbr.rel (0) target = $region93
    $region92: #{vit_forward.1} parent=1 // pred_region
      _
    $region93: #{vit_forward.1} parent=1 // pred_fallthru
      _
    // Predicated region
    $region94: #{vit_forward.1} parent=1 // pred_check
      _
    $region95: #{vit_forward.1} parent=1 // pred_check_branch
      %77 = sbr.rel (0) target = $region97
    $region96: #{vit_forward.1} parent=1 // pred_region
      _
    $region97: #{vit_forward.1} parent=1 // pred_fallthru
      _
    %v79 = vld [vmem:[%s0] sm:$0xff]
    %v80 = vld [vmem:[%s0 + $0x8] sm:$0xff]
    %v81 = vld [vmem:[%s0 + $0x10] sm:$0xff]
    %v82 = vld [vmem:[%s0 + $0x18] sm:$0xff]
    %v83 = vld [vmem:[%s0 + $0x20] sm:$0xff]
    %v84 = vld [vmem:[%s0 + $0x28] sm:$0xff]
    %v85 = vld [vmem:[%s1] sm:$0x1]
    %v86 = vld [vmem:[%s2] sm:$0x1]
    %vm87 = vcmask 523264
    %v88 = vsel %vm87, %v79, 0.0
    %89 = vadd.xlane.f32.xlu0 %v88
    %v90 = vpop.xlane.xlu0 %89
    %v91 = vsel %vm87, %v80, 0.0
    %92 = vadd.xlane.f32.xlu0 %v91
    %v93 = vpop.xlane.xlu0 %92
    %v94 = vsel %vm87, %v81, 0.0
    %95 = vadd.xlane.f32.xlu0 %v94
    %v96 = vpop.xlane.xlu0 %95
    %v97 = vsel %vm87, %v82, 0.0
    %98 = vadd.xlane.f32.xlu0 %v97
    %v99 = vpop.xlane.xlu0 %98
    %v100 = vsel %vm87, %v83, 0.0
    %101 = vadd.xlane.f32.xlu0 %v100
    %v102 = vpop.xlane.xlu0 %101
    %v103 = vsel %vm87, %v84, 0.0
    %104 = vadd.xlane.f32.xlu0 %v103
    %v105 = vpop.xlane.xlu0 %104
    %v106 = vrcp.pop 64.0
    %v107 = vmul.f32 %v90, %v106
    %v108 = vmul.f32 %v93, %v106
    %v109 = vmul.f32 %v96, %v106
    %v110 = vmul.f32 %v99, %v106
    %v111 = vmul.f32 %v102, %v106
    %v112 = vmul.f32 %v105, %v106
    %v113 = vsub.f32 %v79, %v107
    %v114 = vsub.f32 %v80, %v108
    %v115 = vsub.f32 %v81, %v109
    %v116 = vsub.f32 %v82, %v110
    %v117 = vsub.f32 %v83, %v111
    %v118 = vsub.f32 %v84, %v112
    %v119 = vmul.f32 %v113, %v113
    %v120 = vmul.f32 %v114, %v114
    %v121 = vmul.f32 %v115, %v115
    %v122 = vmul.f32 %v116, %v116
    %v123 = vmul.f32 %v117, %v117
    %v124 = vmul.f32 %v118, %v118
    %v125 = vsel %vm87, %v119, 0.0
    %126 = vadd.xlane.f32.xlu0 %v125
    %v127 = vpop.xlane.xlu0 %126
    %v128 = vsel %vm87, %v120, 0.0
    %129 = vadd.xlane.f32.xlu0 %v128
    %v130 = vpop.xlane.xlu0 %129
    %v131 = vsel %vm87, %v121, 0.0
    %132 = vadd.xlane.f32.xlu0 %v131
    %v133 = vpop.xlane.xlu0 %132
    %v134 = vsel %vm87, %v122, 0.0
    %135 = vadd.xlane.f32.xlu0 %v134
    %v136 = vpop.xlane.xlu0 %135
    %v137 = vsel %vm87, %v123, 0.0
    %138 = vadd.xlane.f32.xlu0 %v137
    %v139 = vpop.xlane.xlu0 %138
    %v140 = vsel %vm87, %v124, 0.0
    %141 = vadd.xlane.f32.xlu0 %v140
    %v142 = vpop.xlane.xlu0 %141
    %v143 = vmul.f32 %v127, %v106
    %v144 = vmul.f32 %v130, %v106
    %v145 = vmul.f32 %v133, %v106
    %v146 = vmul.f32 %v136, %v106
    %v147 = vmul.f32 %v139, %v106
    %v148 = vmul.f32 %v142, %v106
    %v149 = vadd.f32 %v143, 1e-05
    %v150 = vadd.f32 %v144, 1e-05
    %v151 = vadd.f32 %v145, 1e-05
    %v152 = vadd.f32 %v146, 1e-05
    %v153 = vadd.f32 %v147, 1e-05
    %v154 = vadd.f32 %v148, 1e-05
    %v155 = vrsqrt.pop %v149
    %v156 = vrsqrt.pop %v150
    %v157 = vrsqrt.pop %v151
    %v158 = vrsqrt.pop %v152
    %v159 = vrsqrt.pop %v153
    %v160 = vrsqrt.pop %v154
    %v161 = vmul.f32 %v113, %v155
    %v162 = vmul.f32 %v114, %v156
    %v163 = vmul.f32 %v115, %v157
    %v164 = vmul.f32 %v116, %v158
    %v165 = vmul.f32 %v117, %v159
    %v166 = vmul.f32 %v118, %v160
    %v168 = vlaneseq
    %v169 = vshrl.u32 %v168, 7
    %v170 = vsub.s32 0, %v169
    %v171 = vrot.slane %v85, %v170
    %v173 = vmul.f32 %v161, %v171
    %v174 = vmul.f32 %v162, %v171
    %v175 = vmul.f32 %v163, %v171
    %v176 = vmul.f32 %v164, %v171
    %v177 = vmul.f32 %v165, %v171
    %v178 = vmul.f32 %v166, %v171
    %v180 = vlaneseq
    %v181 = vshrl.u32 %v180, 7
    %v182 = vsub.s32 0, %v181
    %v183 = vrot.slane %v86, %v182
    %v185 = vadd.f32 %v173, %v183
    %v186 = vadd.f32 %v174, %v183
    %v187 = vadd.f32 %v175, %v183
    %v188 = vadd.f32 %v176, %v183
    %v189 = vadd.f32 %v177, %v183
    %v190 = vadd.f32 %v178, %v183
    %v191 = vld [vmem:[%s3] sm:$0xf]
    %v192 = vld [vmem:[%s3 + $0x4] sm:$0xf]
    %v193 = vld [vmem:[%s3 + $0x8] sm:$0xf]
    %v194 = vld [vmem:[%s3 + $0xc] sm:$0xf]
    %v195 = vld [vmem:[%s3 + $0x10] sm:$0xf]
    %v196 = vld [vmem:[%s3 + $0x14] sm:$0xf]
    %v197 = vld [vmem:[%s3 + $0x18] sm:$0xf]
    %v198 = vld [vmem:[%s3 + $0x1c] sm:$0xf]
    %v199 = vpack.c.bf16 %v186, %v185
    %v200 = vpack.c.bf16 %v188, %v187
    %v201 = vpack.c.bf16 %v190, %v189
    %v202 = vld [vmem:[%s4] sm:$0x1]
    %v204 = vlaneseq
    %v205 = vshrl.u32 %v204, 7
    %v206 = vsub.s32 0, %v205
    %v207 = vrot.slane %v202, %v206
    %v217 = vunpack.c.l.b16 %v191
    %v218 = vunpack.c.l.b16 %v192
    %v219 = vunpack.c.l.b16 %v193
    %v220 = vunpack.c.l.b16 %v194
    %v221 = vunpack.c.l.b16 %v195
    %v222 = vunpack.c.l.b16 %v196
    %v223 = vunpack.c.l.b16 %v197
    %v224 = vunpack.c.l.b16 %v198
    %v225 = vpack.c.b16 %v218, %v217
    %v226 = vpack.c.b16 %v220, %v219
    %v227 = vpack.c.b16 %v222, %v221
    %v228 = vpack.c.b16 %v224, %v223
    %v234 = vsel %vm87, %v199, 0
    %v237 = vsel %vm87, %v200, 0
    %v240 = vsel %vm87, %v201, 0
    %242 = vmatprep.subr.bf16.mxu0 0
    %243 = vmatpush1.bf16.msra.mxu0 %v225
    %244 = vmatprep.subr.bf16.mxu0 0
    %245 = vmatpush1.bf16.msra.mxu0 %v226
    %246 = vmatprep.subr.bf16.mxu0 0
    %247 = vmatpush1.bf16.msra.mxu0 %v227
    %248 = vmatprep.subr.bf16.mxu0 0
    %249 = vmatpush1.bf16.msra.mxu0 %v228
    %250 = vmatprep.subr.bf16.mxu0 0
    %251 = vmatpush1.bf16.msra.mxu0 0
    %252 = vmatprep.subr.bf16.mxu0 0
    %253 = vmatpush1.bf16.msra.mxu0 0
    %254 = vmatprep.subr.bf16.mxu0 0
    %255 = vmatpush1.bf16.msra.mxu0 0
    %256 = vmatprep.subr.bf16.mxu0 0
    %257 = vmatpush1.bf16.msra.mxu0 0
    %258 = vmatprep.subr.bf16.mxu0 0
    %259 = vmatpush1.bf16.msra.mxu0 0
    %260 = vmatprep.subr.bf16.mxu0 0
    %261 = vmatpush1.bf16.msra.mxu0 0
    %262 = vmatprep.subr.bf16.mxu0 0
    %263 = vmatpush1.bf16.msra.mxu0 0
    %264 = vmatprep.subr.bf16.mxu0 0
    %265 = vmatpush1.bf16.msra.mxu0 0
    %266 = vmatprep.subr.bf16.mxu0 0
    %267 = vmatpush1.bf16.msra.mxu0 0
    %268 = vmatprep.subr.bf16.mxu0 0
    %269 = vmatpush1.bf16.msra.mxu0 0
    %270 = vmatprep.subr.bf16.mxu0 0
    %271 = vmatpush1.bf16.msra.mxu0 0
    %272 = vmatprep.subr.bf16.mxu0 0
    %273 = vmatpush1.bf16.msra.mxu0 0
    %274 = vmatprep.mubr.bf16.mxu0 0
    %275 = vmatmul.mubr.bf16.gmra.mrb[0].mxu0 %v234
    %v276 = vpop.f32.mrb[0].mxu0
    %v277 = vadd.f32 %v207, %v276
    %v278 = vpop.f32.mrb[0].mxu0
    %v279 = vpop.f32.mrb[0].mxu0
    %v280 = vadd.f32 %v207, %v279
    %v281 = vpop.f32.mrb[0].mxu0
    %282 = vmatprep.mubr.bf16.mxu0 0
    %283 = vmatmul.mubr.bf16.gmra.mrb[0].mxu0 %v237
    %v284 = vpop.f32.mrb[0].mxu0
    %v285 = vadd.f32 %v207, %v284
    %v286 = vpop.f32.mrb[0].mxu0
    %v287 = vpop.f32.mrb[0].mxu0
    %v288 = vadd.f32 %v207, %v287
    %v289 = vpop.f32.mrb[0].mxu0
    %290 = vmatprep.mubr.bf16.mxu0 0
    %291 = vmatmul.mubr.bf16.gmra.mrb[0].mxu0 %v240
    %v292 = vpop.f32.mrb[0].mxu0
    %v293 = vadd.f32 %v207, %v292
    %v294 = vpop.f32.mrb[0].mxu0
    %v295 = vpop.f32.mrb[0].mxu0
    %v296 = vadd.f32 %v207, %v295
    %v297 = vpop.f32.mrb[0].mxu0
    %298 = vdwg.mxu0
    %v299 = vld [vmem:[%s5] sm:$0x1]
    %v300 = vld [vmem:[%s6] sm:$0x1]
    %vm301 = vcmask 261120
    %v302 = vsel %vm301, %v277, 0.0
    %303 = vadd.xlane.f32.xlu0 %v302
    %v304 = vpop.xlane.xlu0 %303
    %v305 = vsel %vm301, %v280, 0.0
    %306 = vadd.xlane.f32.xlu0 %v305
    %v307 = vpop.xlane.xlu0 %306
    %v308 = vsel %vm301, %v285, 0.0
    %309 = vadd.xlane.f32.xlu0 %v308
    %v310 = vpop.xlane.xlu0 %309
    %v311 = vsel %vm301, %v288, 0.0
    %312 = vadd.xlane.f32.xlu0 %v311
    %v313 = vpop.xlane.xlu0 %312
    %v314 = vsel %vm301, %v293, 0.0
    %315 = vadd.xlane.f32.xlu0 %v314
    %v316 = vpop.xlane.xlu0 %315
    %v317 = vsel %vm301, %v296, 0.0
    %318 = vadd.xlane.f32.xlu0 %v317
    %v319 = vpop.xlane.xlu0 %318
    %v320 = vrcp.pop 32.0
    %v321 = vmul.f32 %v304, %v320
    %v322 = vmul.f32 %v307, %v320
    %v323 = vmul.f32 %v310, %v320
    %v324 = vmul.f32 %v313, %v320
    %v325 = vmul.f32 %v316, %v320
    %v326 = vmul.f32 %v319, %v320
    %v327 = vsub.f32 %v277, %v321
    %v328 = vsub.f32 %v280, %v322
    %v329 = vsub.f32 %v285, %v323
    %v330 = vsub.f32 %v288, %v324
    %v331 = vsub.f32 %v293, %v325
    %v332 = vsub.f32 %v296, %v326
    %v333 = vmul.f32 %v327, %v327
    %v334 = vmul.f32 %v328, %v328
    %v335 = vmul.f32 %v329, %v329
    %v336 = vmul.f32 %v330, %v330
    %v337 = vmul.f32 %v331, %v331
    %v338 = vmul.f32 %v332, %v332
    %v339 = vsel %vm301, %v333, 0.0
    %340 = vadd.xlane.f32.xlu0 %v339
    %v341 = vpop.xlane.xlu0 %340
    %v342 = vsel %vm301, %v334, 0.0
    %343 = vadd.xlane.f32.xlu0 %v342
    %v344 = vpop.xlane.xlu0 %343
    %v345 = vsel %vm301, %v335, 0.0
    %346 = vadd.xlane.f32.xlu0 %v345
    %v347 = vpop.xlane.xlu0 %346
    %v348 = vsel %vm301, %v336, 0.0
    %349 = vadd.xlane.f32.xlu0 %v348
    %v350 = vpop.xlane.xlu0 %349
    %v351 = vsel %vm301, %v337, 0.0
    %352 = vadd.xlane.f32.xlu0 %v351
    %v353 = vpop.xlane.xlu0 %352
    %v354 = vsel %vm301, %v338, 0.0
    %355 = vadd.xlane.f32.xlu0 %v354
    %v356 = vpop.xlane.xlu0 %355
    %v357 = vmul.f32 %v341, %v320
    %v358 = vmul.f32 %v344, %v320
    %v359 = vmul.f32 %v347, %v320
    %v360 = vmul.f32 %v350, %v320
    %v361 = vmul.f32 %v353, %v320
    %v362 = vmul.f32 %v356, %v320
    %v363 = vadd.f32 %v357, 1e-05
    %v364 = vadd.f32 %v358, 1e-05
    %v365 = vadd.f32 %v359, 1e-05
    %v366 = vadd.f32 %v360, 1e-05
    %v367 = vadd.f32 %v361, 1e-05
    %v368 = vadd.f32 %v362, 1e-05
    %v369 = vrsqrt.pop %v363
    %v370 = vrsqrt.pop %v364
    %v371 = vrsqrt.pop %v365
    %v372 = vrsqrt.pop %v366
    %v373 = vrsqrt.pop %v367
    %v374 = vrsqrt.pop %v368
    %v375 = vmul.f32 %v327, %v369
    %v376 = vmul.f32 %v328, %v370
    %v377 = vmul.f32 %v329, %v371
    %v378 = vmul.f32 %v330, %v372
    %v379 = vmul.f32 %v331, %v373
    %v380 = vmul.f32 %v332, %v374
    %v382 = vlaneseq
    %v383 = vshrl.u32 %v382, 7
    %v384 = vsub.s32 0, %v383
    %v385 = vrot.slane %v299, %v384
    %v387 = vmul.f32 %v375, %v385
    %v388 = vmul.f32 %v376, %v385
    %v389 = vmul.f32 %v377, %v385
    %v390 = vmul.f32 %v378, %v385
    %v391 = vmul.f32 %v379, %v385
    %v392 = vmul.f32 %v380, %v385
    %v394 = vlaneseq
    %v395 = vshrl.u32 %v394, 7
    %v396 = vsub.s32 0, %v395
    %v397 = vrot.slane %v300, %v396
    %v399 = vadd.f32 %v387, %v397
    %v400 = vadd.f32 %v388, %v397
    %v401 = vadd.f32 %v389, %v397
    %v402 = vadd.f32 %v390, %v397
    %v403 = vadd.f32 %v391, %v397
    %v404 = vadd.f32 %v392, %v397
    %v405 = vlaneseq
    %v406 = vshrl.u32 %v405, 7
    %v407 = vadd.s32 %v406, 8
    %v408 = vadd.s32 %v406, 16
    %vm409 = vcmp.eq.s32.totalorder %v406, 0
    %vm410 = vcmp.eq.s32.totalorder %v407, 0
    %vm411 = vcmp.eq.s32.totalorder %v408, 0
    %v412 = vld [vmem:[%s7] sm:$0x1]
    %v414 = vlaneseq
    %v415 = vshrl.u32 %v414, 7
    %v416 = vsub.s32 0, %v415
    %v417 = vrot.slane %v412, %v416
    %v419 = vsel %vm409, %v417, %v399
    %v420 = vsel %vm410, %v417, %v400
    %v421 = vsel %vm411, %v417, %v401
    %v422 = vsel %vm409, %v417, %v402
    %v423 = vsel %vm410, %v417, %v403
    %v424 = vsel %vm411, %v417, %v404
    %v425 = vld [vmem:[%s8] sm:$0xff]
    %v426 = vld [vmem:[%s8 + $0x8] sm:$0xff]
    %v427 = vld [vmem:[%s8 + $0x10] sm:$0xff]
    %v428 = vadd.f32 %v419, %v425
    %v429 = vadd.f32 %v420, %v426
    %v430 = vadd.f32 %v421, %v427
    %v431 = vadd.f32 %v422, %v425
    %v432 = vadd.f32 %v423, %v426
    %v433 = vadd.f32 %v424, %v427
    %v434 = vlaneseq
    %v435 = vand.u32 %v434, 127
    %vm436 = vcmp.lt.s32.totalorder %v435, 17
    %v437 = vsel %vm436, 0.0, -1e+30
    %v438 = vld [vmem:[%s9] sm:$0x1]
    %v439 = vld [vmem:[%s10] sm:$0x1]
    %v440 = vsel %vm301, %v428, 0.0
    %441 = vadd.xlane.f32.xlu0 %v440
    %v442 = vpop.xlane.xlu0 %441
    %v443 = vsel %vm301, %v429, 0.0
    %444 = vadd.xlane.f32.xlu0 %v443
    %v445 = vpop.xlane.xlu0 %444
    %v446 = vsel %vm301, %v430, 0.0
    %447 = vadd.xlane.f32.xlu0 %v446
    %v448 = vpop.xlane.xlu0 %447
    %v449 = vsel %vm301, %v431, 0.0
    %450 = vadd.xlane.f32.xlu0 %v449
    %v451 = vpop.xlane.xlu0 %450
    %v452 = vsel %vm301, %v432, 0.0
    %453 = vadd.xlane.f32.xlu0 %v452
    %v454 = vpop.xlane.xlu0 %453
    %v455 = vsel %vm301, %v433, 0.0
    %456 = vadd.xlane.f32.xlu0 %v455
    %v457 = vpop.xlane.xlu0 %456
    %v458 = vmul.f32 %v442, %v320
    %v459 = vmul.f32 %v445, %v320
    %v460 = vmul.f32 %v448, %v320
    %v461 = vmul.f32 %v451, %v320
    %v462 = vmul.f32 %v454, %v320
    %v463 = vmul.f32 %v457, %v320
    %v464 = vsub.f32 %v428, %v458
    %v465 = vsub.f32 %v429, %v459
    %v466 = vsub.f32 %v430, %v460
    %v467 = vsub.f32 %v431, %v461
    %v468 = vsub.f32 %v432, %v462
    %v469 = vsub.f32 %v433, %v463
    %v470 = vmul.f32 %v464, %v464
    %v471 = vmul.f32 %v465, %v465
    %v472 = vmul.f32 %v466, %v466
    %v473 = vmul.f32 %v467, %v467
    %v474 = vmul.f32 %v468, %v468
    %v475 = vmul.f32 %v469, %v469
    %v476 = vsel %vm301, %v470, 0.0
    %477 = vadd.xlane.f32.xlu0 %v476
    %v478 = vpop.xlane.xlu0 %477
    %v479 = vsel %vm301, %v471, 0.0
    %480 = vadd.xlane.f32.xlu0 %v479
    %v481 = vpop.xlane.xlu0 %480
    %v482 = vsel %vm301, %v472, 0.0
    %483 = vadd.xlane.f32.xlu0 %v482
    %v484 = vpop.xlane.xlu0 %483
    %v485 = vsel %vm301, %v473, 0.0
    %486 = vadd.xlane.f32.xlu0 %v485
    %v487 = vpop.xlane.xlu0 %486
    %v488 = vsel %vm301, %v474, 0.0
    %489 = vadd.xlane.f32.xlu0 %v488
    %v490 = vpop.xlane.xlu0 %489
    %v491 = vsel %vm301, %v475, 0.0
    %492 = vadd.xlane.f32.xlu0 %v491
    %v493 = vpop.xlane.xlu0 %492
    %v494 = vmul.f32 %v478, %v320
    %v495 = vmul.f32 %v481, %v320
    %v496 = vmul.f32 %v484, %v320
    %v497 = vmul.f32 %v487, %v320
    %v498 = vmul.f32 %v490, %v320
    %v499 = vmul.f32 %v493, %v320
    %v500 = vadd.f32 %v494, 1e-05
    %v501 = vadd.f32 %v495, 1e-05
    %v502 = vadd.f32 %v496, 1e-05
    %v503 = vadd.f32 %v497, 1e-05
    %v504 = vadd.f32 %v498, 1e-05
    %v505 = vadd.f32 %v499, 1e-05
    %v506 = vrsqrt.pop %v500
    %v507 = vrsqrt.pop %v501
    %v508 = vrsqrt.pop %v502
    %v509 = vrsqrt.pop %v503
    %v510 = vrsqrt.pop %v504
    %v511 = vrsqrt.pop %v505
    %v512 = vmul.f32 %v464, %v506
    %v513 = vmul.f32 %v465, %v507
    %v514 = vmul.f32 %v466, %v508
    %v515 = vmul.f32 %v467, %v509
    %v516 = vmul.f32 %v468, %v510
    %v517 = vmul.f32 %v469, %v511
    %v519 = vlaneseq
    %v520 = vshrl.u32 %v519, 7
    %v521 = vsub.s32 0, %v520
    %v522 = vrot.slane %v438, %v521
    %v524 = vmul.f32 %v512, %v522
    %v525 = vmul.f32 %v513, %v522
    %v526 = vmul.f32 %v514, %v522
    %v527 = vmul.f32 %v515, %v522
    %v528 = vmul.f32 %v516, %v522
    %v529 = vmul.f32 %v517, %v522
    %v531 = vlaneseq
    %v532 = vshrl.u32 %v531, 7
    %v533 = vsub.s32 0, %v532
    %v534 = vrot.slane %v439, %v533
    %v536 = vadd.f32 %v524, %v534
    %v537 = vadd.f32 %v525, %v534
    %v538 = vadd.f32 %v526, %v534
    %v539 = vadd.f32 %v527, %v534
    %v540 = vadd.f32 %v528, %v534
    %v541 = vadd.f32 %v529, %v534
    %v542 = vld [vmem:[%s11] sm:$0xf]
    %v543 = vld [vmem:[%s11 + $0x4] sm:$0xf]
    %v544 = vld [vmem:[%s11 + $0x8] sm:$0xf]
    %v545 = vld [vmem:[%s11 + $0xc] sm:$0xf]
    %v546 = vpack.c.bf16 %v537, %v536
    %v547 = vpack.c.bf16 %v539, %v538
    %v548 = vpack.c.bf16 %v541, %v540
    %v553 = vunpack.c.l.b16 %v542
    %v554 = vunpack.c.l.b16 %v543
    %v555 = vunpack.c.l.b16 %v544
    %v556 = vunpack.c.l.b16 %v545
    %v557 = vpack.c.b16 %v554, %v553
    %v558 = vpack.c.b16 %v556, %v555
    %v562 = vsel %vm301, %v546, 0
    %v565 = vsel %vm301, %v547, 0
    %v568 = vsel %vm301, %v548, 0
    %570 = vmatprep.subr.bf16.mxu0 0
    %571 = vmatpush1.bf16.msra.mxu0 %v557
    %572 = vmatprep.subr.bf16.mxu0 0
    %573 = vmatpush1.bf16.msra.mxu0 %v558
    %574 = vmatprep.subr.bf16.mxu0 0
    %575 = vmatpush1.bf16.msra.mxu0 0
    %576 = vmatprep.subr.bf16.mxu0 0
    %577 = vmatpush1.bf16.msra.mxu0 0
    %578 = vmatprep.subr.bf16.mxu0 0
    %579 = vmatpush1.bf16.msra.mxu0 0
    %580 = vmatprep.subr.bf16.mxu0 0
    %581 = vmatpush1.bf16.msra.mxu0 0
    %582 = vmatprep.subr.bf16.mxu0 0
    %583 = vmatpush1.bf16.msra.mxu0 0
    %584 = vmatprep.subr.bf16.mxu0 0
    %585 = vmatpush1.bf16.msra.mxu0 0
    %586 = vmatprep.subr.bf16.mxu0 0
    %587 = vmatpush1.bf16.msra.mxu0 0
    %588 = vmatprep.subr.bf16.mxu0 0
    %589 = vmatpush1.bf16.msra.mxu0 0
    %590 = vmatprep.subr.bf16.mxu0 0
    %591 = vmatpush1.bf16.msra.mxu0 0
    %592 = vmatprep.subr.bf16.mxu0 0
    %593 = vmatpush1.bf16.msra.mxu0 0
    %594 = vmatprep.subr.bf16.mxu0 0
    %595 = vmatpush1.bf16.msra.mxu0 0
    %596 = vmatprep.subr.bf16.mxu0 0
    %597 = vmatpush1.bf16.msra.mxu0 0
    %598 = vmatprep.subr.bf16.mxu0 0
    %599 = vmatpush1.bf16.msra.mxu0 0
    %600 = vmatprep.subr.bf16.mxu0 0
    %601 = vmatpush1.bf16.msra.mxu0 0
    %602 = vmatprep.mubr.bf16.mxu0 0
    %603 = vmatmul.mubr.bf16.gmra.mrb[0].mxu0 %v562
    %v604 = vpop.f32.mrb[0].mxu0
    %v605 = vadd.f32 0.0, %v604
    %v606 = vpop.f32.mrb[0].mxu0
    %v607 = vpop.f32.mrb[0].mxu0
    %v608 = vadd.f32 0.0, %v607
    %v609 = vpop.f32.mrb[0].mxu0
    %610 = vmatprep.mubr.bf16.mxu0 0
    %611 = vmatmul.mubr.bf16.gmra.mrb[0].mxu0 %v565
    %v612 = vpop.f32.mrb[0].mxu0
    %v613 = vadd.f32 0.0, %v612
    %v614 = vpop.f32.mrb[0].mxu0
    %v615 = vpop.f32.mrb[0].mxu0
    %v616 = vadd.f32 0.0, %v615
    %v617 = vpop.f32.mrb[0].mxu0
    %618 = vmatprep.mubr.bf16.mxu0 0
    %619 = vmatmul.mubr.bf16.gmra.mrb[0].mxu0 %v568
    %v620 = vpop.f32.mrb[0].mxu0
    %v621 = vadd.f32 0.0, %v620
    %v622 = vpop.f32.mrb[0].mxu0
    %v623 = vpop.f32.mrb[0].mxu0
    %v624 = vadd.f32 0.0, %v623
    %v625 = vpop.f32.mrb[0].mxu0
    %626 = vdwg.mxu0
    %v627 = vpack.c.bf16 %v608, %v605
    %v628 = vpack.c.bf16 %v613, %v613
    %v629 = vpack.c.bf16 %v621, %v616
    %v630 = vpack.c.bf16 %v624, %v624
    %633 = vrot.lane.b32.xlu0 %v627, 96
    %v634 = vpop.permute.xlu0 %633
    %635 = vrot.lane.b32.xlu0 %v628, 96
    %v636 = vpop.permute.xlu0 %635
    %vm637 = vcmask 64512
    %v639 = vsel %vm637, %v627, 0
    %v642 = vsel %vm637, %v628, 0
    %v645 = vsel %vm637, %v634, 0
    %v648 = vsel %vm637, %v636, 0
    %650 = vmatprep.subr.bf16.mxu0 0
    %651 = vmatpush1.bf16.xpose.msra.mxu0 %v645
    %652 = vmatprep.subr.bf16.mxu0 0
    %653 = vmatpush1.bf16.xpose.msra.mxu0 %v648
    %654 = vmatprep.subr.bf16.mxu0 0
    %655 = vmatpush1.bf16.xpose.msra.mxu0 0
    %656 = vmatprep.subr.bf16.mxu0 0
    %657 = vmatpush1.bf16.xpose.msra.mxu0 0
    %658 = vmatprep.subr.bf16.mxu0 0
    %659 = vmatpush1.bf16.xpose.msra.mxu0 0
    %660 = vmatprep.subr.bf16.mxu0 0
    %661 = vmatpush1.bf16.xpose.msra.mxu0 0
    %662 = vmatprep.subr.bf16.mxu0 0
    %663 = vmatpush1.bf16.xpose.msra.mxu0 0
    %664 = vmatprep.subr.bf16.mxu0 0
    %665 = vmatpush1.bf16.xpose.msra.mxu0 0
    %666 = vmatprep.subr.bf16.mxu0 0
    %667 = vmatpush1.bf16.xpose.msra.mxu0 0
    %668 = vmatprep.subr.bf16.mxu0 0
    %669 = vmatpush1.bf16.xpose.msra.mxu0 0
    %670 = vmatprep.subr.bf16.mxu0 0
    %671 = vmatpush1.bf16.xpose.msra.mxu0 0
    %672 = vmatprep.subr.bf16.mxu0 0
    %673 = vmatpush1.bf16.xpose.msra.mxu0 0
    %674 = vmatprep.subr.bf16.mxu0 0
    %675 = vmatpush1.bf16.xpose.msra.mxu0 0
    %676 = vmatprep.subr.bf16.mxu0 0
    %677 = vmatpush1.bf16.xpose.msra.mxu0 0
    %678 = vmatprep.subr.bf16.mxu0 0
    %679 = vmatpush1.bf16.xpose.msra.mxu0 0
    %680 = vmatprep.subr.bf16.mxu0 0
    %681 = vmatpush1.bf16.xpose.msra.mxu0 0
    %682 = vmatprep.mubr.bf16.mxu0 0
    %683 = vmatmul.mubr.bf16.gmra.mrb[0].mxu0 %v639
    %v684 = vpop.f32.mrb[0].mxu0
    %v685 = vadd.f32 0.0, %v684
    %v686 = vpop.f32.mrb[0].mxu0
    %v687 = vpop.f32.mrb[0].mxu0
    %v688 = vadd.f32 0.0, %v687
    %v689 = vpop.f32.mrb[0].mxu0
    %690 = vmatprep.mubr.bf16.mxu0 0
    %691 = vmatmul.mubr.bf16.gmra.mrb[0].mxu0 %v642
    %v692 = vpop.f32.mrb[0].mxu0
    %v693 = vadd.f32 0.0, %v692
    %v694 = vpop.f32.mrb[0].mxu0
    %v695 = vpop.f32.mrb[0].mxu0
    %v696 = vpop.f32.mrb[0].mxu0
    %697 = vdwg.mxu0
    %700 = vrot.lane.b32.xlu0 %v629, 96
    %v701 = vpop.permute.xlu0 %700
    %702 = vrot.lane.b32.xlu0 %v630, 96
    %v703 = vpop.permute.xlu0 %702
    %v705 = vsel %vm637, %v629, 0
    %v708 = vsel %vm637, %v630, 0
    %v711 = vsel %vm637, %v701, 0
    %v714 = vsel %vm637, %v703, 0
    %716 = vmatprep.subr.bf16.mxu0 0
    %717 = vmatpush1.bf16.xpose.msra.mxu0 %v711
    %718 = vmatprep.subr.bf16.mxu0 0
    %719 = vmatpush1.bf16.xpose.msra.mxu0 %v714
    %720 = vmatprep.subr.bf16.mxu0 0
    %721 = vmatpush1.bf16.xpose.msra.mxu0 0
    %722 = vmatprep.subr.bf16.mxu0 0
    %723 = vmatpush1.bf16.xpose.msra.mxu0 0
    %724 = vmatprep.subr.bf16.mxu0 0
    %725 = vmatpush1.bf16.xpose.msra.mxu0 0
    %726 = vmatprep.subr.bf16.mxu0 0
    %727 = vmatpush1.bf16.xpose.msra.mxu0 0
    %728 = vmatprep.subr.bf16.mxu0 0
    %729 = vmatpush1.bf16.xpose.msra.mxu0 0
    %730 = vmatprep.subr.bf16.mxu0 0
    %731 = vmatpush1.bf16.xpose.msra.mxu0 0
    %732 = vmatprep.subr.bf16.mxu0 0
    %733 = vmatpush1.bf16.xpose.msra.mxu0 0
    %734 = vmatprep.subr.bf16.mxu0 0
    %735 = vmatpush1.bf16.xpose.msra.mxu0 0
    %736 = vmatprep.subr.bf16.mxu0 0
    %737 = vmatpush1.bf16.xpose.msra.mxu0 0
    %738 = vmatprep.subr.bf16.mxu0 0
    %739 = vmatpush1.bf16.xpose.msra.mxu0 0
    %740 = vmatprep.subr.bf16.mxu0 0
    %741 = vmatpush1.bf16.xpose.msra.mxu0 0
    %742 = vmatprep.subr.bf16.mxu0 0
    %743 = vmatpush1.bf16.xpose.msra.mxu0 0
    %744 = vmatprep.subr.bf16.mxu0 0
    %745 = vmatpush1.bf16.xpose.msra.mxu0 0
    %746 = vmatprep.subr.bf16.mxu0 0
    %747 = vmatpush1.bf16.xpose.msra.mxu0 0
    %748 = vmatprep.mubr.bf16.mxu0 0
    %749 = vmatmul.mubr.bf16.gmra.mrb[0].mxu0 %v705
    %v750 = vpop.f32.mrb[0].mxu0
    %v751 = vadd.f32 0.0, %v750
    %v752 = vpop.f32.mrb[0].mxu0
    %v753 = vpop.f32.mrb[0].mxu0
    %v754 = vadd.f32 0.0, %v753
    %v755 = vpop.f32.mrb[0].mxu0
    %756 = vmatprep.mubr.bf16.mxu0 0
    %757 = vmatmul.mubr.bf16.gmra.mrb[0].mxu0 %v708
    %v758 = vpop.f32.mrb[0].mxu0
    %v759 = vadd.f32 0.0, %v758
    %v760 = vpop.f32.mrb[0].mxu0
    %v761 = vpop.f32.mrb[0].mxu0
    %v762 = vpop.f32.mrb[0].mxu0
    %763 = vdwg.mxu0
    %v764 = vmul.f32 %v685, 0.35355338
    %v765 = vmul.f32 %v688, 0.35355338
    %v766 = vmul.f32 %v693, 0.35355338
    %v767 = vmul.f32 %v751, 0.35355338
    %v768 = vmul.f32 %v754, 0.35355338
    %v769 = vmul.f32 %v759, 0.35355338
    %v770 = vadd.f32 %v764, %v437
    %v771 = vadd.f32 %v765, %v437
    %v772 = vadd.f32 %v766, %v437
    %v773 = vadd.f32 %v767, %v437
    %v774 = vadd.f32 %v768, %v437
    %v775 = vadd.f32 %v769, %v437
    %vm776 = vcmask 195584
    %v777 = vsel %vm776, %v770, -inf
    %778 = vmax.xlane.f32.xlu0 %v777
    %v779 = vpop.xlane.xlu0 %778
    %v780 = vsel %vm776, %v771, -inf
    %781 = vmax.xlane.f32.xlu0 %v780
    %v782 = vpop.xlane.xlu0 %781
    %v783 = vsel %vm776, %v772, -inf
    %784 = vmax.xlane.f32.xlu0 %v783
    %v785 = vpop.xlane.xlu0 %784
    %v786 = vsel %vm776, %v773, -inf
    %787 = vmax.xlane.f32.xlu0 %v786
    %v788 = vpop.xlane.xlu0 %787
    %v789 = vsel %vm776, %v774, -inf
    %790 = vmax.xlane.f32.xlu0 %v789
    %v791 = vpop.xlane.xlu0 %790
    %v792 = vsel %vm776, %v775, -inf
    %793 = vmax.xlane.f32.xlu0 %v792
    %v794 = vpop.xlane.xlu0 %793
    %v795 = vsub.f32 %v770, %v779
    %v796 = vsub.f32 %v771, %v782
    %v797 = vsub.f32 %v772, %v785
    %v798 = vsub.f32 %v773, %v788
    %v799 = vsub.f32 %v774, %v791
    %v800 = vsub.f32 %v775, %v794
    %v801 = vmul.f32 %v795, 1.442695
    %v802 = vpow.pop %v801
    %v803 = vmul.f32 %v796, 1.442695
    %v804 = vpow.pop %v803
    %v805 = vmul.f32 %v797, 1.442695
    %v806 = vpow.pop %v805
    %v807 = vmul.f32 %v798, 1.442695
    %v808 = vpow.pop %v807
    %v809 = vmul.f32 %v799, 1.442695
    %v810 = vpow.pop %v809
    %v811 = vmul.f32 %v800, 1.442695
    %v812 = vpow.pop %v811
    %v813 = vsel %vm776, %v802, 0.0
    %814 = vadd.xlane.f32.xlu0 %v813
    %v815 = vpop.xlane.xlu0 %814
    %v816 = vsel %vm776, %v804, 0.0
    %817 = vadd.xlane.f32.xlu0 %v816
    %v818 = vpop.xlane.xlu0 %817
    %v819 = vsel %vm776, %v806, 0.0
    %820 = vadd.xlane.f32.xlu0 %v819
    %v821 = vpop.xlane.xlu0 %820
    %v822 = vsel %vm776, %v808, 0.0
    %823 = vadd.xlane.f32.xlu0 %v822
    %v824 = vpop.xlane.xlu0 %823
    %v825 = vsel %vm776, %v810, 0.0
    %826 = vadd.xlane.f32.xlu0 %v825
    %v827 = vpop.xlane.xlu0 %826
    %v828 = vsel %vm776, %v812, 0.0
    %829 = vadd.xlane.f32.xlu0 %v828
    %v830 = vpop.xlane.xlu0 %829
    %v831 = vrcp.pop %v815
    %v832 = vrcp.pop %v818
    %v833 = vrcp.pop %v821
    %v834 = vrcp.pop %v824
    %v835 = vrcp.pop %v827
    %v836 = vrcp.pop %v830
    %v837 = vmul.f32 %v802, %v831
    %v838 = vmul.f32 %v804, %v832
    %v839 = vmul.f32 %v806, %v833
    %v840 = vmul.f32 %v808, %v834
    %v841 = vmul.f32 %v810, %v835
    %v842 = vmul.f32 %v812, %v836
    %v843 = vpack.c.bf16 %v838, %v837
    %v844 = vpack.c.bf16 %v839, %v839
    %v845 = vpack.c.bf16 %v841, %v840
    %v846 = vpack.c.bf16 %v842, %v842
    %847 = vrot.lane.b32.xlu0 %v627, 64
    %v848 = vpop.permute.xlu0 %847
    %849 = vrot.lane.b32.xlu0 %v628, 64
    %v850 = vpop.permute.xlu0 %849
    %v853 = vsel %vm776, %v843, 0
    %v856 = vsel %vm776, %v844, 0
    %vm858 = vcmask 1043456
    %v860 = vsel %vm858, %v850, 0
    %862 = vmatprep.subr.bf16.mxu0 0
    %863 = vmatpush1.bf16.msra.mxu0 %v848
    %864 = vmatprep.subr.bf16.mxu0 0
    %865 = vmatpush1.bf16.msra.mxu0 %v860
    %866 = vmatprep.subr.bf16.mxu0 0
    %867 = vmatpush1.bf16.msra.mxu0 0
    %868 = vmatprep.subr.bf16.mxu0 0
    %869 = vmatpush1.bf16.msra.mxu0 0
    %870 = vmatprep.subr.bf16.mxu0 0
    %871 = vmatpush1.bf16.msra.mxu0 0
    %872 = vmatprep.subr.bf16.mxu0 0
    %873 = vmatpush1.bf16.msra.mxu0 0
    %874 = vmatprep.subr.bf16.mxu0 0
    %875 = vmatpush1.bf16.msra.mxu0 0
    %876 = vmatprep.subr.bf16.mxu0 0
    %877 = vmatpush1.bf16.msra.mxu0 0
    %878 = vmatprep.subr.bf16.mxu0 0
    %879 = vmatpush1.bf16.msra.mxu0 0
    %880 = vmatprep.subr.bf16.mxu0 0
    %881 = vmatpush1.bf16.msra.mxu0 0
    %882 = vmatprep.subr.bf16.mxu0 0
    %883 = vmatpush1.bf16.msra.mxu0 0
    %884 = vmatprep.subr.bf16.mxu0 0
    %885 = vmatpush1.bf16.msra.mxu0 0
    %886 = vmatprep.subr.bf16.mxu0 0
    %887 = vmatpush1.bf16.msra.mxu0 0
    %888 = vmatprep.subr.bf16.mxu0 0
    %889 = vmatpush1.bf16.msra.mxu0 0
    %890 = vmatprep.subr.bf16.mxu0 0
    %891 = vmatpush1.bf16.msra.mxu0 0
    %892 = vmatprep.subr.bf16.mxu0 0
    %893 = vmatpush1.bf16.msra.mxu0 0
    %894 = vmatprep.mubr.bf16.mxu0 0
    %895 = vmatmul.mubr.bf16.gmra.mrb[0].mxu0 %v853
    %v896 = vpop.f32.mrb[0].mxu0
    %v897 = vadd.f32 0.0, %v896
    %v898 = vpop.f32.mrb[0].mxu0
    %v899 = vpop.f32.mrb[0].mxu0
    %v900 = vadd.f32 0.0, %v899
    %v901 = vpop.f32.mrb[0].mxu0
    %902 = vmatprep.mubr.bf16.mxu0 0
    %903 = vmatmul.mubr.bf16.gmra.mrb[0].mxu0 %v856
    %v904 = vpop.f32.mrb[0].mxu0
    %v905 = vadd.f32 0.0, %v904
    %v906 = vpop.f32.mrb[0].mxu0
    %v907 = vpop.f32.mrb[0].mxu0
    %v908 = vpop.f32.mrb[0].mxu0
    %909 = vdwg.mxu0
    %910 = vrot.lane.b32.xlu0 %v629, 64
    %v911 = vpop.permute.xlu0 %910
    %912 = vrot.lane.b32.xlu0 %v630, 64
    %v913 = vpop.permute.xlu0 %912
    %v916 = vsel %vm776, %v845, 0
    %v919 = vsel %vm776, %v846, 0
    %v922 = vsel %vm858, %v913, 0
    %924 = vmatprep.subr.bf16.mxu0 0
    %925 = vmatpush1.bf16.msra.mxu0 %v911
    %926 = vmatprep.subr.bf16.mxu0 0
    %927 = vmatpush1.bf16.msra.mxu0 %v922
    %928 = vmatprep.subr.bf16.mxu0 0
    %929 = vmatpush1.bf16.msra.mxu0 0
    %930 = vmatprep.subr.bf16.mxu0 0
    %931 = vmatpush1.bf16.msra.mxu0 0
    %932 = vmatprep.subr.bf16.mxu0 0
    %933 = vmatpush1.bf16.msra.mxu0 0
    %934 = vmatprep.subr.bf16.mxu0 0
    %935 = vmatpush1.bf16.msra.mxu0 0
    %936 = vmatprep.subr.bf16.mxu0 0
    %937 = vmatpush1.bf16.msra.mxu0 0
    %938 = vmatprep.subr.bf16.mxu0 0
    %939 = vmatpush1.bf16.msra.mxu0 0
    %940 = vmatprep.subr.bf16.mxu0 0
    %941 = vmatpush1.bf16.msra.mxu0 0
    %942 = vmatprep.subr.bf16.mxu0 0
    %943 = vmatpush1.bf16.msra.mxu0 0
    %944 = vmatprep.subr.bf16.mxu0 0
    %945 = vmatpush1.bf16.msra.mxu0 0
    %946 = vmatprep.subr.bf16.mxu0 0
    %947 = vmatpush1.bf16.msra.mxu0 0
    %948 = vmatprep.subr.bf16.mxu0 0
    %949 = vmatpush1.bf16.msra.mxu0 0
    %950 = vmatprep.subr.bf16.mxu0 0
    %951 = vmatpush1.bf16.msra.mxu0 0
    %952 = vmatprep.subr.bf16.mxu0 0
    %953 = vmatpush1.bf16.msra.mxu0 0
    %954 = vmatprep.subr.bf16.mxu0 0
    %955 = vmatpush1.bf16.msra.mxu0 0
    %956 = vmatprep.mubr.bf16.mxu0 0
    %957 = vmatmul.mubr.bf16.gmra.mrb[0].mxu0 %v916
    %v958 = vpop.f32.mrb[0].mxu0
    %v959 = vadd.f32 0.0, %v958
    %v960 = vpop.f32.mrb[0].mxu0
    %v961 = vpop.f32.mrb[0].mxu0
    %v962 = vadd.f32 0.0, %v961
    %v963 = vpop.f32.mrb[0].mxu0
    %964 = vmatprep.mubr.bf16.mxu0 0
    %965 = vmatmul.mubr.bf16.gmra.mrb[0].mxu0 %v919
    %v966 = vpop.f32.mrb[0].mxu0
    %v967 = vadd.f32 0.0, %v966
    %v968 = vpop.f32.mrb[0].mxu0
    %v969 = vpop.f32.mrb[0].mxu0
    %v970 = vpop.f32.mrb[0].mxu0
    %971 = vdwg.mxu0
    %972 = vrot.lane.b32.xlu0 %v627, 120
    %v973 = vpop.permute.xlu0 %972
    %974 = vrot.lane.b32.xlu0 %v628, 120
    %v975 = vpop.permute.xlu0 %974
    %976 = vrot.lane.b32.xlu0 %v627, 88
    %v977 = vpop.permute.xlu0 %976
    %978 = vrot.lane.b32.xlu0 %v628, 88
    %v979 = vpop.permute.xlu0 %978
    %v981 = vsel %vm637, %v973, 0
    %v984 = vsel %vm637, %v975, 0
    %v987 = vsel %vm637, %v977, 0
    %v990 = vsel %vm637, %v979, 0
    %992 = vmatprep.subr.bf16.mxu0 0
    %993 = vmatpush1.bf16.xpose.msra.mxu0 %v987
    %994 = vmatprep.subr.bf16.mxu0 0
    %995 = vmatpush1.bf16.xpose.msra.mxu0 %v990
    %996 = vmatprep.subr.bf16.mxu0 0
    %997 = vmatpush1.bf16.xpose.msra.mxu0 0
    %998 = vmatprep.subr.bf16.mxu0 0
    %999 = vmatpush1.bf16.xpose.msra.mxu0 0
    %1000 = vmatprep.subr.bf16.mxu0 0
    %1001 = vmatpush1.bf16.xpose.msra.mxu0 0
    %1002 = vmatprep.subr.bf16.mxu0 0
    %1003 = vmatpush1.bf16.xpose.msra.mxu0 0
    %1004 = vmatprep.subr.bf16.mxu0 0
    %1005 = vmatpush1.bf16.xpose.msra.mxu0 0
    %1006 = vmatprep.subr.bf16.mxu0 0
    %1007 = vmatpush1.bf16.xpose.msra.mxu0 0
    %1008 = vmatprep.subr.bf16.mxu0 0
    %1009 = vmatpush1.bf16.xpose.msra.mxu0 0
    %1010 = vmatprep.subr.bf16.mxu0 0
    %1011 = vmatpush1.bf16.xpose.msra.mxu0 0
    %1012 = vmatprep.subr.bf16.mxu0 0
    %1013 = vmatpush1.bf16.xpose.msra.mxu0 0
    %1014 = vmatprep.subr.bf16.mxu0 0
    %1015 = vmatpush1.bf16.xpose.msra.mxu0 0
    %1016 = vmatprep.subr.bf16.mxu0 0
    %1017 = vmatpush1.bf16.xpose.msra.mxu0 0
    %1018 = vmatprep.subr.bf16.mxu0 0
    %1019 = vmatpush1.bf16.xpose.msra.mxu0 0
    %1020 = vmatprep.subr.bf16.mxu0 0
    %1021 = vmatpush1.bf16.xpose.msra.mxu0 0
    %1022 = vmatprep.subr.bf16.mxu0 0
    %1023 = vmatpush1.bf16.xpose.msra.mxu0 0
    %1024 = vmatprep.mubr.bf16.mxu0 0
    %1025 = vmatmul.mubr.bf16.gmra.mrb[0].mxu0 %v981
    %v1026 = vpop.f32.mrb[0].mxu0
    %v1027 = vadd.f32 0.0, %v1026
    %v1028 = vpop.f32.mrb[0].mxu0
    %v1029 = vpop.f32.mrb[0].mxu0
    %v1030 = vadd.f32 0.0, %v1029
    %v1031 = vpop.f32.mrb[0].mxu0
    %1032 = vmatprep.mubr.bf16.mxu0 0
    %1033 = vmatmul.mubr.bf16.gmra.mrb[0].mxu0 %v984
    %v1034 = vpop.f32.mrb[0].mxu0
    %v1035 = vadd.f32 0.0, %v1034
    %v1036 = vpop.f32.mrb[0].mxu0
    %v1037 = vpop.f32.mrb[0].mxu0
    %v1038 = vpop.f32.mrb[0].mxu0
    %1039 = vdwg.mxu0
    %1040 = vrot.lane.b32.xlu0 %v629, 120
    %v1041 = vpop.permute.xlu0 %1040
    %1042 = vrot.lane.b32.xlu0 %v630, 120
    %v1043 = vpop.permute.xlu0 %1042
    %1044 = vrot.lane.b32.xlu0 %v629, 88
    %v1045 = vpop.permute.xlu0 %1044
    %1046 = vrot.lane.b32.xlu0 %v630, 88
    %v1047 = vpop.permute.xlu0 %1046
    %v1049 = vsel %vm637, %v1041, 0
    %v1052 = vsel %vm637, %v1043, 0
    %v1055 = vsel %vm637, %v1045, 0
    %v1058 = vsel %vm637, %v1047, 0
    %1060 = vmatprep.subr.bf16.mxu0 0
    %1061 = vmatpush1.bf16.xpose.msra.mxu0 %v1055
    %1062 = vmatprep.subr.bf16.mxu0 0
    %1063 = vmatpush1.bf16.xpose.msra.mxu0 %v1058
    %1064 = vmatprep.subr.bf16.mxu0 0
    %1065 = vmatpush1.bf16.xpose.msra.mxu0 0
    %1066 = vmatprep.subr.bf16.mxu0 0
    %1067 = vmatpush1.bf16.xpose.msra.mxu0 0
    %1068 = vmatprep.subr.bf16.mxu0 0
    %1069 = vmatpush1.bf16.xpose.msra.mxu0 0
    %1070 = vmatprep.subr.bf16.mxu0 0
    %1071 = vmatpush1.bf16.xpose.msra.mxu0 0
    %1072 = vmatprep.subr.bf16.mxu0 0
    %1073 = vmatpush1.bf16.xpose.msra.mxu0 0
    %1074 = vmatprep.subr.bf16.mxu0 0
    %1075 = vmatpush1.bf16.xpose.msra.mxu0 0
    %1076 = vmatprep.subr.bf16.mxu0 0
    %1077 = vmatpush1.bf16.xpose.msra.mxu0 0
    %1078 = vmatprep.subr.bf16.mxu0 0
    %1079 = vmatpush1.bf16.xpose.msra.mxu0 0
    %1080 = vmatprep.subr.bf16.mxu0 0
    %1081 = vmatpush1.bf16.xpose.msra.mxu0 0
    %1082 = vmatprep.subr.bf16.mxu0 0
    %1083 = vmatpush1.bf16.xpose.msra.mxu0 0
    %1084 = vmatprep.subr.bf16.mxu0 0
    %1085 = vmatpush1.bf16.xpose.msra.mxu0 0
    %1086 = vmatprep.subr.bf16.mxu0 0
    %1087 = vmatpush1.bf16.xpose.msra.mxu0 0
    %1088 = vmatprep.subr.bf16.mxu0 0
    %1089 = vmatpush1.bf16.xpose.msra.mxu0 0
    %1090 = vmatprep.subr.bf16.mxu0 0
    %1091 = vmatpush1.bf16.xpose.msra.mxu0 0
    %1092 = vmatprep.mubr.bf16.mxu0 0
    %1093 = vmatmul.mubr.bf16.gmra.mrb[0].mxu0 %v1049
    %v1094 = vpop.f32.mrb[0].mxu0
    %v1095 = vadd.f32 0.0, %v1094
    %v1096 = vpop.f32.mrb[0].mxu0
    %v1097 = vpop.f32.mrb[0].mxu0
    %v1098 = vadd.f32 0.0, %v1097
    %v1099 = vpop.f32.mrb[0].mxu0
    %1100 = vmatprep.mubr.bf16.mxu0 0
    %1101 = vmatmul.mubr.bf16.gmra.mrb[0].mxu0 %v1052
    %v1102 = vpop.f32.mrb[0].mxu0
    %v1103 = vadd.f32 0.0, %v1102
    %v1104 = vpop.f32.mrb[0].mxu0
    %v1105 = vpop.f32.mrb[0].mxu0
    %v1106 = vpop.f32.mrb[0].mxu0
    %1107 = vdwg.mxu0
    %v1108 = vmul.f32 %v1027, 0.35355338
    %v1109 = vmul.f32 %v1030, 0.35355338
    %v1110 = vmul.f32 %v1035, 0.35355338
    %v1111 = vmul.f32 %v1095, 0.35355338
    %v1112 = vmul.f32 %v1098, 0.35355338
    %v1113 = vmul.f32 %v1103, 0.35355338
    %v1114 = vadd.f32 %v1108, %v437
    %v1115 = vadd.f32 %v1109, %v437
    %v1116 = vadd.f32 %v1110, %v437
    %v1117 = vadd.f32 %v1111, %v437
    %v1118 = vadd.f32 %v1112, %v437
    %v1119 = vadd.f32 %v1113, %v437
    %v1120 = vsel %vm776, %v1114, -inf
    %1121 = vmax.xlane.f32.xlu0 %v1120
    %v1122 = vpop.xlane.xlu0 %1121
    %v1123 = vsel %vm776, %v1115, -inf
    %1124 = vmax.xlane.f32.xlu0 %v1123
    %v1125 = vpop.xlane.xlu0 %1124
    %v1126 = vsel %vm776, %v1116, -inf
    %1127 = vmax.xlane.f32.xlu0 %v1126
    %v1128 = vpop.xlane.xlu0 %1127
    %v1129 = vsel %vm776, %v1117, -inf
    %1130 = vmax.xlane.f32.xlu0 %v1129
    %v1131 = vpop.xlane.xlu0 %1130
    %v1132 = vsel %vm776, %v1118, -inf
    %1133 = vmax.xlane.f32.xlu0 %v1132
    %v1134 = vpop.xlane.xlu0 %1133
    %v1135 = vsel %vm776, %v1119, -inf
    %1136 = vmax.xlane.f32.xlu0 %v1135
    %v1137 = vpop.xlane.xlu0 %1136
    %v1138 = vsub.f32 %v1114, %v1122
    %v1139 = vsub.f32 %v1115, %v1125
    %v1140 = vsub.f32 %v1116, %v1128
    %v1141 = vsub.f32 %v1117, %v1131
    %v1142 = vsub.f32 %v1118, %v1134
    %v1143 = vsub.f32 %v1119, %v1137
    %v1144 = vmul.f32 %v1138, 1.442695
    %v1145 = vpow.pop %v1144
    %v1146 = vmul.f32 %v1139, 1.442695
    %v1147 = vpow.pop %v1146
    %v1148 = vmul.f32 %v1140, 1.442695
    %v1149 = vpow.pop %v1148
    %v1150 = vmul.f32 %v1141, 1.442695
    %v1151 = vpow.pop %v1150
    %v1152 = vmul.f32 %v1142, 1.442695
    %v1153 = vpow.pop %v1152
    %v1154 = vmul.f32 %v1143, 1.442695
    %v1155 = vpow.pop %v1154
    %v1156 = vsel %vm776, %v1145, 0.0
    %1157 = vadd.xlane.f32.xlu0 %v1156
    %v1158 = vpop.xlane.xlu0 %1157
    %v1159 = vsel %vm776, %v1147, 0.0
    %1160 = vadd.xlane.f32.xlu0 %v1159
    %v1161 = vpop.xlane.xlu0 %1160
    %v1162 = vsel %vm776, %v1149, 0.0
    %1163 = vadd.xlane.f32.xlu0 %v1162
    %v1164 = vpop.xlane.xlu0 %1163
    %v1165 = vsel %vm776, %v1151, 0.0
    %1166 = vadd.xlane.f32.xlu0 %v1165
    %v1167 = vpop.xlane.xlu0 %1166
    %v1168 = vsel %vm776, %v1153, 0.0
    %1169 = vadd.xlane.f32.xlu0 %v1168
    %v1170 = vpop.xlane.xlu0 %1169
    %v1171 = vsel %vm776, %v1155, 0.0
    %1172 = vadd.xlane.f32.xlu0 %v1171
    %v1173 = vpop.xlane.xlu0 %1172
    %v1174 = vrcp.pop %v1158
    %v1175 = vrcp.pop %v1161
    %v1176 = vrcp.pop %v1164
    %v1177 = vrcp.pop %v1167
    %v1178 = vrcp.pop %v1170
    %v1179 = vrcp.pop %v1173
    %v1180 = vmul.f32 %v1145, %v1174
    %v1181 = vmul.f32 %v1147, %v1175
    %v1182 = vmul.f32 %v1149, %v1176
    %v1183 = vmul.f32 %v1151, %v1177
    %v1184 = vmul.f32 %v1153, %v1178
    %v1185 = vmul.f32 %v1155, %v1179
    %v1186 = vpack.c.bf16 %v1181, %v1180
    %v1187 = vpack.c.bf16 %v1182, %v1182
    %v1188 = vpack.c.bf16 %v1184, %v1183
    %v1189 = vpack.c.bf16 %v1185, %v1185
    %1190 = vrot.lane.b32.xlu0 %v627, 56
    %v1191 = vpop.permute.xlu0 %1190
    %1192 = vrot.lane.b32.xlu0 %v628, 56
    %v1193 = vpop.permute.xlu0 %1192
    %v1196 = vsel %vm776, %v1186, 0
    %v1199 = vsel %vm776, %v1187, 0
    %v1202 = vsel %vm858, %v1193, 0
    %1204 = vmatprep.subr.bf16.mxu0 0
    %1205 = vmatpush1.bf16.msra.mxu0 %v1191
    %1206 = vmatprep.subr.bf16.mxu0 0
    %1207 = vmatpush1.bf16.msra.mxu0 %v1202
    %1208 = vmatprep.subr.bf16.mxu0 0
    %1209 = vmatpush1.bf16.msra.mxu0 0
    %1210 = vmatprep.subr.bf16.mxu0 0
    %1211 = vmatpush1.bf16.msra.mxu0 0
    %1212 = vmatprep.subr.bf16.mxu0 0
    %1213 = vmatpush1.bf16.msra.mxu0 0
    %1214 = vmatprep.subr.bf16.mxu0 0
    %1215 = vmatpush1.bf16.msra.mxu0 0
    %1216 = vmatprep.subr.bf16.mxu0 0
    %1217 = vmatpush1.bf16.msra.mxu0 0
    %1218 = vmatprep.subr.bf16.mxu0 0
    %1219 = vmatpush1.bf16.msra.mxu0 0
    %1220 = vmatprep.subr.bf16.mxu0 0
    %1221 = vmatpush1.bf16.msra.mxu0 0
    %1222 = vmatprep.subr.bf16.mxu0 0
    %1223 = vmatpush1.bf16.msra.mxu0 0
    %1224 = vmatprep.subr.bf16.mxu0 0
    %1225 = vmatpush1.bf16.msra.mxu0 0
    %1226 = vmatprep.subr.bf16.mxu0 0
    %1227 = vmatpush1.bf16.msra.mxu0 0
    %1228 = vmatprep.subr.bf16.mxu0 0
    %1229 = vmatpush1.bf16.msra.mxu0 0
    %1230 = vmatprep.subr.bf16.mxu0 0
    %1231 = vmatpush1.bf16.msra.mxu0 0
    %1232 = vmatprep.subr.bf16.mxu0 0
    %1233 = vmatpush1.bf16.msra.mxu0 0
    %1234 = vmatprep.subr.bf16.mxu0 0
    %1235 = vmatpush1.bf16.msra.mxu0 0
    %1236 = vmatprep.mubr.bf16.mxu0 0
    %1237 = vmatmul.mubr.bf16.gmra.mrb[0].mxu0 %v1196
    %v1238 = vpop.f32.mrb[0].mxu0
    %v1239 = vadd.f32 0.0, %v1238
    %v1240 = vpop.f32.mrb[0].mxu0
    %v1241 = vpop.f32.mrb[0].mxu0
    %v1242 = vadd.f32 0.0, %v1241
    %v1243 = vpop.f32.mrb[0].mxu0
    %1244 = vmatprep.mubr.bf16.mxu0 0
    %1245 = vmatmul.mubr.bf16.gmra.mrb[0].mxu0 %v1199
    %v1246 = vpop.f32.mrb[0].mxu0
    %v1247 = vadd.f32 0.0, %v1246
    %v1248 = vpop.f32.mrb[0].mxu0
    %v1249 = vpop.f32.mrb[0].mxu0
    %v1250 = vpop.f32.mrb[0].mxu0
    %1251 = vdwg.mxu0
    %1252 = vrot.lane.b32.xlu0 %v629, 56
    %v1253 = vpop.permute.xlu0 %1252
    %1254 = vrot.lane.b32.xlu0 %v630, 56
    %v1255 = vpop.permute.xlu0 %1254
    %v1258 = vsel %vm776, %v1188, 0
    %v1261 = vsel %vm776, %v1189, 0
    %v1264 = vsel %vm858, %v1255, 0
    %1266 = vmatprep.subr.bf16.mxu0 0
    %1267 = vmatpush1.bf16.msra.mxu0 %v1253
    %1268 = vmatprep.subr.bf16.mxu0 0
    %1269 = vmatpush1.bf16.msra.mxu0 %v1264
    %1270 = vmatprep.subr.bf16.mxu0 0
    %1271 = vmatpush1.bf16.msra.mxu0 0
    %1272 = vmatprep.subr.bf16.mxu0 0
    %1273 = vmatpush1.bf16.msra.mxu0 0
    %1274 = vmatprep.subr.bf16.mxu0 0
    %1275 = vmatpush1.bf16.msra.mxu0 0
    %1276 = vmatprep.subr.bf16.mxu0 0
    %1277 = vmatpush1.bf16.msra.mxu0 0
    %1278 = vmatprep.subr.bf16.mxu0 0
    %1279 = vmatpush1.bf16.msra.mxu0 0
    %1280 = vmatprep.subr.bf16.mxu0 0
    %1281 = vmatpush1.bf16.msra.mxu0 0
    %1282 = vmatprep.subr.bf16.mxu0 0
    %1283 = vmatpush1.bf16.msra.mxu0 0
    %1284 = vmatprep.subr.bf16.mxu0 0
    %1285 = vmatpush1.bf16.msra.mxu0 0
    %1286 = vmatprep.subr.bf16.mxu0 0
    %1287 = vmatpush1.bf16.msra.mxu0 0
    %1288 = vmatprep.subr.bf16.mxu0 0
    %1289 = vmatpush1.bf16.msra.mxu0 0
    %1290 = vmatprep.subr.bf16.mxu0 0
    %1291 = vmatpush1.bf16.msra.mxu0 0
    %1292 = vmatprep.subr.bf16.mxu0 0
    %1293 = vmatpush1.bf16.msra.mxu0 0
    %1294 = vmatprep.subr.bf16.mxu0 0
    %1295 = vmatpush1.bf16.msra.mxu0 0
    %1296 = vmatprep.subr.bf16.mxu0 0
    %1297 = vmatpush1.bf16.msra.mxu0 0
    %1298 = vmatprep.mubr.bf16.mxu0 0
    %1299 = vmatmul.mubr.bf16.gmra.mrb[0].mxu0 %v1258
    %v1300 = vpop.f32.mrb[0].mxu0
    %v1301 = vadd.f32 0.0, %v1300
    %v1302 = vpop.f32.mrb[0].mxu0
    %v1303 = vpop.f32.mrb[0].mxu0
    %v1304 = vadd.f32 0.0, %v1303
    %v1305 = vpop.f32.mrb[0].mxu0
    %1306 = vmatprep.mubr.bf16.mxu0 0
    %1307 = vmatmul.mubr.bf16.gmra.mrb[0].mxu0 %v1261
    %v1308 = vpop.f32.mrb[0].mxu0
    %v1309 = vadd.f32 0.0, %v1308
    %v1310 = vpop.f32.mrb[0].mxu0
    %v1311 = vpop.f32.mrb[0].mxu0
    %v1312 = vpop.f32.mrb[0].mxu0
    %1313 = vdwg.mxu0
    %1314 = vrot.lane.b32.xlu0 %v627, 112
    %v1315 = vpop.permute.xlu0 %1314
    %1316 = vrot.lane.b32.xlu0 %v628, 112
    %v1317 = vpop.permute.xlu0 %1316
    %1318 = vrot.lane.b32.xlu0 %v627, 80
    %v1319 = vpop.permute.xlu0 %1318
    %1320 = vrot.lane.b32.xlu0 %v628, 80
    %v1321 = vpop.permute.xlu0 %1320
    %v1323 = vsel %vm637, %v1315, 0
    %v1326 = vsel %vm637, %v1317, 0
    %v1329 = vsel %vm637, %v1319, 0
    %v1332 = vsel %vm637, %v1321, 0
    %1334 = vmatprep.subr.bf16.mxu0 0
    %1335 = vmatpush1.bf16.xpose.msra.mxu0 %v1329
    %1336 = vmatprep.subr.bf16.mxu0 0
    %1337 = vmatpush1.bf16.xpose.msra.mxu0 %v1332
    %1338 = vmatprep.subr.bf16.mxu0 0
    %1339 = vmatpush1.bf16.xpose.msra.mxu0 0
    %1340 = vmatprep.subr.bf16.mxu0 0
    %1341 = vmatpush1.bf16.xpose.msra.mxu0 0
    %1342 = vmatprep.subr.bf16.mxu0 0
    %1343 = vmatpush1.bf16.xpose.msra.mxu0 0
    %1344 = vmatprep.subr.bf16.mxu0 0
    %1345 = vmatpush1.bf16.xpose.msra.mxu0 0
    %1346 = vmatprep.subr.bf16.mxu0 0
    %1347 = vmatpush1.bf16.xpose.msra.mxu0 0
    %1348 = vmatprep.subr.bf16.mxu0 0
    %1349 = vmatpush1.bf16.xpose.msra.mxu0 0
    %1350 = vmatprep.subr.bf16.mxu0 0
    %1351 = vmatpush1.bf16.xpose.msra.mxu0 0
    %1352 = vmatprep.subr.bf16.mxu0 0
    %1353 = vmatpush1.bf16.xpose.msra.mxu0 0
    %1354 = vmatprep.subr.bf16.mxu0 0
    %1355 = vmatpush1.bf16.xpose.msra.mxu0 0
    %1356 = vmatprep.subr.bf16.mxu0 0
    %1357 = vmatpush1.bf16.xpose.msra.mxu0 0
    %1358 = vmatprep.subr.bf16.mxu0 0
    %1359 = vmatpush1.bf16.xpose.msra.mxu0 0
    %1360 = vmatprep.subr.bf16.mxu0 0
    %1361 = vmatpush1.bf16.xpose.msra.mxu0 0
    %1362 = vmatprep.subr.bf16.mxu0 0
    %1363 = vmatpush1.bf16.xpose.msra.mxu0 0
    %1364 = vmatprep.subr.bf16.mxu0 0
    %1365 = vmatpush1.bf16.xpose.msra.mxu0 0
    %1366 = vmatprep.mubr.bf16.mxu0 0
    %1367 = vmatmul.mubr.bf16.gmra.mrb[0].mxu0 %v1323
    %v1368 = vpop.f32.mrb[0].mxu0
    %v1369 = vadd.f32 0.0, %v1368
    %v1370 = vpop.f32.mrb[0].mxu0
    %v1371 = vpop.f32.mrb[0].mxu0
    %v1372 = vadd.f32 0.0, %v1371
    %v1373 = vpop.f32.mrb[0].mxu0
    %1374 = vmatprep.mubr.bf16.mxu0 0
    %1375 = vmatmul.mubr.bf16.gmra.mrb[0].mxu0 %v1326
    %v1376 = vpop.f32.mrb[0].mxu0
    %v1377 = vadd.f32 0.0, %v1376
    %v1378 = vpop.f32.mrb[0].mxu0
    %v1379 = vpop.f32.mrb[0].mxu0
    %v1380 = vpop.f32.mrb[0].mxu0
    %1381 = vdwg.mxu0
    %1382 = vrot.lane.b32.xlu0 %v629, 112
    %v1383 = vpop.permute.xlu0 %1382
    %1384 = vrot.lane.b32.xlu0 %v630, 112
    %v1385 = vpop.permute.xlu0 %1384
    %1386 = vrot.lane.b32.xlu0 %v629, 80
    %v1387 = vpop.permute.xlu0 %1386
    %1388 = vrot.lane.b32.xlu0 %v630, 80
    %v1389 = vpop.permute.xlu0 %1388
    %v1391 = vsel %vm637, %v1383, 0
    %v1394 = vsel %vm637, %v1385, 0
    %v1397 = vsel %vm637, %v1387, 0
    %v1400 = vsel %vm637, %v1389, 0
    %1402 = vmatprep.subr.bf16.mxu0 0
    %1403 = vmatpush1.bf16.xpose.msra.mxu0 %v1397
    %1404 = vmatprep.subr.bf16.mxu0 0
    %1405 = vmatpush1.bf16.xpose.msra.mxu0 %v1400
    %1406 = vmatprep.subr.bf16.mxu0 0
    %1407 = vmatpush1.bf16.xpose.msra.mxu0 0
    %1408 = vmatprep.subr.bf16.mxu0 0
    %1409 = vmatpush1.bf16.xpose.msra.mxu0 0
    %1410 = vmatprep.subr.bf16.mxu0 0
    %1411 = vmatpush1.bf16.xpose.msra.mxu0 0
    %1412 = vmatprep.subr.bf16.mxu0 0
    %1413 = vmatpush1.bf16.xpose.msra.mxu0 0
    %1414 = vmatprep.subr.bf16.mxu0 0
    %1415 = vmatpush1.bf16.xpose.msra.mxu0 0
    %1416 = vmatprep.subr.bf16.mxu0 0
    %1417 = vmatpush1.bf16.xpose.msra.mxu0 0
    %1418 = vmatprep.subr.bf16.mxu0 0
    %1419 = vmatpush1.bf16.xpose.msra.mxu0 0
    %1420 = vmatprep.subr.bf16.mxu0 0
    %1421 = vmatpush1.bf16.xpose.msra.mxu0 0
    %1422 = vmatprep.subr.bf16.mxu0 0
    %1423 = vmatpush1.bf16.xpose.msra.mxu0 0
    %1424 = vmatprep.subr.bf16.mxu0 0
    %1425 = vmatpush1.bf16.xpose.msra.mxu0 0
    %1426 = vmatprep.subr.bf16.mxu0 0
    %1427 = vmatpush1.bf16.xpose.msra.mxu0 0
    %1428 = vmatprep.subr.bf16.mxu0 0
    %1429 = vmatpush1.bf16.xpose.msra.mxu0 0
    %1430 = vmatprep.subr.bf16.mxu0 0
    %1431 = vmatpush1.bf16.xpose.msra.mxu0 0
    %1432 = vmatprep.subr.bf16.mxu0 0
    %1433 = vmatpush1.bf16.xpose.msra.mxu0 0
    %1434 = vmatprep.mubr.bf16.mxu0 0
    %1435 = vmatmul.mubr.bf16.gmra.mrb[0].mxu0 %v1391
    %v1436 = vpop.f32.mrb[0].mxu0
    %v1437 = vadd.f32 0.0, %v1436
    %v1438 = vpop.f32.mrb[0].mxu0
    %v1439 = vpop.f32.mrb[0].mxu0
    %v1440 = vadd.f32 0.0, %v1439
    %v1441 = vpop.f32.mrb[0].mxu0
    %1442 = vmatprep.mubr.bf16.mxu0 0
    %1443 = vmatmul.mubr.bf16.gmra.mrb[0].mxu0 %v1394
    %v1444 = vpop.f32.mrb[0].mxu0
    %v1445 = vadd.f32 0.0, %v1444
    %v1446 = vpop.f32.mrb[0].mxu0
    %v1447 = vpop.f32.mrb[0].mxu0
    %v1448 = vpop.f32.mrb[0].mxu0
    %1449 = vdwg.mxu0
    %v1450 = vmul.f32 %v1369, 0.35355338
    %v1451 = vmul.f32 %v1372, 0.35355338
    %v1452 = vmul.f32 %v1377, 0.35355338
    %v1453 = vmul.f32 %v1437, 0.35355338
    %v1454 = vmul.f32 %v1440, 0.35355338
    %v1455 = vmul.f32 %v1445, 0.35355338
    %v1456 = vadd.f32 %v1450, %v437
    %v1457 = vadd.f32 %v1451, %v437
    %v1458 = vadd.f32 %v1452, %v437
    %v1459 = vadd.f32 %v1453, %v437
    %v1460 = vadd.f32 %v1454, %v437
    %v1461 = vadd.f32 %v1455, %v437
    %v1462 = vsel %vm776, %v1456, -inf
    %1463 = vmax.xlane.f32.xlu0 %v1462
    %v1464 = vpop.xlane.xlu0 %1463
    %v1465 = vsel %vm776, %v1457, -inf
    %1466 = vmax.xlane.f32.xlu0 %v1465
    %v1467 = vpop.xlane.xlu0 %1466
    %v1468 = vsel %vm776, %v1458, -inf
    %1469 = vmax.xlane.f32.xlu0 %v1468
    %v1470 = vpop.xlane.xlu0 %1469
    %v1471 = vsel %vm776, %v1459, -inf
    %1472 = vmax.xlane.f32.xlu0 %v1471
    %v1473 = vpop.xlane.xlu0 %1472
    %v1474 = vsel %vm776, %v1460, -inf
    %1475 = vmax.xlane.f32.xlu0 %v1474
    %v1476 = vpop.xlane.xlu0 %1475
    %v1477 = vsel %vm776, %v1461, -inf
    %1478 = vmax.xlane.f32.xlu0 %v1477
    %v1479 = vpop.xlane.xlu0 %1478
    %v1480 = vsub.f32 %v1456, %v1464
    %v1481 = vsub.f32 %v1457, %v1467
    %v1482 = vsub.f32 %v1458, %v1470
    %v1483 = vsub.f32 %v1459, %v1473
    %v1484 = vsub.f32 %v1460, %v1476
    %v1485 = vsub.f32 %v1461, %v1479
    %v1486 = vmul.f32 %v1480, 1.442695
    %v1487 = vpow.pop %v1486
    %v1488 = vmul.f32 %v1481, 1.442695
    %v1489 = vpow.pop %v1488
    %v1490 = vmul.f32 %v1482, 1.442695
    %v1491 = vpow.pop %v1490
    %v1492 = vmul.f32 %v1483, 1.442695
    %v1493 = vpow.pop %v1492
    %v1494 = vmul.f32 %v1484, 1.442695
    %v1495 = vpow.pop %v1494
    %v1496 = vmul.f32 %v1485, 1.442695
    %v1497 = vpow.pop %v1496
    %v1498 = vsel %vm776, %v1487, 0.0
    %1499 = vadd.xlane.f32.xlu0 %v1498
    %v1500 = vpop.xlane.xlu0 %1499
    %v1501 = vsel %vm776, %v1489, 0.0
    %1502 = vadd.xlane.f32.xlu0 %v1501
    %v1503 = vpop.xlane.xlu0 %1502
    %v1504 = vsel %vm776, %v1491, 0.0
    %1505 = vadd.xlane.f32.xlu0 %v1504
    %v1506 = vpop.xlane.xlu0 %1505
    %v1507 = vsel %vm776, %v1493, 0.0
    %1508 = vadd.xlane.f32.xlu0 %v1507
    %v1509 = vpop.xlane.xlu0 %1508
    %v1510 = vsel %vm776, %v1495, 0.0
    %1511 = vadd.xlane.f32.xlu0 %v1510
    %v1512 = vpop.xlane.xlu0 %1511
    %v1513 = vsel %vm776, %v1497, 0.0
    %1514 = vadd.xlane.f32.xlu0 %v1513
    %v1515 = vpop.xlane.xlu0 %1514
    %v1516 = vrcp.pop %v1500
    %v1517 = vrcp.pop %v1503
    %v1518 = vrcp.pop %v1506
    %v1519 = vrcp.pop %v1509
    %v1520 = vrcp.pop %v1512
    %v1521 = vrcp.pop %v1515
    %v1522 = vmul.f32 %v1487, %v1516
    %v1523 = vmul.f32 %v1489, %v1517
    %v1524 = vmul.f32 %v1491, %v1518
    %v1525 = vmul.f32 %v1493, %v1519
    %v1526 = vmul.f32 %v1495, %v1520
    %v1527 = vmul.f32 %v1497, %v1521
    %v1528 = vpack.c.bf16 %v1523, %v1522
    %v1529 = vpack.c.bf16 %v1524, %v1524
    %v1530 = vpack.c.bf16 %v1526, %v1525
    %v1531 = vpack.c.bf16 %v1527, %v1527
    %1532 = vrot.lane.b32.xlu0 %v627, 48
    %v1533 = vpop.permute.xlu0 %1532
    %1534 = vrot.lane.b32.xlu0 %v628, 48
    %v1535 = vpop.permute.xlu0 %1534
    %v1538 = vsel %vm776, %v1528, 0
    %v1541 = vsel %vm776, %v1529, 0
    %v1544 = vsel %vm858, %v1535, 0
    %1546 = vmatprep.subr.bf16.mxu0 0
    %1547 = vmatpush1.bf16.msra.mxu0 %v1533
    %1548 = vmatprep.subr.bf16.mxu0 0
    %1549 = vmatpush1.bf16.msra.mxu0 %v1544
    %1550 = vmatprep.subr.bf16.mxu0 0
    %1551 = vmatpush1.bf16.msra.mxu0 0
    %1552 = vmatprep.subr.bf16.mxu0 0
    %1553 = vmatpush1.bf16.msra.mxu0 0
    %1554 = vmatprep.subr.bf16.mxu0 0
    %1555 = vmatpush1.bf16.msra.mxu0 0
    %1556 = vmatprep.subr.bf16.mxu0 0
    %1557 = vmatpush1.bf16.msra.mxu0 0
    %1558 = vmatprep.subr.bf16.mxu0 0
    %1559 = vmatpush1.bf16.msra.mxu0 0
    %1560 = vmatprep.subr.bf16.mxu0 0
    %1561 = vmatpush1.bf16.msra.mxu0 0
    %1562 = vmatprep.subr.bf16.mxu0 0
    %1563 = vmatpush1.bf16.msra.mxu0 0
    %1564 = vmatprep.subr.bf16.mxu0 0
    %1565 = vmatpush1.bf16.msra.mxu0 0
    %1566 = vmatprep.subr.bf16.mxu0 0
    %1567 = vmatpush1.bf16.msra.mxu0 0
    %1568 = vmatprep.subr.bf16.mxu0 0
    %1569 = vmatpush1.bf16.msra.mxu0 0
    %1570 = vmatprep.subr.bf16.mxu0 0
    %1571 = vmatpush1.bf16.msra.mxu0 0
    %1572 = vmatprep.subr.bf16.mxu0 0
    %1573 = vmatpush1.bf16.msra.mxu0 0
    %1574 = vmatprep.subr.bf16.mxu0 0
    %1575 = vmatpush1.bf16.msra.mxu0 0
    %1576 = vmatprep.subr.bf16.mxu0 0
    %1577 = vmatpush1.bf16.msra.mxu0 0
    %1578 = vmatprep.mubr.bf16.mxu0 0
    %1579 = vmatmul.mubr.bf16.gmra.mrb[0].mxu0 %v1538
    %v1580 = vpop.f32.mrb[0].mxu0
    %v1581 = vadd.f32 0.0, %v1580
    %v1582 = vpop.f32.mrb[0].mxu0
    %v1583 = vpop.f32.mrb[0].mxu0
    %v1584 = vadd.f32 0.0, %v1583
    %v1585 = vpop.f32.mrb[0].mxu0
    %1586 = vmatprep.mubr.bf16.mxu0 0
    %1587 = vmatmul.mubr.bf16.gmra.mrb[0].mxu0 %v1541
    %v1588 = vpop.f32.mrb[0].mxu0
    %v1589 = vadd.f32 0.0, %v1588
    %v1590 = vpop.f32.mrb[0].mxu0
    %v1591 = vpop.f32.mrb[0].mxu0
    %v1592 = vpop.f32.mrb[0].mxu0
    %1593 = vdwg.mxu0
    %1594 = vrot.lane.b32.xlu0 %v629, 48
    %v1595 = vpop.permute.xlu0 %1594
    %1596 = vrot.lane.b32.xlu0 %v630, 48
    %v1597 = vpop.permute.xlu0 %1596
    %v1600 = vsel %vm776, %v1530, 0
    %v1603 = vsel %vm776, %v1531, 0
    %v1606 = vsel %vm858, %v1597, 0
    %1608 = vmatprep.subr.bf16.mxu0 0
    %1609 = vmatpush1.bf16.msra.mxu0 %v1595
    %1610 = vmatprep.subr.bf16.mxu0 0
    %1611 = vmatpush1.bf16.msra.mxu0 %v1606
    %1612 = vmatprep.subr.bf16.mxu0 0
    %1613 = vmatpush1.bf16.msra.mxu0 0
    %1614 = vmatprep.subr.bf16.mxu0 0
    %1615 = vmatpush1.bf16.msra.mxu0 0
    %1616 = vmatprep.subr.bf16.mxu0 0
    %1617 = vmatpush1.bf16.msra.mxu0 0
    %1618 = vmatprep.subr.bf16.mxu0 0
    %1619 = vmatpush1.bf16.msra.mxu0 0
    %1620 = vmatprep.subr.bf16.mxu0 0
    %1621 = vmatpush1.bf16.msra.mxu0 0
    %1622 = vmatprep.subr.bf16.mxu0 0
    %1623 = vmatpush1.bf16.msra.mxu0 0
    %1624 = vmatprep.subr.bf16.mxu0 0
    %1625 = vmatpush1.bf16.msra.mxu0 0
    %1626 = vmatprep.subr.bf16.mxu0 0
    %1627 = vmatpush1.bf16.msra.mxu0 0
    %1628 = vmatprep.subr.bf16.mxu0 0
    %1629 = vmatpush1.bf16.msra.mxu0 0
    %1630 = vmatprep.subr.bf16.mxu0 0
    %1631 = vmatpush1.bf16.msra.mxu0 0
    %1632 = vmatprep.subr.bf16.mxu0 0
    %1633 = vmatpush1.bf16.msra.mxu0 0
    %1634 = vmatprep.subr.bf16.mxu0 0
    %1635 = vmatpush1.bf16.msra.mxu0 0
    %1636 = vmatprep.subr.bf16.mxu0 0
    %1637 = vmatpush1.bf16.msra.mxu0 0
    %1638 = vmatprep.subr.bf16.mxu0 0
    %1639 = vmatpush1.bf16.msra.mxu0 0
    %1640 = vmatprep.mubr.bf16.mxu0 0
    %1641 = vmatmul.mubr.bf16.gmra.mrb[0].mxu0 %v1600
    %v1642 = vpop.f32.mrb[0].mxu0
    %v1643 = vadd.f32 0.0, %v1642
    %v1644 = vpop.f32.mrb[0].mxu0
    %v1645 = vpop.f32.mrb[0].mxu0
    %v1646 = vadd.f32 0.0, %v1645
    %v1647 = vpop.f32.mrb[0].mxu0
    %1648 = vmatprep.mubr.bf16.mxu0 0
    %1649 = vmatmul.mubr.bf16.gmra.mrb[0].mxu0 %v1603
    %v1650 = vpop.f32.mrb[0].mxu0
    %v1651 = vadd.f32 0.0, %v1650
    %v1652 = vpop.f32.mrb[0].mxu0
    %v1653 = vpop.f32.mrb[0].mxu0
    %v1654 = vpop.f32.mrb[0].mxu0
    %1655 = vdwg.mxu0
    %1656 = vrot.lane.b32.xlu0 %v627, 104
    %v1657 = vpop.permute.xlu0 %1656
    %1658 = vrot.lane.b32.xlu0 %v628, 104
    %v1659 = vpop.permute.xlu0 %1658
    %1660 = vrot.lane.b32.xlu0 %v627, 72
    %v1661 = vpop.permute.xlu0 %1660
    %1662 = vrot.lane.b32.xlu0 %v628, 72
    %v1663 = vpop.permute.xlu0 %1662
    %v1665 = vsel %vm637, %v1657, 0
    %v1668 = vsel %vm637, %v1659, 0
    %v1671 = vsel %vm637, %v1661, 0
    %v1674 = vsel %vm637, %v1663, 0
    %1676 = vmatprep.subr.bf16.mxu0 0
    %1677 = vmatpush1.bf16.xpose.msra.mxu0 %v1671
    %1678 = vmatprep.subr.bf16.mxu0 0
    %1679 = vmatpush1.bf16.xpose.msra.mxu0 %v1674
    %1680 = vmatprep.subr.bf16.mxu0 0
    %1681 = vmatpush1.bf16.xpose.msra.mxu0 0
    %1682 = vmatprep.subr.bf16.mxu0 0
    %1683 = vmatpush1.bf16.xpose.msra.mxu0 0
    %1684 = vmatprep.subr.bf16.mxu0 0
    %1685 = vmatpush1.bf16.xpose.msra.mxu0 0
    %1686 = vmatprep.subr.bf16.mxu0 0
    %1687 = vmatpush1.bf16.xpose.msra.mxu0 0
    %1688 = vmatprep.subr.bf16.mxu0 0
    %1689 = vmatpush1.bf16.xpose.msra.mxu0 0
    %1690 = vmatprep.subr.bf16.mxu0 0
    %1691 = vmatpush1.bf16.xpose.msra.mxu0 0
    %1692 = vmatprep.subr.bf16.mxu0 0
    %1693 = vmatpush1.bf16.xpose.msra.mxu0 0
    %1694 = vmatprep.subr.bf16.mxu0 0
    %1695 = vmatpush1.bf16.xpose.msra.mxu0 0
    %1696 = vmatprep.subr.bf16.mxu0 0
    %1697 = vmatpush1.bf16.xpose.msra.mxu0 0
    %1698 = vmatprep.subr.bf16.mxu0 0
    %1699 = vmatpush1.bf16.xpose.msra.mxu0 0
    %1700 = vmatprep.subr.bf16.mxu0 0
    %1701 = vmatpush1.bf16.xpose.msra.mxu0 0
    %1702 = vmatprep.subr.bf16.mxu0 0
    %1703 = vmatpush1.bf16.xpose.msra.mxu0 0
    %1704 = vmatprep.subr.bf16.mxu0 0
    %1705 = vmatpush1.bf16.xpose.msra.mxu0 0
    %1706 = vmatprep.subr.bf16.mxu0 0
    %1707 = vmatpush1.bf16.xpose.msra.mxu0 0
    %1708 = vmatprep.mubr.bf16.mxu0 0
    %1709 = vmatmul.mubr.bf16.gmra.mrb[0].mxu0 %v1665
    %v1710 = vpop.f32.mrb[0].mxu0
    %v1711 = vadd.f32 0.0, %v1710
    %v1712 = vpop.f32.mrb[0].mxu0
    %v1713 = vpop.f32.mrb[0].mxu0
    %v1714 = vadd.f32 0.0, %v1713
    %v1715 = vpop.f32.mrb[0].mxu0
    %1716 = vmatprep.mubr.bf16.mxu0 0
    %1717 = vmatmul.mubr.bf16.gmra.mrb[0].mxu0 %v1668
    %v1718 = vpop.f32.mrb[0].mxu0
    %v1719 = vadd.f32 0.0, %v1718
    %v1720 = vpop.f32.mrb[0].mxu0
    %v1721 = vpop.f32.mrb[0].mxu0
    %v1722 = vpop.f32.mrb[0].mxu0
    %1723 = vdwg.mxu0
    %1724 = vrot.lane.b32.xlu0 %v629, 104
    %v1725 = vpop.permute.xlu0 %1724
    %1726 = vrot.lane.b32.xlu0 %v630, 104
    %v1727 = vpop.permute.xlu0 %1726
    %1728 = vrot.lane.b32.xlu0 %v629, 72
    %v1729 = vpop.permute.xlu0 %1728
    %1730 = vrot.lane.b32.xlu0 %v630, 72
    %v1731 = vpop.permute.xlu0 %1730
    %v1733 = vsel %vm637, %v1725, 0
    %v1736 = vsel %vm637, %v1727, 0
    %v1739 = vsel %vm637, %v1729, 0
    %v1742 = vsel %vm637, %v1731, 0
    %1744 = vmatprep.subr.bf16.mxu0 0
    %1745 = vmatpush1.bf16.xpose.msra.mxu0 %v1739
    %1746 = vmatprep.subr.bf16.mxu0 0
    %1747 = vmatpush1.bf16.xpose.msra.mxu0 %v1742
    %1748 = vmatprep.subr.bf16.mxu0 0
    %1749 = vmatpush1.bf16.xpose.msra.mxu0 0
    %1750 = vmatprep.subr.bf16.mxu0 0
    %1751 = vmatpush1.bf16.xpose.msra.mxu0 0
    %1752 = vmatprep.subr.bf16.mxu0 0
    %1753 = vmatpush1.bf16.xpose.msra.mxu0 0
    %1754 = vmatprep.subr.bf16.mxu0 0
    %1755 = vmatpush1.bf16.xpose.msra.mxu0 0
    %1756 = vmatprep.subr.bf16.mxu0 0
    %1757 = vmatpush1.bf16.xpose.msra.mxu0 0
    %1758 = vmatprep.subr.bf16.mxu0 0
    %1759 = vmatpush1.bf16.xpose.msra.mxu0 0
    %1760 = vmatprep.subr.bf16.mxu0 0
    %1761 = vmatpush1.bf16.xpose.msra.mxu0 0
    %1762 = vmatprep.subr.bf16.mxu0 0
    %1763 = vmatpush1.bf16.xpose.msra.mxu0 0
    %1764 = vmatprep.subr.bf16.mxu0 0
    %1765 = vmatpush1.bf16.xpose.msra.mxu0 0
    %1766 = vmatprep.subr.bf16.mxu0 0
    %1767 = vmatpush1.bf16.xpose.msra.mxu0 0
    %1768 = vmatprep.subr.bf16.mxu0 0
    %1769 = vmatpush1.bf16.xpose.msra.mxu0 0
    %1770 = vmatprep.subr.bf16.mxu0 0
    %1771 = vmatpush1.bf16.xpose.msra.mxu0 0
    %1772 = vmatprep.subr.bf16.mxu0 0
    %1773 = vmatpush1.bf16.xpose.msra.mxu0 0
    %1774 = vmatprep.subr.bf16.mxu0 0
    %1775 = vmatpush1.bf16.xpose.msra.mxu0 0
    %1776 = vmatprep.mubr.bf16.mxu0 0
    %1777 = vmatmul.mubr.bf16.gmra.mrb[0].mxu0 %v1733
    %v1778 = vpop.f32.mrb[0].mxu0
    %v1779 = vadd.f32 0.0, %v1778
    %v1780 = vpop.f32.mrb[0].mxu0
    %v1781 = vpop.f32.mrb[0].mxu0
    %v1782 = vadd.f32 0.0, %v1781
    %v1783 = vpop.f32.mrb[0].mxu0
    %1784 = vmatprep.mubr.bf16.mxu0 0
    %1785 = vmatmul.mubr.bf16.gmra.mrb[0].mxu0 %v1736
    %v1786 = vpop.f32.mrb[0].mxu0
    %v1787 = vadd.f32 0.0, %v1786
    %v1788 = vpop.f32.mrb[0].mxu0
    %v1789 = vpop.f32.mrb[0].mxu0
    %v1790 = vpop.f32.mrb[0].mxu0
    %1791 = vdwg.mxu0
    %v1792 = vmul.f32 %v1711, 0.35355338
    %v1793 = vmul.f32 %v1714, 0.35355338
    %v1794 = vmul.f32 %v1719, 0.35355338
    %v1795 = vmul.f32 %v1779, 0.35355338
    %v1796 = vmul.f32 %v1782, 0.35355338
    %v1797 = vmul.f32 %v1787, 0.35355338
    %v1798 = vadd.f32 %v1792, %v437
    %v1799 = vadd.f32 %v1793, %v437
    %v1800 = vadd.f32 %v1794, %v437
    %v1801 = vadd.f32 %v1795, %v437
    %v1802 = vadd.f32 %v1796, %v437
    %v1803 = vadd.f32 %v1797, %v437
    %v1804 = vsel %vm776, %v1798, -inf
    %1805 = vmax.xlane.f32.xlu0 %v1804
    %v1806 = vpop.xlane.xlu0 %1805
    %v1807 = vsel %vm776, %v1799, -inf
    %1808 = vmax.xlane.f32.xlu0 %v1807
    %v1809 = vpop.xlane.xlu0 %1808
    %v1810 = vsel %vm776, %v1800, -inf
    %1811 = vmax.xlane.f32.xlu0 %v1810
    %v1812 = vpop.xlane.xlu0 %1811
    %v1813 = vsel %vm776, %v1801, -inf
    %1814 = vmax.xlane.f32.xlu0 %v1813
    %v1815 = vpop.xlane.xlu0 %1814
    %v1816 = vsel %vm776, %v1802, -inf
    %1817 = vmax.xlane.f32.xlu0 %v1816
    %v1818 = vpop.xlane.xlu0 %1817
    %v1819 = vsel %vm776, %v1803, -inf
    %1820 = vmax.xlane.f32.xlu0 %v1819
    %v1821 = vpop.xlane.xlu0 %1820
    %v1822 = vsub.f32 %v1798, %v1806
    %v1823 = vsub.f32 %v1799, %v1809
    %v1824 = vsub.f32 %v1800, %v1812
    %v1825 = vsub.f32 %v1801, %v1815
    %v1826 = vsub.f32 %v1802, %v1818
    %v1827 = vsub.f32 %v1803, %v1821
    %v1828 = vmul.f32 %v1822, 1.442695
    %v1829 = vpow.pop %v1828
    %v1830 = vmul.f32 %v1823, 1.442695
    %v1831 = vpow.pop %v1830
    %v1832 = vmul.f32 %v1824, 1.442695
    %v1833 = vpow.pop %v1832
    %v1834 = vmul.f32 %v1825, 1.442695
    %v1835 = vpow.pop %v1834
    %v1836 = vmul.f32 %v1826, 1.442695
    %v1837 = vpow.pop %v1836
    %v1838 = vmul.f32 %v1827, 1.442695
    %v1839 = vpow.pop %v1838
    %v1840 = vsel %vm776, %v1829, 0.0
    %1841 = vadd.xlane.f32.xlu0 %v1840
    %v1842 = vpop.xlane.xlu0 %1841
    %v1843 = vsel %vm776, %v1831, 0.0
    %1844 = vadd.xlane.f32.xlu0 %v1843
    %v1845 = vpop.xlane.xlu0 %1844
    %v1846 = vsel %vm776, %v1833, 0.0
    %1847 = vadd.xlane.f32.xlu0 %v1846
    %v1848 = vpop.xlane.xlu0 %1847
    %v1849 = vsel %vm776, %v1835, 0.0
    %1850 = vadd.xlane.f32.xlu0 %v1849
    %v1851 = vpop.xlane.xlu0 %1850
    %v1852 = vsel %vm776, %v1837, 0.0
    %1853 = vadd.xlane.f32.xlu0 %v1852
    %v1854 = vpop.xlane.xlu0 %1853
    %v1855 = vsel %vm776, %v1839, 0.0
    %1856 = vadd.xlane.f32.xlu0 %v1855
    %v1857 = vpop.xlane.xlu0 %1856
    %v1858 = vrcp.pop %v1842
    %v1859 = vrcp.pop %v1845
    %v1860 = vrcp.pop %v1848
    %v1861 = vrcp.pop %v1851
    %v1862 = vrcp.pop %v1854
    %v1863 = vrcp.pop %v1857
    %v1864 = vmul.f32 %v1829, %v1858
    %v1865 = vmul.f32 %v1831, %v1859
    %v1866 = vmul.f32 %v1833, %v1860
    %v1867 = vmul.f32 %v1835, %v1861
    %v1868 = vmul.f32 %v1837, %v1862
    %v1869 = vmul.f32 %v1839, %v1863
    %v1870 = vpack.c.bf16 %v1865, %v1864
    %v1871 = vpack.c.bf16 %v1866, %v1866
    %v1872 = vpack.c.bf16 %v1868, %v1867
    %v1873 = vpack.c.bf16 %v1869, %v1869
    %1874 = vrot.lane.b32.xlu0 %v627, 40
    %v1875 = vpop.permute.xlu0 %1874
    %1876 = vrot.lane.b32.xlu0 %v628, 40
    %v1877 = vpop.permute.xlu0 %1876
    %v1880 = vsel %vm776, %v1870, 0
    %v1883 = vsel %vm776, %v1871, 0
    %v1886 = vsel %vm858, %v1877, 0
    %1888 = vmatprep.subr.bf16.mxu0 0
    %1889 = vmatpush1.bf16.msra.mxu0 %v1875
    %1890 = vmatprep.subr.bf16.mxu0 0
    %1891 = vmatpush1.bf16.msra.mxu0 %v1886
    %1892 = vmatprep.subr.bf16.mxu0 0
    %1893 = vmatpush1.bf16.msra.mxu0 0
    %1894 = vmatprep.subr.bf16.mxu0 0
    %1895 = vmatpush1.bf16.msra.mxu0 0
    %1896 = vmatprep.subr.bf16.mxu0 0
    %1897 = vmatpush1.bf16.msra.mxu0 0
    %1898 = vmatprep.subr.bf16.mxu0 0
    %1899 = vmatpush1.bf16.msra.mxu0 0
    %1900 = vmatprep.subr.bf16.mxu0 0
    %1901 = vmatpush1.bf16.msra.mxu0 0
    %1902 = vmatprep.subr.bf16.mxu0 0
    %1903 = vmatpush1.bf16.msra.mxu0 0
    %1904 = vmatprep.subr.bf16.mxu0 0
    %1905 = vmatpush1.bf16.msra.mxu0 0
    %1906 = vmatprep.subr.bf16.mxu0 0
    %1907 = vmatpush1.bf16.msra.mxu0 0
    %1908 = vmatprep.subr.bf16.mxu0 0
    %1909 = vmatpush1.bf16.msra.mxu0 0
    %1910 = vmatprep.subr.bf16.mxu0 0
    %1911 = vmatpush1.bf16.msra.mxu0 0
    %1912 = vmatprep.subr.bf16.mxu0 0
    %1913 = vmatpush1.bf16.msra.mxu0 0
    %1914 = vmatprep.subr.bf16.mxu0 0
    %1915 = vmatpush1.bf16.msra.mxu0 0
    %1916 = vmatprep.subr.bf16.mxu0 0
    %1917 = vmatpush1.bf16.msra.mxu0 0
    %1918 = vmatprep.subr.bf16.mxu0 0
    %1919 = vmatpush1.bf16.msra.mxu0 0
    %1920 = vmatprep.mubr.bf16.mxu0 0
    %1921 = vmatmul.mubr.bf16.gmra.mrb[0].mxu0 %v1880
    %v1922 = vpop.f32.mrb[0].mxu0
    %v1923 = vadd.f32 0.0, %v1922
    %v1924 = vpop.f32.mrb[0].mxu0
    %v1925 = vpop.f32.mrb[0].mxu0
    %v1926 = vadd.f32 0.0, %v1925
    %v1927 = vpop.f32.mrb[0].mxu0
    %1928 = vmatprep.mubr.bf16.mxu0 0
    %1929 = vmatmul.mubr.bf16.gmra.mrb[0].mxu0 %v1883
    %v1930 = vpop.f32.mrb[0].mxu0
    %v1931 = vadd.f32 0.0, %v1930
    %v1932 = vpop.f32.mrb[0].mxu0
    %v1933 = vpop.f32.mrb[0].mxu0
    %v1934 = vpop.f32.mrb[0].mxu0
    %1935 = vdwg.mxu0
    %1936 = vrot.lane.b32.xlu0 %v629, 40
    %v1937 = vpop.permute.xlu0 %1936
    %1938 = vrot.lane.b32.xlu0 %v630, 40
    %v1939 = vpop.permute.xlu0 %1938
    %v1942 = vsel %vm776, %v1872, 0
    %v1945 = vsel %vm776, %v1873, 0
    %v1948 = vsel %vm858, %v1939, 0
    %1950 = vmatprep.subr.bf16.mxu0 0
    %1951 = vmatpush1.bf16.msra.mxu0 %v1937
    %1952 = vmatprep.subr.bf16.mxu0 0
    %1953 = vmatpush1.bf16.msra.mxu0 %v1948
    %1954 = vmatprep.subr.bf16.mxu0 0
    %1955 = vmatpush1.bf16.msra.mxu0 0
    %1956 = vmatprep.subr.bf16.mxu0 0
    %1957 = vmatpush1.bf16.msra.mxu0 0
    %1958 = vmatprep.subr.bf16.mxu0 0
    %1959 = vmatpush1.bf16.msra.mxu0 0
    %1960 = vmatprep.subr.bf16.mxu0 0
    %1961 = vmatpush1.bf16.msra.mxu0 0
    %1962 = vmatprep.subr.bf16.mxu0 0
    %1963 = vmatpush1.bf16.msra.mxu0 0
    %1964 = vmatprep.subr.bf16.mxu0 0
    %1965 = vmatpush1.bf16.msra.mxu0 0
    %1966 = vmatprep.subr.bf16.mxu0 0
    %1967 = vmatpush1.bf16.msra.mxu0 0
    %1968 = vmatprep.subr.bf16.mxu0 0
    %1969 = vmatpush1.bf16.msra.mxu0 0
    %1970 = vmatprep.subr.bf16.mxu0 0
    %1971 = vmatpush1.bf16.msra.mxu0 0
    %1972 = vmatprep.subr.bf16.mxu0 0
    %1973 = vmatpush1.bf16.msra.mxu0 0
    %1974 = vmatprep.subr.bf16.mxu0 0
    %1975 = vmatpush1.bf16.msra.mxu0 0
    %1976 = vmatprep.subr.bf16.mxu0 0
    %1977 = vmatpush1.bf16.msra.mxu0 0
    %1978 = vmatprep.subr.bf16.mxu0 0
    %1979 = vmatpush1.bf16.msra.mxu0 0
    %1980 = vmatprep.subr.bf16.mxu0 0
    %1981 = vmatpush1.bf16.msra.mxu0 0
    %1982 = vmatprep.mubr.bf16.mxu0 0
    %1983 = vmatmul.mubr.bf16.gmra.mrb[0].mxu0 %v1942
    %v1984 = vpop.f32.mrb[0].mxu0
    %v1985 = vadd.f32 0.0, %v1984
    %v1986 = vpop.f32.mrb[0].mxu0
    %v1987 = vpop.f32.mrb[0].mxu0
    %v1988 = vadd.f32 0.0, %v1987
    %v1989 = vpop.f32.mrb[0].mxu0
    %1990 = vmatprep.mubr.bf16.mxu0 0
    %1991 = vmatmul.mubr.bf16.gmra.mrb[0].mxu0 %v1945
    %v1992 = vpop.f32.mrb[0].mxu0
    %v1993 = vadd.f32 0.0, %v1992
    %v1994 = vpop.f32.mrb[0].mxu0
    %v1995 = vpop.f32.mrb[0].mxu0
    %v1996 = vpop.f32.mrb[0].mxu0
    %1997 = vdwg.mxu0
    %2004 = vrot.lane.b32.xlu0 %v1239, 8
    %v2005 = vpop.permute.xlu0 %2004
    %2006 = vrot.lane.b32.xlu0 %v1242, 8
    %v2007 = vpop.permute.xlu0 %2006
    %2008 = vrot.lane.b32.xlu0 %v1247, 8
    %v2009 = vpop.permute.xlu0 %2008
    %2010 = vrot.lane.b32.xlu0 %v1301, 8
    %v2011 = vpop.permute.xlu0 %2010
    %2012 = vrot.lane.b32.xlu0 %v1304, 8
    %v2013 = vpop.permute.xlu0 %2012
    %2014 = vrot.lane.b32.xlu0 %v1309, 8
    %v2015 = vpop.permute.xlu0 %2014
    %2028 = vrot.lane.b32.xlu0 %v1581, 16
    %v2029 = vpop.permute.xlu0 %2028
    %2030 = vrot.lane.b32.xlu0 %v1584, 16
    %v2031 = vpop.permute.xlu0 %2030
    %2032 = vrot.lane.b32.xlu0 %v1589, 16
    %v2033 = vpop.permute.xlu0 %2032
    %2034 = vrot.lane.b32.xlu0 %v1643, 16
    %v2035 = vpop.permute.xlu0 %2034
    %2036 = vrot.lane.b32.xlu0 %v1646, 16
    %v2037 = vpop.permute.xlu0 %2036
    %2038 = vrot.lane.b32.xlu0 %v1651, 16
    %v2039 = vpop.permute.xlu0 %2038
    %2052 = vrot.lane.b32.xlu0 %v1923, 24
    %v2053 = vpop.permute.xlu0 %2052
    %2054 = vrot.lane.b32.xlu0 %v1926, 24
    %v2055 = vpop.permute.xlu0 %2054
    %2056 = vrot.lane.b32.xlu0 %v1931, 24
    %v2057 = vpop.permute.xlu0 %2056
    %2058 = vrot.lane.b32.xlu0 %v1985, 24
    %v2059 = vpop.permute.xlu0 %2058
    %2060 = vrot.lane.b32.xlu0 %v1988, 24
    %v2061 = vpop.permute.xlu0 %2060
    %2062 = vrot.lane.b32.xlu0 %v1993, 24
    %v2063 = vpop.permute.xlu0 %2062
    %v2070 = vsel %vm637, %v897, %v2005
    %v2071 = vsel %vm637, %v900, %v2007
    %v2072 = vsel %vm637, %v905, %v2009
    %v2073 = vsel %vm637, %v959, %v2011
    %v2074 = vsel %vm637, %v962, %v2013
    %v2075 = vsel %vm637, %v967, %v2015
    %vm2076 = vcmask 130048
    %v2077 = vsel %vm2076, %v2070, %v2029
    %v2078 = vsel %vm2076, %v2071, %v2031
    %v2079 = vsel %vm2076, %v2072, %v2033
    %v2080 = vsel %vm2076, %v2073, %v2035
    %v2081 = vsel %vm2076, %v2074, %v2037
    %v2082 = vsel %vm2076, %v2075, %v2039
    %v2083 = vsel %vm776, %v2077, %v2053
    %v2084 = vsel %vm776, %v2078, %v2055
    %v2085 = vsel %vm776, %v2079, %v2057
    %v2086 = vsel %vm776, %v2080, %v2059
    %v2087 = vsel %vm776, %v2081, %v2061
    %v2088 = vsel %vm776, %v2082, %v2063
    %v2089 = vld [vmem:[%s12] sm:$0xf]
    %v2090 = vld [vmem:[%s12 + $0x4] sm:$0xf]
    %v2091 = vld [vmem:[%s12 + $0x8] sm:$0xf]
    %v2092 = vld [vmem:[%s12 + $0xc] sm:$0xf]
    %v2093 = vpack.c.bf16 %v2084, %v2083
    %v2094 = vpack.c.bf16 %v2086, %v2085
    %v2095 = vpack.c.bf16 %v2088, %v2087
    %v2100 = vunpack.c.l.b16 %v2089
    %v2101 = vunpack.c.l.b16 %v2090
    %v2102 = vunpack.c.l.b16 %v2091
    %v2103 = vunpack.c.l.b16 %v2092
    %v2104 = vpack.c.b16 %v2101, %v2100
    %v2105 = vpack.c.b16 %v2103, %v2102
    %v2109 = vsel %vm301, %v2093, 0
    %v2112 = vsel %vm301, %v2094, 0
    %v2115 = vsel %vm301, %v2095, 0
    %2117 = vmatprep.subr.bf16.mxu0 0
    %2118 = vmatpush1.bf16.msra.mxu0 %v2104
    %2119 = vmatprep.subr.bf16.mxu0 0
    %2120 = vmatpush1.bf16.msra.mxu0 %v2105
    %2121 = vmatprep.subr.bf16.mxu0 0
    %2122 = vmatpush1.bf16.msra.mxu0 0
    %2123 = vmatprep.subr.bf16.mxu0 0
    %2124 = vmatpush1.bf16.msra.mxu0 0
    %2125 = vmatprep.subr.bf16.mxu0 0
    %2126 = vmatpush1.bf16.msra.mxu0 0
    %2127 = vmatprep.subr.bf16.mxu0 0
    %2128 = vmatpush1.bf16.msra.mxu0 0
    %2129 = vmatprep.subr.bf16.mxu0 0
    %2130 = vmatpush1.bf16.msra.mxu0 0
    %2131 = vmatprep.subr.bf16.mxu0 0
    %2132 = vmatpush1.bf16.msra.mxu0 0
    %2133 = vmatprep.subr.bf16.mxu0 0
    %2134 = vmatpush1.bf16.msra.mxu0 0
    %2135 = vmatprep.subr.bf16.mxu0 0
    %2136 = vmatpush1.bf16.msra.mxu0 0
    %2137 = vmatprep.subr.bf16.mxu0 0
    %2138 = vmatpush1.bf16.msra.mxu0 0
    %2139 = vmatprep.subr.bf16.mxu0 0
    %2140 = vmatpush1.bf16.msra.mxu0 0
    %2141 = vmatprep.subr.bf16.mxu0 0
    %2142 = vmatpush1.bf16.msra.mxu0 0
    %2143 = vmatprep.subr.bf16.mxu0 0
    %2144 = vmatpush1.bf16.msra.mxu0 0
    %2145 = vmatprep.subr.bf16.mxu0 0
    %2146 = vmatpush1.bf16.msra.mxu0 0
    %2147 = vmatprep.subr.bf16.mxu0 0
    %2148 = vmatpush1.bf16.msra.mxu0 0
    %2149 = vmatprep.mubr.bf16.mxu0 0
    %2150 = vmatmul.mubr.bf16.gmra.mrb[0].mxu0 %v2109
    %v2151 = vpop.f32.mrb[0].mxu0
    %v2152 = vadd.f32 0.0, %v2151
    %v2153 = vpop.f32.mrb[0].mxu0
    %v2154 = vpop.f32.mrb[0].mxu0
    %v2155 = vadd.f32 0.0, %v2154
    %v2156 = vpop.f32.mrb[0].mxu0
    %2157 = vmatprep.mubr.bf16.mxu0 0
    %2158 = vmatmul.mubr.bf16.gmra.mrb[0].mxu0 %v2112
    %v2159 = vpop.f32.mrb[0].mxu0
    %v2160 = vadd.f32 0.0, %v2159
    %v2161 = vpop.f32.mrb[0].mxu0
    %v2162 = vpop.f32.mrb[0].mxu0
    %v2163 = vadd.f32 0.0, %v2162
    %v2164 = vpop.f32.mrb[0].mxu0
    %2165 = vmatprep.mubr.bf16.mxu0 0
    %2166 = vmatmul.mubr.bf16.gmra.mrb[0].mxu0 %v2115
    %v2167 = vpop.f32.mrb[0].mxu0
    %v2168 = vadd.f32 0.0, %v2167
    %v2169 = vpop.f32.mrb[0].mxu0
    %v2170 = vpop.f32.mrb[0].mxu0
    %v2171 = vadd.f32 0.0, %v2170
    %v2172 = vpop.f32.mrb[0].mxu0
    %2173 = vdwg.mxu0
    %v2174 = vadd.f32 %v428, %v2152
    %v2175 = vadd.f32 %v429, %v2155
    %v2176 = vadd.f32 %v430, %v2160
    %v2177 = vadd.f32 %v431, %v2163
    %v2178 = vadd.f32 %v432, %v2168
    %v2179 = vadd.f32 %v433, %v2171
    %v2180 = vld [vmem:[%s13] sm:$0x1]
    %v2182 = vlaneseq
    %v2183 = vshrl.u32 %v2182, 7
    %v2184 = vsub.s32 0, %v2183
    %v2185 = vrot.slane %v2180, %v2184
    %v2187 = vadd.f32 %v2174, %v2185
    %v2188 = vadd.f32 %v2175, %v2185
    %v2189 = vadd.f32 %v2176, %v2185
    %v2190 = vadd.f32 %v2177, %v2185
    %v2191 = vadd.f32 %v2178, %v2185
    %v2192 = vadd.f32 %v2179, %v2185
    %v2193 = vld [vmem:[%s14] sm:$0x1]
    %v2194 = vld [vmem:[%s15] sm:$0x1]
    %v2195 = vsel %vm301, %v2187, 0.0
    %2196 = vadd.xlane.f32.xlu0 %v2195
    %v2197 = vpop.xlane.xlu0 %2196
    %v2198 = vsel %vm301, %v2188, 0.0
    %2199 = vadd.xlane.f32.xlu0 %v2198
    %v2200 = vpop.xlane.xlu0 %2199
    %v2201 = vsel %vm301, %v2189, 0.0
    %2202 = vadd.xlane.f32.xlu0 %v2201
    %v2203 = vpop.xlane.xlu0 %2202
    %v2204 = vsel %vm301, %v2190, 0.0
    %2205 = vadd.xlane.f32.xlu0 %v2204
    %v2206 = vpop.xlane.xlu0 %2205
    %v2207 = vsel %vm301, %v2191, 0.0
    %2208 = vadd.xlane.f32.xlu0 %v2207
    %v2209 = vpop.xlane.xlu0 %2208
    %v2210 = vsel %vm301, %v2192, 0.0
    %2211 = vadd.xlane.f32.xlu0 %v2210
    %v2212 = vpop.xlane.xlu0 %2211
    %v2213 = vmul.f32 %v2197, %v320
    %v2214 = vmul.f32 %v2200, %v320
    %v2215 = vmul.f32 %v2203, %v320
    %v2216 = vmul.f32 %v2206, %v320
    %v2217 = vmul.f32 %v2209, %v320
    %v2218 = vmul.f32 %v2212, %v320
    %v2219 = vsub.f32 %v2187, %v2213
    %v2220 = vsub.f32 %v2188, %v2214
    %v2221 = vsub.f32 %v2189, %v2215
    %v2222 = vsub.f32 %v2190, %v2216
    %v2223 = vsub.f32 %v2191, %v2217
    %v2224 = vsub.f32 %v2192, %v2218
    %v2225 = vmul.f32 %v2219, %v2219
    %v2226 = vmul.f32 %v2220, %v2220
    %v2227 = vmul.f32 %v2221, %v2221
    %v2228 = vmul.f32 %v2222, %v2222
    %v2229 = vmul.f32 %v2223, %v2223
    %v2230 = vmul.f32 %v2224, %v2224
    %v2231 = vsel %vm301, %v2225, 0.0
    %2232 = vadd.xlane.f32.xlu0 %v2231
    %v2233 = vpop.xlane.xlu0 %2232
    %v2234 = vsel %vm301, %v2226, 0.0
    %2235 = vadd.xlane.f32.xlu0 %v2234
    %v2236 = vpop.xlane.xlu0 %2235
    %v2237 = vsel %vm301, %v2227, 0.0
    %2238 = vadd.xlane.f32.xlu0 %v2237
    %v2239 = vpop.xlane.xlu0 %2238
    %v2240 = vsel %vm301, %v2228, 0.0
    %2241 = vadd.xlane.f32.xlu0 %v2240
    %v2242 = vpop.xlane.xlu0 %2241
    %v2243 = vsel %vm301, %v2229, 0.0
    %2244 = vadd.xlane.f32.xlu0 %v2243
    %v2245 = vpop.xlane.xlu0 %2244
    %v2246 = vsel %vm301, %v2230, 0.0
    %2247 = vadd.xlane.f32.xlu0 %v2246
    %v2248 = vpop.xlane.xlu0 %2247
    %v2249 = vmul.f32 %v2233, %v320
    %v2250 = vmul.f32 %v2236, %v320
    %v2251 = vmul.f32 %v2239, %v320
    %v2252 = vmul.f32 %v2242, %v320
    %v2253 = vmul.f32 %v2245, %v320
    %v2254 = vmul.f32 %v2248, %v320
    %v2255 = vadd.f32 %v2249, 1e-05
    %v2256 = vadd.f32 %v2250, 1e-05
    %v2257 = vadd.f32 %v2251, 1e-05
    %v2258 = vadd.f32 %v2252, 1e-05
    %v2259 = vadd.f32 %v2253, 1e-05
    %v2260 = vadd.f32 %v2254, 1e-05
    %v2261 = vrsqrt.pop %v2255
    %v2262 = vrsqrt.pop %v2256
    %v2263 = vrsqrt.pop %v2257
    %v2264 = vrsqrt.pop %v2258
    %v2265 = vrsqrt.pop %v2259
    %v2266 = vrsqrt.pop %v2260
    %v2267 = vmul.f32 %v2219, %v2261
    %v2268 = vmul.f32 %v2220, %v2262
    %v2269 = vmul.f32 %v2221, %v2263
    %v2270 = vmul.f32 %v2222, %v2264
    %v2271 = vmul.f32 %v2223, %v2265
    %v2272 = vmul.f32 %v2224, %v2266
    %v2274 = vlaneseq
    %v2275 = vshrl.u32 %v2274, 7
    %v2276 = vsub.s32 0, %v2275
    %v2277 = vrot.slane %v2193, %v2276
    %v2279 = vmul.f32 %v2267, %v2277
    %v2280 = vmul.f32 %v2268, %v2277
    %v2281 = vmul.f32 %v2269, %v2277
    %v2282 = vmul.f32 %v2270, %v2277
    %v2283 = vmul.f32 %v2271, %v2277
    %v2284 = vmul.f32 %v2272, %v2277
    %v2286 = vlaneseq
    %v2287 = vshrl.u32 %v2286, 7
    %v2288 = vsub.s32 0, %v2287
    %v2289 = vrot.slane %v2194, %v2288
    %v2291 = vadd.f32 %v2279, %v2289
    %v2292 = vadd.f32 %v2280, %v2289
    %v2293 = vadd.f32 %v2281, %v2289
    %v2294 = vadd.f32 %v2282, %v2289
    %v2295 = vadd.f32 %v2283, %v2289
    %v2296 = vadd.f32 %v2284, %v2289
    %v2297 = vld [vmem:[%s16] sm:$0xf]
    %v2298 = vld [vmem:[%s16 + $0x4] sm:$0xf]
    %v2299 = vld [vmem:[%s16 + $0x8] sm:$0xf]
    %v2300 = vld [vmem:[%s16 + $0xc] sm:$0xf]
    %v2301 = vpack.c.bf16 %v2292, %v2291
    %v2302 = vpack.c.bf16 %v2294, %v2293
    %v2303 = vpack.c.bf16 %v2296, %v2295
    %v2304 = vld [vmem:[%s17] sm:$0x1]
    %v2306 = vlaneseq
    %v2307 = vshrl.u32 %v2306, 7
    %v2308 = vsub.s32 0, %v2307
    %v2309 = vrot.slane %v2304, %v2308
    %v2315 = vunpack.c.l.b16 %v2297
    %v2316 = vunpack.c.l.b16 %v2298
    %v2317 = vunpack.c.l.b16 %v2299
    %v2318 = vunpack.c.l.b16 %v2300
    %v2319 = vpack.c.b16 %v2316, %v2315
    %v2320 = vpack.c.b16 %v2318, %v2317
    %v2324 = vsel %vm301, %v2301, 0
    %v2327 = vsel %vm301, %v2302, 0
    %v2330 = vsel %vm301, %v2303, 0
    %2332 = vmatprep.subr.bf16.mxu0 0
    %2333 = vmatpush1.bf16.msra.mxu0 %v2319
    %2334 = vmatprep.subr.bf16.mxu0 0
    %2335 = vmatpush1.bf16.msra.mxu0 %v2320
    %2336 = vmatprep.subr.bf16.mxu0 0
    %2337 = vmatpush1.bf16.msra.mxu0 0
    %2338 = vmatprep.subr.bf16.mxu0 0
    %2339 = vmatpush1.bf16.msra.mxu0 0
    %2340 = vmatprep.subr.bf16.mxu0 0
    %2341 = vmatpush1.bf16.msra.mxu0 0
    %2342 = vmatprep.subr.bf16.mxu0 0
    %2343 = vmatpush1.bf16.msra.mxu0 0
    %2344 = vmatprep.subr.bf16.mxu0 0
    %2345 = vmatpush1.bf16.msra.mxu0 0
    %2346 = vmatprep.subr.bf16.mxu0 0
    %2347 = vmatpush1.bf16.msra.mxu0 0
    %2348 = vmatprep.subr.bf16.mxu0 0
    %2349 = vmatpush1.bf16.msra.mxu0 0
    %2350 = vmatprep.subr.bf16.mxu0 0
    %2351 = vmatpush1.bf16.msra.mxu0 0
    %2352 = vmatprep.subr.bf16.mxu0 0
    %2353 = vmatpush1.bf16.msra.mxu0 0
    %2354 = vmatprep.subr.bf16.mxu0 0
    %2355 = vmatpush1.bf16.msra.mxu0 0
    %2356 = vmatprep.subr.bf16.mxu0 0
    %2357 = vmatpush1.bf16.msra.mxu0 0
    %2358 = vmatprep.subr.bf16.mxu0 0
    %2359 = vmatpush1.bf16.msra.mxu0 0
    %2360 = vmatprep.subr.bf16.mxu0 0
    %2361 = vmatpush1.bf16.msra.mxu0 0
    %2362 = vmatprep.subr.bf16.mxu0 0
    %2363 = vmatpush1.bf16.msra.mxu0 0
    %2364 = vmatprep.mubr.bf16.mxu0 0
    %2365 = vmatmul.mubr.bf16.gmra.mrb[0].mxu0 %v2324
    %v2366 = vpop.f32.mrb[0].mxu0
    %v2367 = vadd.f32 %v2309, %v2366
    %v2368 = vpop.f32.mrb[0].mxu0
    %v2369 = vpop.f32.mrb[0].mxu0
    %v2370 = vadd.f32 %v2309, %v2369
    %v2371 = vpop.f32.mrb[0].mxu0
    %2372 = vmatprep.mubr.bf16.mxu0 0
    %2373 = vmatmul.mubr.bf16.gmra.mrb[0].mxu0 %v2327
    %v2374 = vpop.f32.mrb[0].mxu0
    %v2375 = vadd.f32 %v2309, %v2374
    %v2376 = vpop.f32.mrb[0].mxu0
    %v2377 = vpop.f32.mrb[0].mxu0
    %v2378 = vadd.f32 %v2309, %v2377
    %v2379 = vpop.f32.mrb[0].mxu0
    %2380 = vmatprep.mubr.bf16.mxu0 0
    %2381 = vmatmul.mubr.bf16.gmra.mrb[0].mxu0 %v2330
    %v2382 = vpop.f32.mrb[0].mxu0
    %v2383 = vadd.f32 %v2309, %v2382
    %v2384 = vpop.f32.mrb[0].mxu0
    %v2385 = vpop.f32.mrb[0].mxu0
    %v2386 = vadd.f32 %v2309, %v2385
    %v2387 = vpop.f32.mrb[0].mxu0
    %2388 = vdwg.mxu0
    %v2389 = vmul.f32 %v2367, 0.5
    %v2390 = vmul.f32 %v2370, 0.5
    %v2391 = vmul.f32 %v2375, 0.5
    %v2392 = vmul.f32 %v2378, 0.5
    %v2393 = vmul.f32 %v2383, 0.5
    %v2394 = vmul.f32 %v2386, 0.5
    %v2395 = vmul.f32 %v2367, 0.70710677
    %v2396 = vmul.f32 %v2370, 0.70710677
    %v2397 = vmul.f32 %v2375, 0.70710677
    %v2398 = vmul.f32 %v2378, 0.70710677
    %v2399 = vmul.f32 %v2383, 0.70710677
    %v2400 = vmul.f32 %v2386, 0.70710677
    %v2401 = verf.f32.pop %v2395
    %v2402 = verf.f32.pop %v2396
    %v2403 = verf.f32.pop %v2397
    %v2404 = verf.f32.pop %v2398
    %v2405 = verf.f32.pop %v2399
    %v2406 = verf.f32.pop %v2400
    %v2407 = vadd.f32 %v2401, 1.0
    %v2408 = vadd.f32 %v2402, 1.0
    %v2409 = vadd.f32 %v2403, 1.0
    %v2410 = vadd.f32 %v2404, 1.0
    %v2411 = vadd.f32 %v2405, 1.0
    %v2412 = vadd.f32 %v2406, 1.0
    %v2413 = vmul.f32 %v2389, %v2407
    %v2414 = vmul.f32 %v2390, %v2408
    %v2415 = vmul.f32 %v2391, %v2409
    %v2416 = vmul.f32 %v2392, %v2410
    %v2417 = vmul.f32 %v2393, %v2411
    %v2418 = vmul.f32 %v2394, %v2412
    %v2419 = vld [vmem:[%s18] sm:$0xf]
    %v2420 = vld [vmem:[%s18 + $0x4] sm:$0xf]
    %v2421 = vld [vmem:[%s18 + $0x8] sm:$0xf]
    %v2422 = vld [vmem:[%s18 + $0xc] sm:$0xf]
    %v2423 = vld [vmem:[%s18 + $0x10] sm:$0xf]
    %v2424 = vld [vmem:[%s18 + $0x14] sm:$0xf]
    %v2425 = vld [vmem:[%s18 + $0x18] sm:$0xf]
    %v2426 = vld [vmem:[%s18 + $0x1c] sm:$0xf]
    %v2427 = vpack.c.bf16 %v2414, %v2413
    %v2428 = vpack.c.bf16 %v2416, %v2415
    %v2429 = vpack.c.bf16 %v2418, %v2417
    %v2438 = vunpack.c.l.b16 %v2419
    %v2439 = vunpack.c.l.b16 %v2420
    %v2440 = vunpack.c.l.b16 %v2421
    %v2441 = vunpack.c.l.b16 %v2422
    %v2442 = vunpack.c.l.b16 %v2423
    %v2443 = vunpack.c.l.b16 %v2424
    %v2444 = vunpack.c.l.b16 %v2425
    %v2445 = vunpack.c.l.b16 %v2426
    %v2446 = vpack.c.b16 %v2439, %v2438
    %v2447 = vpack.c.b16 %v2441, %v2440
    %v2448 = vpack.c.b16 %v2443, %v2442
    %v2449 = vpack.c.b16 %v2445, %v2444
    %v2455 = vsel %vm87, %v2427, 0
    %v2458 = vsel %vm87, %v2428, 0
    %v2461 = vsel %vm87, %v2429, 0
    %2463 = vmatprep.subr.bf16.mxu0 0
    %2464 = vmatpush1.bf16.msra.mxu0 %v2446
    %2465 = vmatprep.subr.bf16.mxu0 0
    %2466 = vmatpush1.bf16.msra.mxu0 %v2447
    %2467 = vmatprep.subr.bf16.mxu0 0
    %2468 = vmatpush1.bf16.msra.mxu0 %v2448
    %2469 = vmatprep.subr.bf16.mxu0 0
    %2470 = vmatpush1.bf16.msra.mxu0 %v2449
    %2471 = vmatprep.subr.bf16.mxu0 0
    %2472 = vmatpush1.bf16.msra.mxu0 0
    %2473 = vmatprep.subr.bf16.mxu0 0
    %2474 = vmatpush1.bf16.msra.mxu0 0
    %2475 = vmatprep.subr.bf16.mxu0 0
    %2476 = vmatpush1.bf16.msra.mxu0 0
    %2477 = vmatprep.subr.bf16.mxu0 0
    %2478 = vmatpush1.bf16.msra.mxu0 0
    %2479 = vmatprep.subr.bf16.mxu0 0
    %2480 = vmatpush1.bf16.msra.mxu0 0
    %2481 = vmatprep.subr.bf16.mxu0 0
    %2482 = vmatpush1.bf16.msra.mxu0 0
    %2483 = vmatprep.subr.bf16.mxu0 0
    %2484 = vmatpush1.bf16.msra.mxu0 0
    %2485 = vmatprep.subr.bf16.mxu0 0
    %2486 = vmatpush1.bf16.msra.mxu0 0
    %2487 = vmatprep.subr.bf16.mxu0 0
    %2488 = vmatpush1.bf16.msra.mxu0 0
    %2489 = vmatprep.subr.bf16.mxu0 0
    %2490 = vmatpush1.bf16.msra.mxu0 0
    %2491 = vmatprep.subr.bf16.mxu0 0
    %2492 = vmatpush1.bf16.msra.mxu0 0
    %2493 = vmatprep.subr.bf16.mxu0 0
    %2494 = vmatpush1.bf16.msra.mxu0 0
    %2495 = vmatprep.mubr.bf16.mxu0 0
    %2496 = vmatmul.mubr.bf16.gmra.mrb[0].mxu0 %v2455
    %v2497 = vpop.f32.mrb[0].mxu0
    %v2498 = vadd.f32 0.0, %v2497
    %v2499 = vpop.f32.mrb[0].mxu0
    %v2500 = vpop.f32.mrb[0].mxu0
    %v2501 = vadd.f32 0.0, %v2500
    %v2502 = vpop.f32.mrb[0].mxu0
    %2503 = vmatprep.mubr.bf16.mxu0 0
    %2504 = vmatmul.mubr.bf16.gmra.mrb[0].mxu0 %v2458
    %v2505 = vpop.f32.mrb[0].mxu0
    %v2506 = vadd.f32 0.0, %v2505
    %v2507 = vpop.f32.mrb[0].mxu0
    %v2508 = vpop.f32.mrb[0].mxu0
    %v2509 = vadd.f32 0.0, %v2508
    %v2510 = vpop.f32.mrb[0].mxu0
    %2511 = vmatprep.mubr.bf16.mxu0 0
    %2512 = vmatmul.mubr.bf16.gmra.mrb[0].mxu0 %v2461
    %v2513 = vpop.f32.mrb[0].mxu0
    %v2514 = vadd.f32 0.0, %v2513
    %v2515 = vpop.f32.mrb[0].mxu0
    %v2516 = vpop.f32.mrb[0].mxu0
    %v2517 = vadd.f32 0.0, %v2516
    %v2518 = vpop.f32.mrb[0].mxu0
    %2519 = vdwg.mxu0
    %v2520 = vadd.f32 %v2187, %v2498
    %v2521 = vadd.f32 %v2188, %v2501
    %v2522 = vadd.f32 %v2189, %v2506
    %v2523 = vadd.f32 %v2190, %v2509
    %v2524 = vadd.f32 %v2191, %v2514
    %v2525 = vadd.f32 %v2192, %v2517
    %v2526 = vld [vmem:[%s19] sm:$0x1]
    %v2528 = vlaneseq
    %v2529 = vshrl.u32 %v2528, 7
    %v2530 = vsub.s32 0, %v2529
    %v2531 = vrot.slane %v2526, %v2530
    %v2533 = vadd.f32 %v2520, %v2531
    %v2534 = vadd.f32 %v2521, %v2531
    %v2535 = vadd.f32 %v2522, %v2531
    %v2536 = vadd.f32 %v2523, %v2531
    %v2537 = vadd.f32 %v2524, %v2531
    %v2538 = vadd.f32 %v2525, %v2531
    %s2539 = scalar_lea.vmem %s9, 1
    %v2540 = vld [vmem:[%s2539] sm:$0x1]
    %s2541 = scalar_lea.vmem %s10, 1
    %v2542 = vld [vmem:[%s2541] sm:$0x1]
    %v2543 = vsel %vm301, %v2533, 0.0
    %2544 = vadd.xlane.f32.xlu0 %v2543
    %v2545 = vpop.xlane.xlu0 %2544
    %v2546 = vsel %vm301, %v2534, 0.0
    %2547 = vadd.xlane.f32.xlu0 %v2546
    %v2548 = vpop.xlane.xlu0 %2547
    %v2549 = vsel %vm301, %v2535, 0.0
    %2550 = vadd.xlane.f32.xlu0 %v2549
    %v2551 = vpop.xlane.xlu0 %2550
    %v2552 = vsel %vm301, %v2536, 0.0
    %2553 = vadd.xlane.f32.xlu0 %v2552
    %v2554 = vpop.xlane.xlu0 %2553
    %v2555 = vsel %vm301, %v2537, 0.0
    %2556 = vadd.xlane.f32.xlu0 %v2555
    %v2557 = vpop.xlane.xlu0 %2556
    %v2558 = vsel %vm301, %v2538, 0.0
    %2559 = vadd.xlane.f32.xlu0 %v2558
    %v2560 = vpop.xlane.xlu0 %2559
    %v2561 = vmul.f32 %v2545, %v320
    %v2562 = vmul.f32 %v2548, %v320
    %v2563 = vmul.f32 %v2551, %v320
    %v2564 = vmul.f32 %v2554, %v320
    %v2565 = vmul.f32 %v2557, %v320
    %v2566 = vmul.f32 %v2560, %v320
    %v2567 = vsub.f32 %v2533, %v2561
    %v2568 = vsub.f32 %v2534, %v2562
    %v2569 = vsub.f32 %v2535, %v2563
    %v2570 = vsub.f32 %v2536, %v2564
    %v2571 = vsub.f32 %v2537, %v2565
    %v2572 = vsub.f32 %v2538, %v2566
    %v2573 = vmul.f32 %v2567, %v2567
    %v2574 = vmul.f32 %v2568, %v2568
    %v2575 = vmul.f32 %v2569, %v2569
    %v2576 = vmul.f32 %v2570, %v2570
    %v2577 = vmul.f32 %v2571, %v2571
    %v2578 = vmul.f32 %v2572, %v2572
    %v2579 = vsel %vm301, %v2573, 0.0
    %2580 = vadd.xlane.f32.xlu0 %v2579
    %v2581 = vpop.xlane.xlu0 %2580
    %v2582 = vsel %vm301, %v2574, 0.0
    %2583 = vadd.xlane.f32.xlu0 %v2582
    %v2584 = vpop.xlane.xlu0 %2583
    %v2585 = vsel %vm301, %v2575, 0.0
    %2586 = vadd.xlane.f32.xlu0 %v2585
    %v2587 = vpop.xlane.xlu0 %2586
    %v2588 = vsel %vm301, %v2576, 0.0
    %2589 = vadd.xlane.f32.xlu0 %v2588
    %v2590 = vpop.xlane.xlu0 %2589
    %v2591 = vsel %vm301, %v2577, 0.0
    %2592 = vadd.xlane.f32.xlu0 %v2591
    %v2593 = vpop.xlane.xlu0 %2592
    %v2594 = vsel %vm301, %v2578, 0.0
    %2595 = vadd.xlane.f32.xlu0 %v2594
    %v2596 = vpop.xlane.xlu0 %2595
    %v2597 = vmul.f32 %v2581, %v320
    %v2598 = vmul.f32 %v2584, %v320
    %v2599 = vmul.f32 %v2587, %v320
    %v2600 = vmul.f32 %v2590, %v320
    %v2601 = vmul.f32 %v2593, %v320
    %v2602 = vmul.f32 %v2596, %v320
    %v2603 = vadd.f32 %v2597, 1e-05
    %v2604 = vadd.f32 %v2598, 1e-05
    %v2605 = vadd.f32 %v2599, 1e-05
    %v2606 = vadd.f32 %v2600, 1e-05
    %v2607 = vadd.f32 %v2601, 1e-05
    %v2608 = vadd.f32 %v2602, 1e-05
    %v2609 = vrsqrt.pop %v2603
    %v2610 = vrsqrt.pop %v2604
    %v2611 = vrsqrt.pop %v2605
    %v2612 = vrsqrt.pop %v2606
    %v2613 = vrsqrt.pop %v2607
    %v2614 = vrsqrt.pop %v2608
    %v2615 = vmul.f32 %v2567, %v2609
    %v2616 = vmul.f32 %v2568, %v2610
    %v2617 = vmul.f32 %v2569, %v2611
    %v2618 = vmul.f32 %v2570, %v2612
    %v2619 = vmul.f32 %v2571, %v2613
    %v2620 = vmul.f32 %v2572, %v2614
    %v2622 = vlaneseq
    %v2623 = vshrl.u32 %v2622, 7
    %v2624 = vsub.s32 0, %v2623
    %v2625 = vrot.slane %v2540, %v2624
    %v2627 = vmul.f32 %v2615, %v2625
    %v2628 = vmul.f32 %v2616, %v2625
    %v2629 = vmul.f32 %v2617, %v2625
    %v2630 = vmul.f32 %v2618, %v2625
    %v2631 = vmul.f32 %v2619, %v2625
    %v2632 = vmul.f32 %v2620, %v2625
    %v2634 = vlaneseq
    %v2635 = vshrl.u32 %v2634, 7
    %v2636 = vsub.s32 0, %v2635
    %v2637 = vrot.slane %v2542, %v2636
    %v2639 = vadd.f32 %v2627, %v2637
    %v2640 = vadd.f32 %v2628, %v2637
    %v2641 = vadd.f32 %v2629, %v2637
    %v2642 = vadd.f32 %v2630, %v2637
    %v2643 = vadd.f32 %v2631, %v2637
    %v2644 = vadd.f32 %v2632, %v2637
    %s2645 = scalar_lea.vmem %s11, 16
    %v2646 = vld [vmem:[%s2645] sm:$0xf]
    %v2647 = vld [vmem:[%s2645 + $0x4] sm:$0xf]
    %v2648 = vld [vmem:[%s2645 + $0x8] sm:$0xf]
    %v2649 = vld [vmem:[%s2645 + $0xc] sm:$0xf]
    %v2650 = vpack.c.bf16 %v2640, %v2639
    %v2651 = vpack.c.bf16 %v2642, %v2641
    %v2652 = vpack.c.bf16 %v2644, %v2643
    %v2657 = vunpack.c.l.b16 %v2646
    %v2658 = vunpack.c.l.b16 %v2647
    %v2659 = vunpack.c.l.b16 %v2648
    %v2660 = vunpack.c.l.b16 %v2649
    %v2661 = vpack.c.b16 %v2658, %v2657
    %v2662 = vpack.c.b16 %v2660, %v2659
    %v2666 = vsel %vm301, %v2650, 0
    %v2669 = vsel %vm301, %v2651, 0
    %v2672 = vsel %vm301, %v2652, 0
    %2674 = vmatprep.subr.bf16.mxu0 0
    %2675 = vmatpush1.bf16.msra.mxu0 %v2661
    %2676 = vmatprep.subr.bf16.mxu0 0
    %2677 = vmatpush1.bf16.msra.mxu0 %v2662
    %2678 = vmatprep.subr.bf16.mxu0 0
    %2679 = vmatpush1.bf16.msra.mxu0 0
    %2680 = vmatprep.subr.bf16.mxu0 0
    %2681 = vmatpush1.bf16.msra.mxu0 0
    %2682 = vmatprep.subr.bf16.mxu0 0
    %2683 = vmatpush1.bf16.msra.mxu0 0
    %2684 = vmatprep.subr.bf16.mxu0 0
    %2685 = vmatpush1.bf16.msra.mxu0 0
    %2686 = vmatprep.subr.bf16.mxu0 0
    %2687 = vmatpush1.bf16.msra.mxu0 0
    %2688 = vmatprep.subr.bf16.mxu0 0
    %2689 = vmatpush1.bf16.msra.mxu0 0
    %2690 = vmatprep.subr.bf16.mxu0 0
    %2691 = vmatpush1.bf16.msra.mxu0 0
    %2692 = vmatprep.subr.bf16.mxu0 0
    %2693 = vmatpush1.bf16.msra.mxu0 0
    %2694 = vmatprep.subr.bf16.mxu0 0
    %2695 = vmatpush1.bf16.msra.mxu0 0
    %2696 = vmatprep.subr.bf16.mxu0 0
    %2697 = vmatpush1.bf16.msra.mxu0 0
    %2698 = vmatprep.subr.bf16.mxu0 0
    %2699 = vmatpush1.bf16.msra.mxu0 0
    %2700 = vmatprep.subr.bf16.mxu0 0
    %2701 = vmatpush1.bf16.msra.mxu0 0
    %2702 = vmatprep.subr.bf16.mxu0 0
    %2703 = vmatpush1.bf16.msra.mxu0 0
    %2704 = vmatprep.subr.bf16.mxu0 0
    %2705 = vmatpush1.bf16.msra.mxu0 0
    %2706 = vmatprep.mubr.bf16.mxu0 0
    %2707 = vmatmul.mubr.bf16.gmra.mrb[0].mxu0 %v2666
    %v2708 = vpop.f32.mrb[0].mxu0
    %v2709 = vadd.f32 0.0, %v2708
    %v2710 = vpop.f32.mrb[0].mxu0
    %v2711 = vpop.f32.mrb[0].mxu0
    %v2712 = vadd.f32 0.0, %v2711
    %v2713 = vpop.f32.mrb[0].mxu0
    %2714 = vmatprep.mubr.bf16.mxu0 0
    %2715 = vmatmul.mubr.bf16.gmra.mrb[0].mxu0 %v2669
    %v2716 = vpop.f32.mrb[0].mxu0
    %v2717 = vadd.f32 0.0, %v2716
    %v2718 = vpop.f32.mrb[0].mxu0
    %v2719 = vpop.f32.mrb[0].mxu0
    %v2720 = vadd.f32 0.0, %v2719
    %v2721 = vpop.f32.mrb[0].mxu0
    %2722 = vmatprep.mubr.bf16.mxu0 0
    %2723 = vmatmul.mubr.bf16.gmra.mrb[0].mxu0 %v2672
    %v2724 = vpop.f32.mrb[0].mxu0
    %v2725 = vadd.f32 0.0, %v2724
    %v2726 = vpop.f32.mrb[0].mxu0
    %v2727 = vpop.f32.mrb[0].mxu0
    %v2728 = vadd.f32 0.0, %v2727
    %v2729 = vpop.f32.mrb[0].mxu0
    %2730 = vdwg.mxu0
    %v2731 = vpack.c.bf16 %v2712, %v2709
    %v2732 = vpack.c.bf16 %v2717, %v2717
    %v2733 = vpack.c.bf16 %v2725, %v2720
    %v2734 = vpack.c.bf16 %v2728, %v2728
    %2737 = vrot.lane.b32.xlu0 %v2731, 96
    %v2738 = vpop.permute.xlu0 %2737
    %2739 = vrot.lane.b32.xlu0 %v2732, 96
    %v2740 = vpop.permute.xlu0 %2739
    %v2742 = vsel %vm637, %v2731, 0
    %v2745 = vsel %vm637, %v2732, 0
    %v2748 = vsel %vm637, %v2738, 0
    %v2751 = vsel %vm637, %v2740, 0
    %2753 = vmatprep.subr.bf16.mxu0 0
    %2754 = vmatpush1.bf16.xpose.msra.mxu0 %v2748
    %2755 = vmatprep.subr.bf16.mxu0 0
    %2756 = vmatpush1.bf16.xpose.msra.mxu0 %v2751
    %2757 = vmatprep.subr.bf16.mxu0 0
    %2758 = vmatpush1.bf16.xpose.msra.mxu0 0
    %2759 = vmatprep.subr.bf16.mxu0 0
    %2760 = vmatpush1.bf16.xpose.msra.mxu0 0
    %2761 = vmatprep.subr.bf16.mxu0 0
    %2762 = vmatpush1.bf16.xpose.msra.mxu0 0
    %2763 = vmatprep.subr.bf16.mxu0 0
    %2764 = vmatpush1.bf16.xpose.msra.mxu0 0
    %2765 = vmatprep.subr.bf16.mxu0 0
    %2766 = vmatpush1.bf16.xpose.msra.mxu0 0
    %2767 = vmatprep.subr.bf16.mxu0 0
    %2768 = vmatpush1.bf16.xpose.msra.mxu0 0
    %2769 = vmatprep.subr.bf16.mxu0 0
    %2770 = vmatpush1.bf16.xpose.msra.mxu0 0
    %2771 = vmatprep.subr.bf16.mxu0 0
    %2772 = vmatpush1.bf16.xpose.msra.mxu0 0
    %2773 = vmatprep.subr.bf16.mxu0 0
    %2774 = vmatpush1.bf16.xpose.msra.mxu0 0
    %2775 = vmatprep.subr.bf16.mxu0 0
    %2776 = vmatpush1.bf16.xpose.msra.mxu0 0
    %2777 = vmatprep.subr.bf16.mxu0 0
    %2778 = vmatpush1.bf16.xpose.msra.mxu0 0
    %2779 = vmatprep.subr.bf16.mxu0 0
    %2780 = vmatpush1.bf16.xpose.msra.mxu0 0
    %2781 = vmatprep.subr.bf16.mxu0 0
    %2782 = vmatpush1.bf16.xpose.msra.mxu0 0
    %2783 = vmatprep.subr.bf16.mxu0 0
    %2784 = vmatpush1.bf16.xpose.msra.mxu0 0
    %2785 = vmatprep.mubr.bf16.mxu0 0
    %2786 = vmatmul.mubr.bf16.gmra.mrb[0].mxu0 %v2742
    %v2787 = vpop.f32.mrb[0].mxu0
    %v2788 = vadd.f32 0.0, %v2787
    %v2789 = vpop.f32.mrb[0].mxu0
    %v2790 = vpop.f32.mrb[0].mxu0
    %v2791 = vadd.f32 0.0, %v2790
    %v2792 = vpop.f32.mrb[0].mxu0
    %2793 = vmatprep.mubr.bf16.mxu0 0
    %2794 = vmatmul.mubr.bf16.gmra.mrb[0].mxu0 %v2745
    %v2795 = vpop.f32.mrb[0].mxu0
    %v2796 = vadd.f32 0.0, %v2795
    %v2797 = vpop.f32.mrb[0].mxu0
    %v2798 = vpop.f32.mrb[0].mxu0
    %v2799 = vpop.f32.mrb[0].mxu0
    %2800 = vdwg.mxu0
    %2803 = vrot.lane.b32.xlu0 %v2733, 96
    %v2804 = vpop.permute.xlu0 %2803
    %2805 = vrot.lane.b32.xlu0 %v2734, 96
    %v2806 = vpop.permute.xlu0 %2805
    %v2808 = vsel %vm637, %v2733, 0
    %v2811 = vsel %vm637, %v2734, 0
    %v2814 = vsel %vm637, %v2804, 0
    %v2817 = vsel %vm637, %v2806, 0
    %2819 = vmatprep.subr.bf16.mxu0 0
    %2820 = vmatpush1.bf16.xpose.msra.mxu0 %v2814
    %2821 = vmatprep.subr.bf16.mxu0 0
    %2822 = vmatpush1.bf16.xpose.msra.mxu0 %v2817
    %2823 = vmatprep.subr.bf16.mxu0 0
    %2824 = vmatpush1.bf16.xpose.msra.mxu0 0
    %2825 = vmatprep.subr.bf16.mxu0 0
    %2826 = vmatpush1.bf16.xpose.msra.mxu0 0
    %2827 = vmatprep.subr.bf16.mxu0 0
    %2828 = vmatpush1.bf16.xpose.msra.mxu0 0
    %2829 = vmatprep.subr.bf16.mxu0 0
    %2830 = vmatpush1.bf16.xpose.msra.mxu0 0
    %2831 = vmatprep.subr.bf16.mxu0 0
    %2832 = vmatpush1.bf16.xpose.msra.mxu0 0
    %2833 = vmatprep.subr.bf16.mxu0 0
    %2834 = vmatpush1.bf16.xpose.msra.mxu0 0
    %2835 = vmatprep.subr.bf16.mxu0 0
    %2836 = vmatpush1.bf16.xpose.msra.mxu0 0
    %2837 = vmatprep.subr.bf16.mxu0 0
    %2838 = vmatpush1.bf16.xpose.msra.mxu0 0
    %2839 = vmatprep.subr.bf16.mxu0 0
    %2840 = vmatpush1.bf16.xpose.msra.mxu0 0
    %2841 = vmatprep.subr.bf16.mxu0 0
    %2842 = vmatpush1.bf16.xpose.msra.mxu0 0
    %2843 = vmatprep.subr.bf16.mxu0 0
    %2844 = vmatpush1.bf16.xpose.msra.mxu0 0
    %2845 = vmatprep.subr.bf16.mxu0 0
    %2846 = vmatpush1.bf16.xpose.msra.mxu0 0
    %2847 = vmatprep.subr.bf16.mxu0 0
    %2848 = vmatpush1.bf16.xpose.msra.mxu0 0
    %2849 = vmatprep.subr.bf16.mxu0 0
    %2850 = vmatpush1.bf16.xpose.msra.mxu0 0
    %2851 = vmatprep.mubr.bf16.mxu0 0
    %2852 = vmatmul.mubr.bf16.gmra.mrb[0].mxu0 %v2808
    %v2853 = vpop.f32.mrb[0].mxu0
    %v2854 = vadd.f32 0.0, %v2853
    %v2855 = vpop.f32.mrb[0].mxu0
    %v2856 = vpop.f32.mrb[0].mxu0
    %v2857 = vadd.f32 0.0, %v2856
    %v2858 = vpop.f32.mrb[0].mxu0
    %2859 = vmatprep.mubr.bf16.mxu0 0
    %2860 = vmatmul.mubr.bf16.gmra.mrb[0].mxu0 %v2811
    %v2861 = vpop.f32.mrb[0].mxu0
    %v2862 = vadd.f32 0.0, %v2861
    %v2863 = vpop.f32.mrb[0].mxu0
    %v2864 = vpop.f32.mrb[0].mxu0
    %v2865 = vpop.f32.mrb[0].mxu0
    %2866 = vdwg.mxu0
    %v2867 = vmul.f32 %v2788, 0.35355338
    %v2868 = vmul.f32 %v2791, 0.35355338
    %v2869 = vmul.f32 %v2796, 0.35355338
    %v2870 = vmul.f32 %v2854, 0.35355338
    %v2871 = vmul.f32 %v2857, 0.35355338
    %v2872 = vmul.f32 %v2862, 0.35355338
    %v2873 = vadd.f32 %v2867, %v437
    %v2874 = vadd.f32 %v2868, %v437
    %v2875 = vadd.f32 %v2869, %v437
    %v2876 = vadd.f32 %v2870, %v437
    %v2877 = vadd.f32 %v2871, %v437
    %v2878 = vadd.f32 %v2872, %v437
    %v2879 = vsel %vm776, %v2873, -inf
    %2880 = vmax.xlane.f32.xlu0 %v2879
    %v2881 = vpop.xlane.xlu0 %2880
    %v2882 = vsel %vm776, %v2874, -inf
    %2883 = vmax.xlane.f32.xlu0 %v2882
    %v2884 = vpop.xlane.xlu0 %2883
    %v2885 = vsel %vm776, %v2875, -inf
    %2886 = vmax.xlane.f32.xlu0 %v2885
    %v2887 = vpop.xlane.xlu0 %2886
    %v2888 = vsel %vm776, %v2876, -inf
    %2889 = vmax.xlane.f32.xlu0 %v2888
    %v2890 = vpop.xlane.xlu0 %2889
    %v2891 = vsel %vm776, %v2877, -inf
    %2892 = vmax.xlane.f32.xlu0 %v2891
    %v2893 = vpop.xlane.xlu0 %2892
    %v2894 = vsel %vm776, %v2878, -inf
    %2895 = vmax.xlane.f32.xlu0 %v2894
    %v2896 = vpop.xlane.xlu0 %2895
    %v2897 = vsub.f32 %v2873, %v2881
    %v2898 = vsub.f32 %v2874, %v2884
    %v2899 = vsub.f32 %v2875, %v2887
    %v2900 = vsub.f32 %v2876, %v2890
    %v2901 = vsub.f32 %v2877, %v2893
    %v2902 = vsub.f32 %v2878, %v2896
    %v2903 = vmul.f32 %v2897, 1.442695
    %v2904 = vpow.pop %v2903
    %v2905 = vmul.f32 %v2898, 1.442695
    %v2906 = vpow.pop %v2905
    %v2907 = vmul.f32 %v2899, 1.442695
    %v2908 = vpow.pop %v2907
    %v2909 = vmul.f32 %v2900, 1.442695
    %v2910 = vpow.pop %v2909
    %v2911 = vmul.f32 %v2901, 1.442695
    %v2912 = vpow.pop %v2911
    %v2913 = vmul.f32 %v2902, 1.442695
    %v2914 = vpow.pop %v2913
    %v2915 = vsel %vm776, %v2904, 0.0
    %2916 = vadd.xlane.f32.xlu0 %v2915
    %v2917 = vpop.xlane.xlu0 %2916
    %v2918 = vsel %vm776, %v2906, 0.0
    %2919 = vadd.xlane.f32.xlu0 %v2918
    %v2920 = vpop.xlane.xlu0 %2919
    %v2921 = vsel %vm776, %v2908, 0.0
    %2922 = vadd.xlane.f32.xlu0 %v2921
    %v2923 = vpop.xlane.xlu0 %2922
    %v2924 = vsel %vm776, %v2910, 0.0
    %2925 = vadd.xlane.f32.xlu0 %v2924
    %v2926 = vpop.xlane.xlu0 %2925
    %v2927 = vsel %vm776, %v2912, 0.0
    %2928 = vadd.xlane.f32.xlu0 %v2927
    %v2929 = vpop.xlane.xlu0 %2928
    %v2930 = vsel %vm776, %v2914, 0.0
    %2931 = vadd.xlane.f32.xlu0 %v2930
    %v2932 = vpop.xlane.xlu0 %2931
    %v2933 = vrcp.pop %v2917
    %v2934 = vrcp.pop %v2920
    %v2935 = vrcp.pop %v2923
    %v2936 = vrcp.pop %v2926
    %v2937 = vrcp.pop %v2929
    %v2938 = vrcp.pop %v2932
    %v2939 = vmul.f32 %v2904, %v2933
    %v2940 = vmul.f32 %v2906, %v2934
    %v2941 = vmul.f32 %v2908, %v2935
    %v2942 = vmul.f32 %v2910, %v2936
    %v2943 = vmul.f32 %v2912, %v2937
    %v2944 = vmul.f32 %v2914, %v2938
    %v2945 = vpack.c.bf16 %v2940, %v2939
    %v2946 = vpack.c.bf16 %v2941, %v2941
    %v2947 = vpack.c.bf16 %v2943, %v2942
    %v2948 = vpack.c.bf16 %v2944, %v2944
    %2949 = vrot.lane.b32.xlu0 %v2731, 64
    %v2950 = vpop.permute.xlu0 %2949
    %2951 = vrot.lane.b32.xlu0 %v2732, 64
    %v2952 = vpop.permute.xlu0 %2951
    %v2955 = vsel %vm776, %v2945, 0
    %v2958 = vsel %vm776, %v2946, 0
    %v2961 = vsel %vm858, %v2952, 0
    %2963 = vmatprep.subr.bf16.mxu0 0
    %2964 = vmatpush1.bf16.msra.mxu0 %v2950
    %2965 = vmatprep.subr.bf16.mxu0 0
    %2966 = vmatpush1.bf16.msra.mxu0 %v2961
    %2967 = vmatprep.subr.bf16.mxu0 0
    %2968 = vmatpush1.bf16.msra.mxu0 0
    %2969 = vmatprep.subr.bf16.mxu0 0
    %2970 = vmatpush1.bf16.msra.mxu0 0
    %2971 = vmatprep.subr.bf16.mxu0 0
    %2972 = vmatpush1.bf16.msra.mxu0 0
    %2973 = vmatprep.subr.bf16.mxu0 0
    %2974 = vmatpush1.bf16.msra.mxu0 0
    %2975 = vmatprep.subr.bf16.mxu0 0
    %2976 = vmatpush1.bf16.msra.mxu0 0
    %2977 = vmatprep.subr.bf16.mxu0 0
    %2978 = vmatpush1.bf16.msra.mxu0 0
    %2979 = vmatprep.subr.bf16.mxu0 0
    %2980 = vmatpush1.bf16.msra.mxu0 0
    %2981 = vmatprep.subr.bf16.mxu0 0
    %2982 = vmatpush1.bf16.msra.mxu0 0
    %2983 = vmatprep.subr.bf16.mxu0 0
    %2984 = vmatpush1.bf16.msra.mxu0 0
    %2985 = vmatprep.subr.bf16.mxu0 0
    %2986 = vmatpush1.bf16.msra.mxu0 0
    %2987 = vmatprep.subr.bf16.mxu0 0
    %2988 = vmatpush1.bf16.msra.mxu0 0
    %2989 = vmatprep.subr.bf16.mxu0 0
    %2990 = vmatpush1.bf16.msra.mxu0 0
    %2991 = vmatprep.subr.bf16.mxu0 0
    %2992 = vmatpush1.bf16.msra.mxu0 0
    %2993 = vmatprep.subr.bf16.mxu0 0
    %2994 = vmatpush1.bf16.msra.mxu0 0
    %2995 = vmatprep.mubr.bf16.mxu0 0
    %2996 = vmatmul.mubr.bf16.gmra.mrb[0].mxu0 %v2955
    %v2997 = vpop.f32.mrb[0].mxu0
    %v2998 = vadd.f32 0.0, %v2997
    %v2999 = vpop.f32.mrb[0].mxu0
    %v3000 = vpop.f32.mrb[0].mxu0
    %v3001 = vadd.f32 0.0, %v3000
    %v3002 = vpop.f32.mrb[0].mxu0
    %3003 = vmatprep.mubr.bf16.mxu0 0
    %3004 = vmatmul.mubr.bf16.gmra.mrb[0].mxu0 %v2958
    %v3005 = vpop.f32.mrb[0].mxu0
    %v3006 = vadd.f32 0.0, %v3005
    %v3007 = vpop.f32.mrb[0].mxu0
    %v3008 = vpop.f32.mrb[0].mxu0
    %v3009 = vpop.f32.mrb[0].mxu0
    %3010 = vdwg.mxu0
    %3011 = vrot.lane.b32.xlu0 %v2733, 64
    %v3012 = vpop.permute.xlu0 %3011
    %3013 = vrot.lane.b32.xlu0 %v2734, 64
    %v3014 = vpop.permute.xlu0 %3013
    %v3017 = vsel %vm776, %v2947, 0
    %v3020 = vsel %vm776, %v2948, 0
    %v3023 = vsel %vm858, %v3014, 0
    %3025 = vmatprep.subr.bf16.mxu0 0
    %3026 = vmatpush1.bf16.msra.mxu0 %v3012
    %3027 = vmatprep.subr.bf16.mxu0 0
    %3028 = vmatpush1.bf16.msra.mxu0 %v3023
    %3029 = vmatprep.subr.bf16.mxu0 0
    %3030 = vmatpush1.bf16.msra.mxu0 0
    %3031 = vmatprep.subr.bf16.mxu0 0
    %3032 = vmatpush1.bf16.msra.mxu0 0
    %3033 = vmatprep.subr.bf16.mxu0 0
    %3034 = vmatpush1.bf16.msra.mxu0 0
    %3035 = vmatprep.subr.bf16.mxu0 0
    %3036 = vmatpush1.bf16.msra.mxu0 0
    %3037 = vmatprep.subr.bf16.mxu0 0
    %3038 = vmatpush1.bf16.msra.mxu0 0
    %3039 = vmatprep.subr.bf16.mxu0 0
    %3040 = vmatpush1.bf16.msra.mxu0 0
    %3041 = vmatprep.subr.bf16.mxu0 0
    %3042 = vmatpush1.bf16.msra.mxu0 0
    %3043 = vmatprep.subr.bf16.mxu0 0
    %3044 = vmatpush1.bf16.msra.mxu0 0
    %3045 = vmatprep.subr.bf16.mxu0 0
    %3046 = vmatpush1.bf16.msra.mxu0 0
    %3047 = vmatprep.subr.bf16.mxu0 0
    %3048 = vmatpush1.bf16.msra.mxu0 0
    %3049 = vmatprep.subr.bf16.mxu0 0
    %3050 = vmatpush1.bf16.msra.mxu0 0
    %3051 = vmatprep.subr.bf16.mxu0 0
    %3052 = vmatpush1.bf16.msra.mxu0 0
    %3053 = vmatprep.subr.bf16.mxu0 0
    %3054 = vmatpush1.bf16.msra.mxu0 0
    %3055 = vmatprep.subr.bf16.mxu0 0
    %3056 = vmatpush1.bf16.msra.mxu0 0
    %3057 = vmatprep.mubr.bf16.mxu0 0
    %3058 = vmatmul.mubr.bf16.gmra.mrb[0].mxu0 %v3017
    %v3059 = vpop.f32.mrb[0].mxu0
    %v3060 = vadd.f32 0.0, %v3059
    %v3061 = vpop.f32.mrb[0].mxu0
    %v3062 = vpop.f32.mrb[0].mxu0
    %v3063 = vadd.f32 0.0, %v3062
    %v3064 = vpop.f32.mrb[0].mxu0
    %3065 = vmatprep.mubr.bf16.mxu0 0
    %3066 = vmatmul.mubr.bf16.gmra.mrb[0].mxu0 %v3020
    %v3067 = vpop.f32.mrb[0].mxu0
    %v3068 = vadd.f32 0.0, %v3067
    %v3069 = vpop.f32.mrb[0].mxu0
    %v3070 = vpop.f32.mrb[0].mxu0
    %v3071 = vpop.f32.mrb[0].mxu0
    %3072 = vdwg.mxu0
    %3073 = vrot.lane.b32.xlu0 %v2731, 120
    %v3074 = vpop.permute.xlu0 %3073
    %3075 = vrot.lane.b32.xlu0 %v2732, 120
    %v3076 = vpop.permute.xlu0 %3075
    %3077 = vrot.lane.b32.xlu0 %v2731, 88
    %v3078 = vpop.permute.xlu0 %3077
    %3079 = vrot.lane.b32.xlu0 %v2732, 88
    %v3080 = vpop.permute.xlu0 %3079
    %v3082 = vsel %vm637, %v3074, 0
    %v3085 = vsel %vm637, %v3076, 0
    %v3088 = vsel %vm637, %v3078, 0
    %v3091 = vsel %vm637, %v3080, 0
    %3093 = vmatprep.subr.bf16.mxu0 0
    %3094 = vmatpush1.bf16.xpose.msra.mxu0 %v3088
    %3095 = vmatprep.subr.bf16.mxu0 0
    %3096 = vmatpush1.bf16.xpose.msra.mxu0 %v3091
    %3097 = vmatprep.subr.bf16.mxu0 0
    %3098 = vmatpush1.bf16.xpose.msra.mxu0 0
    %3099 = vmatprep.subr.bf16.mxu0 0
    %3100 = vmatpush1.bf16.xpose.msra.mxu0 0
    %3101 = vmatprep.subr.bf16.mxu0 0
    %3102 = vmatpush1.bf16.xpose.msra.mxu0 0
    %3103 = vmatprep.subr.bf16.mxu0 0
    %3104 = vmatpush1.bf16.xpose.msra.mxu0 0
    %3105 = vmatprep.subr.bf16.mxu0 0
    %3106 = vmatpush1.bf16.xpose.msra.mxu0 0
    %3107 = vmatprep.subr.bf16.mxu0 0
    %3108 = vmatpush1.bf16.xpose.msra.mxu0 0
    %3109 = vmatprep.subr.bf16.mxu0 0
    %3110 = vmatpush1.bf16.xpose.msra.mxu0 0
    %3111 = vmatprep.subr.bf16.mxu0 0
    %3112 = vmatpush1.bf16.xpose.msra.mxu0 0
    %3113 = vmatprep.subr.bf16.mxu0 0
    %3114 = vmatpush1.bf16.xpose.msra.mxu0 0
    %3115 = vmatprep.subr.bf16.mxu0 0
    %3116 = vmatpush1.bf16.xpose.msra.mxu0 0
    %3117 = vmatprep.subr.bf16.mxu0 0
    %3118 = vmatpush1.bf16.xpose.msra.mxu0 0
    %3119 = vmatprep.subr.bf16.mxu0 0
    %3120 = vmatpush1.bf16.xpose.msra.mxu0 0
    %3121 = vmatprep.subr.bf16.mxu0 0
    %3122 = vmatpush1.bf16.xpose.msra.mxu0 0
    %3123 = vmatprep.subr.bf16.mxu0 0
    %3124 = vmatpush1.bf16.xpose.msra.mxu0 0
    %3125 = vmatprep.mubr.bf16.mxu0 0
    %3126 = vmatmul.mubr.bf16.gmra.mrb[0].mxu0 %v3082
    %v3127 = vpop.f32.mrb[0].mxu0
    %v3128 = vadd.f32 0.0, %v3127
    %v3129 = vpop.f32.mrb[0].mxu0
    %v3130 = vpop.f32.mrb[0].mxu0
    %v3131 = vadd.f32 0.0, %v3130
    %v3132 = vpop.f32.mrb[0].mxu0
    %3133 = vmatprep.mubr.bf16.mxu0 0
    %3134 = vmatmul.mubr.bf16.gmra.mrb[0].mxu0 %v3085
    %v3135 = vpop.f32.mrb[0].mxu0
    %v3136 = vadd.f32 0.0, %v3135
    %v3137 = vpop.f32.mrb[0].mxu0
    %v3138 = vpop.f32.mrb[0].mxu0
    %v3139 = vpop.f32.mrb[0].mxu0
    %3140 = vdwg.mxu0
    %3141 = vrot.lane.b32.xlu0 %v2733, 120
    %v3142 = vpop.permute.xlu0 %3141
    %3143 = vrot.lane.b32.xlu0 %v2734, 120
    %v3144 = vpop.permute.xlu0 %3143
    %3145 = vrot.lane.b32.xlu0 %v2733, 88
    %v3146 = vpop.permute.xlu0 %3145
    %3147 = vrot.lane.b32.xlu0 %v2734, 88
    %v3148 = vpop.permute.xlu0 %3147
    %v3150 = vsel %vm637, %v3142, 0
    %v3153 = vsel %vm637, %v3144, 0
    %v3156 = vsel %vm637, %v3146, 0
    %v3159 = vsel %vm637, %v3148, 0
    %3161 = vmatprep.subr.bf16.mxu0 0
    %3162 = vmatpush1.bf16.xpose.msra.mxu0 %v3156
    %3163 = vmatprep.subr.bf16.mxu0 0
    %3164 = vmatpush1.bf16.xpose.msra.mxu0 %v3159
    %3165 = vmatprep.subr.bf16.mxu0 0
    %3166 = vmatpush1.bf16.xpose.msra.mxu0 0
    %3167 = vmatprep.subr.bf16.mxu0 0
    %3168 = vmatpush1.bf16.xpose.msra.mxu0 0
    %3169 = vmatprep.subr.bf16.mxu0 0
    %3170 = vmatpush1.bf16.xpose.msra.mxu0 0
    %3171 = vmatprep.subr.bf16.mxu0 0
    %3172 = vmatpush1.bf16.xpose.msra.mxu0 0
    %3173 = vmatprep.subr.bf16.mxu0 0
    %3174 = vmatpush1.bf16.xpose.msra.mxu0 0
    %3175 = vmatprep.subr.bf16.mxu0 0
    %3176 = vmatpush1.bf16.xpose.msra.mxu0 0
    %3177 = vmatprep.subr.bf16.mxu0 0
    %3178 = vmatpush1.bf16.xpose.msra.mxu0 0
    %3179 = vmatprep.subr.bf16.mxu0 0
    %3180 = vmatpush1.bf16.xpose.msra.mxu0 0
    %3181 = vmatprep.subr.bf16.mxu0 0
    %3182 = vmatpush1.bf16.xpose.msra.mxu0 0
    %3183 = vmatprep.subr.bf16.mxu0 0
    %3184 = vmatpush1.bf16.xpose.msra.mxu0 0
    %3185 = vmatprep.subr.bf16.mxu0 0
    %3186 = vmatpush1.bf16.xpose.msra.mxu0 0
    %3187 = vmatprep.subr.bf16.mxu0 0
    %3188 = vmatpush1.bf16.xpose.msra.mxu0 0
    %3189 = vmatprep.subr.bf16.mxu0 0
    %3190 = vmatpush1.bf16.xpose.msra.mxu0 0
    %3191 = vmatprep.subr.bf16.mxu0 0
    %3192 = vmatpush1.bf16.xpose.msra.mxu0 0
    %3193 = vmatprep.mubr.bf16.mxu0 0
    %3194 = vmatmul.mubr.bf16.gmra.mrb[0].mxu0 %v3150
    %v3195 = vpop.f32.mrb[0].mxu0
    %v3196 = vadd.f32 0.0, %v3195
    %v3197 = vpop.f32.mrb[0].mxu0
    %v3198 = vpop.f32.mrb[0].mxu0
    %v3199 = vadd.f32 0.0, %v3198
    %v3200 = vpop.f32.mrb[0].mxu0
    %3201 = vmatprep.mubr.bf16.mxu0 0
    %3202 = vmatmul.mubr.bf16.gmra.mrb[0].mxu0 %v3153
    %v3203 = vpop.f32.mrb[0].mxu0
    %v3204 = vadd.f32 0.0, %v3203
    %v3205 = vpop.f32.mrb[0].mxu0
    %v3206 = vpop.f32.mrb[0].mxu0
    %v3207 = vpop.f32.mrb[0].mxu0
    %3208 = vdwg.mxu0
    %v3209 = vmul.f32 %v3128, 0.35355338
    %v3210 = vmul.f32 %v3131, 0.35355338
    %v3211 = vmul.f32 %v3136, 0.35355338
    %v3212 = vmul.f32 %v3196, 0.35355338
    %v3213 = vmul.f32 %v3199, 0.35355338
    %v3214 = vmul.f32 %v3204, 0.35355338
    %v3215 = vadd.f32 %v3209, %v437
    %v3216 = vadd.f32 %v3210, %v437
    %v3217 = vadd.f32 %v3211, %v437
    %v3218 = vadd.f32 %v3212, %v437
    %v3219 = vadd.f32 %v3213, %v437
    %v3220 = vadd.f32 %v3214, %v437
    %v3221 = vsel %vm776, %v3215, -inf
    %3222 = vmax.xlane.f32.xlu0 %v3221
    %v3223 = vpop.xlane.xlu0 %3222
    %v3224 = vsel %vm776, %v3216, -inf
    %3225 = vmax.xlane.f32.xlu0 %v3224
    %v3226 = vpop.xlane.xlu0 %3225
    %v3227 = vsel %vm776, %v3217, -inf
    %3228 = vmax.xlane.f32.xlu0 %v3227
    %v3229 = vpop.xlane.xlu0 %3228
    %v3230 = vsel %vm776, %v3218, -inf
    %3231 = vmax.xlane.f32.xlu0 %v3230
    %v3232 = vpop.xlane.xlu0 %3231
    %v3233 = vsel %vm776, %v3219, -inf
    %3234 = vmax.xlane.f32.xlu0 %v3233
    %v3235 = vpop.xlane.xlu0 %3234
    %v3236 = vsel %vm776, %v3220, -inf
    %3237 = vmax.xlane.f32.xlu0 %v3236
    %v3238 = vpop.xlane.xlu0 %3237
    %v3239 = vsub.f32 %v3215, %v3223
    %v3240 = vsub.f32 %v3216, %v3226
    %v3241 = vsub.f32 %v3217, %v3229
    %v3242 = vsub.f32 %v3218, %v3232
    %v3243 = vsub.f32 %v3219, %v3235
    %v3244 = vsub.f32 %v3220, %v3238
    %v3245 = vmul.f32 %v3239, 1.442695
    %v3246 = vpow.pop %v3245
    %v3247 = vmul.f32 %v3240, 1.442695
    %v3248 = vpow.pop %v3247
    %v3249 = vmul.f32 %v3241, 1.442695
    %v3250 = vpow.pop %v3249
    %v3251 = vmul.f32 %v3242, 1.442695
    %v3252 = vpow.pop %v3251
    %v3253 = vmul.f32 %v3243, 1.442695
    %v3254 = vpow.pop %v3253
    %v3255 = vmul.f32 %v3244, 1.442695
    %v3256 = vpow.pop %v3255
    %v3257 = vsel %vm776, %v3246, 0.0
    %3258 = vadd.xlane.f32.xlu0 %v3257
    %v3259 = vpop.xlane.xlu0 %3258
    %v3260 = vsel %vm776, %v3248, 0.0
    %3261 = vadd.xlane.f32.xlu0 %v3260
    %v3262 = vpop.xlane.xlu0 %3261
    %v3263 = vsel %vm776, %v3250, 0.0
    %3264 = vadd.xlane.f32.xlu0 %v3263
    %v3265 = vpop.xlane.xlu0 %3264
    %v3266 = vsel %vm776, %v3252, 0.0
    %3267 = vadd.xlane.f32.xlu0 %v3266
    %v3268 = vpop.xlane.xlu0 %3267
    %v3269 = vsel %vm776, %v3254, 0.0
    %3270 = vadd.xlane.f32.xlu0 %v3269
    %v3271 = vpop.xlane.xlu0 %3270
    %v3272 = vsel %vm776, %v3256, 0.0
    %3273 = vadd.xlane.f32.xlu0 %v3272
    %v3274 = vpop.xlane.xlu0 %3273
    %v3275 = vrcp.pop %v3259
    %v3276 = vrcp.pop %v3262
    %v3277 = vrcp.pop %v3265
    %v3278 = vrcp.pop %v3268
    %v3279 = vrcp.pop %v3271
    %v3280 = vrcp.pop %v3274
    %v3281 = vmul.f32 %v3246, %v3275
    %v3282 = vmul.f32 %v3248, %v3276
    %v3283 = vmul.f32 %v3250, %v3277
    %v3284 = vmul.f32 %v3252, %v3278
    %v3285 = vmul.f32 %v3254, %v3279
    %v3286 = vmul.f32 %v3256, %v3280
    %v3287 = vpack.c.bf16 %v3282, %v3281
    %v3288 = vpack.c.bf16 %v3283, %v3283
    %v3289 = vpack.c.bf16 %v3285, %v3284
    %v3290 = vpack.c.bf16 %v3286, %v3286
    %3291 = vrot.lane.b32.xlu0 %v2731, 56
    %v3292 = vpop.permute.xlu0 %3291
    %3293 = vrot.lane.b32.xlu0 %v2732, 56
    %v3294 = vpop.permute.xlu0 %3293
    %v3297 = vsel %vm776, %v3287, 0
    %v3300 = vsel %vm776, %v3288, 0
    %v3303 = vsel %vm858, %v3294, 0
    %3305 = vmatprep.subr.bf16.mxu0 0
    %3306 = vmatpush1.bf16.msra.mxu0 %v3292
    %3307 = vmatprep.subr.bf16.mxu0 0
    %3308 = vmatpush1.bf16.msra.mxu0 %v3303
    %3309 = vmatprep.subr.bf16.mxu0 0
    %3310 = vmatpush1.bf16.msra.mxu0 0
    %3311 = vmatprep.subr.bf16.mxu0 0
    %3312 = vmatpush1.bf16.msra.mxu0 0
    %3313 = vmatprep.subr.bf16.mxu0 0
    %3314 = vmatpush1.bf16.msra.mxu0 0
    %3315 = vmatprep.subr.bf16.mxu0 0
    %3316 = vmatpush1.bf16.msra.mxu0 0
    %3317 = vmatprep.subr.bf16.mxu0 0
    %3318 = vmatpush1.bf16.msra.mxu0 0
    %3319 = vmatprep.subr.bf16.mxu0 0
    %3320 = vmatpush1.bf16.msra.mxu0 0
    %3321 = vmatprep.subr.bf16.mxu0 0
    %3322 = vmatpush1.bf16.msra.mxu0 0
    %3323 = vmatprep.subr.bf16.mxu0 0
    %3324 = vmatpush1.bf16.msra.mxu0 0
    %3325 = vmatprep.subr.bf16.mxu0 0
    %3326 = vmatpush1.bf16.msra.mxu0 0
    %3327 = vmatprep.subr.bf16.mxu0 0
    %3328 = vmatpush1.bf16.msra.mxu0 0
    %3329 = vmatprep.subr.bf16.mxu0 0
    %3330 = vmatpush1.bf16.msra.mxu0 0
    %3331 = vmatprep.subr.bf16.mxu0 0
    %3332 = vmatpush1.bf16.msra.mxu0 0
    %3333 = vmatprep.subr.bf16.mxu0 0
    %3334 = vmatpush1.bf16.msra.mxu0 0
    %3335 = vmatprep.subr.bf16.mxu0 0
    %3336 = vmatpush1.bf16.msra.mxu0 0
    %3337 = vmatprep.mubr.bf16.mxu0 0
    %3338 = vmatmul.mubr.bf16.gmra.mrb[0].mxu0 %v3297
    %v3339 = vpop.f32.mrb[0].mxu0
    %v3340 = vadd.f32 0.0, %v3339
    %v3341 = vpop.f32.mrb[0].mxu0
    %v3342 = vpop.f32.mrb[0].mxu0
    %v3343 = vadd.f32 0.0, %v3342
    %v3344 = vpop.f32.mrb[0].mxu0
    %3345 = vmatprep.mubr.bf16.mxu0 0
    %3346 = vmatmul.mubr.bf16.gmra.mrb[0].mxu0 %v3300
    %v3347 = vpop.f32.mrb[0].mxu0
    %v3348 = vadd.f32 0.0, %v3347
    %v3349 = vpop.f32.mrb[0].mxu0
    %v3350 = vpop.f32.mrb[0].mxu0
    %v3351 = vpop.f32.mrb[0].mxu0
    %3352 = vdwg.mxu0
    %3353 = vrot.lane.b32.xlu0 %v2733, 56
    %v3354 = vpop.permute.xlu0 %3353
    %3355 = vrot.lane.b32.xlu0 %v2734, 56
    %v3356 = vpop.permute.xlu0 %3355
    %v3359 = vsel %vm776, %v3289, 0
    %v3362 = vsel %vm776, %v3290, 0
    %v3365 = vsel %vm858, %v3356, 0
    %3367 = vmatprep.subr.bf16.mxu0 0
    %3368 = vmatpush1.bf16.msra.mxu0 %v3354
    %3369 = vmatprep.subr.bf16.mxu0 0
    %3370 = vmatpush1.bf16.msra.mxu0 %v3365
    %3371 = vmatprep.subr.bf16.mxu0 0
    %3372 = vmatpush1.bf16.msra.mxu0 0
    %3373 = vmatprep.subr.bf16.mxu0 0
    %3374 = vmatpush1.bf16.msra.mxu0 0
    %3375 = vmatprep.subr.bf16.mxu0 0
    %3376 = vmatpush1.bf16.msra.mxu0 0
    %3377 = vmatprep.subr.bf16.mxu0 0
    %3378 = vmatpush1.bf16.msra.mxu0 0
    %3379 = vmatprep.subr.bf16.mxu0 0
    %3380 = vmatpush1.bf16.msra.mxu0 0
    %3381 = vmatprep.subr.bf16.mxu0 0
    %3382 = vmatpush1.bf16.msra.mxu0 0
    %3383 = vmatprep.subr.bf16.mxu0 0
    %3384 = vmatpush1.bf16.msra.mxu0 0
    %3385 = vmatprep.subr.bf16.mxu0 0
    %3386 = vmatpush1.bf16.msra.mxu0 0
    %3387 = vmatprep.subr.bf16.mxu0 0
    %3388 = vmatpush1.bf16.msra.mxu0 0
    %3389 = vmatprep.subr.bf16.mxu0 0
    %3390 = vmatpush1.bf16.msra.mxu0 0
    %3391 = vmatprep.subr.bf16.mxu0 0
    %3392 = vmatpush1.bf16.msra.mxu0 0
    %3393 = vmatprep.subr.bf16.mxu0 0
    %3394 = vmatpush1.bf16.msra.mxu0 0
    %3395 = vmatprep.subr.bf16.mxu0 0
    %3396 = vmatpush1.bf16.msra.mxu0 0
    %3397 = vmatprep.subr.bf16.mxu0 0
    %3398 = vmatpush1.bf16.msra.mxu0 0
    %3399 = vmatprep.mubr.bf16.mxu0 0
    %3400 = vmatmul.mubr.bf16.gmra.mrb[0].mxu0 %v3359
    %v3401 = vpop.f32.mrb[0].mxu0
    %v3402 = vadd.f32 0.0, %v3401
    %v3403 = vpop.f32.mrb[0].mxu0
    %v3404 = vpop.f32.mrb[0].mxu0
    %v3405 = vadd.f32 0.0, %v3404
    %v3406 = vpop.f32.mrb[0].mxu0
    %3407 = vmatprep.mubr.bf16.mxu0 0
    %3408 = vmatmul.mubr.bf16.gmra.mrb[0].mxu0 %v3362
    %v3409 = vpop.f32.mrb[0].mxu0
    %v3410 = vadd.f32 0.0, %v3409
    %v3411 = vpop.f32.mrb[0].mxu0
    %v3412 = vpop.f32.mrb[0].mxu0
    %v3413 = vpop.f32.mrb[0].mxu0
    %3414 = vdwg.mxu0
    %3415 = vrot.lane.b32.xlu0 %v2731, 112
    %v3416 = vpop.permute.xlu0 %3415
    %3417 = vrot.lane.b32.xlu0 %v2732, 112
    %v3418 = vpop.permute.xlu0 %3417
    %3419 = vrot.lane.b32.xlu0 %v2731, 80
    %v3420 = vpop.permute.xlu0 %3419
    %3421 = vrot.lane.b32.xlu0 %v2732, 80
    %v3422 = vpop.permute.xlu0 %3421
    %v3424 = vsel %vm637, %v3416, 0
    %v3427 = vsel %vm637, %v3418, 0
    %v3430 = vsel %vm637, %v3420, 0
    %v3433 = vsel %vm637, %v3422, 0
    %3435 = vmatprep.subr.bf16.mxu0 0
    %3436 = vmatpush1.bf16.xpose.msra.mxu0 %v3430
    %3437 = vmatprep.subr.bf16.mxu0 0
    %3438 = vmatpush1.bf16.xpose.msra.mxu0 %v3433
    %3439 = vmatprep.subr.bf16.mxu0 0
    %3440 = vmatpush1.bf16.xpose.msra.mxu0 0
    %3441 = vmatprep.subr.bf16.mxu0 0
    %3442 = vmatpush1.bf16.xpose.msra.mxu0 0
    %3443 = vmatprep.subr.bf16.mxu0 0
    %3444 = vmatpush1.bf16.xpose.msra.mxu0 0
    %3445 = vmatprep.subr.bf16.mxu0 0
    %3446 = vmatpush1.bf16.xpose.msra.mxu0 0
    %3447 = vmatprep.subr.bf16.mxu0 0
    %3448 = vmatpush1.bf16.xpose.msra.mxu0 0
    %3449 = vmatprep.subr.bf16.mxu0 0
    %3450 = vmatpush1.bf16.xpose.msra.mxu0 0
    %3451 = vmatprep.subr.bf16.mxu0 0
    %3452 = vmatpush1.bf16.xpose.msra.mxu0 0
    %3453 = vmatprep.subr.bf16.mxu0 0
    %3454 = vmatpush1.bf16.xpose.msra.mxu0 0
    %3455 = vmatprep.subr.bf16.mxu0 0
    %3456 = vmatpush1.bf16.xpose.msra.mxu0 0
    %3457 = vmatprep.subr.bf16.mxu0 0
    %3458 = vmatpush1.bf16.xpose.msra.mxu0 0
    %3459 = vmatprep.subr.bf16.mxu0 0
    %3460 = vmatpush1.bf16.xpose.msra.mxu0 0
    %3461 = vmatprep.subr.bf16.mxu0 0
    %3462 = vmatpush1.bf16.xpose.msra.mxu0 0
    %3463 = vmatprep.subr.bf16.mxu0 0
    %3464 = vmatpush1.bf16.xpose.msra.mxu0 0
    %3465 = vmatprep.subr.bf16.mxu0 0
    %3466 = vmatpush1.bf16.xpose.msra.mxu0 0
    %3467 = vmatprep.mubr.bf16.mxu0 0
    %3468 = vmatmul.mubr.bf16.gmra.mrb[0].mxu0 %v3424
    %v3469 = vpop.f32.mrb[0].mxu0
    %v3470 = vadd.f32 0.0, %v3469
    %v3471 = vpop.f32.mrb[0].mxu0
    %v3472 = vpop.f32.mrb[0].mxu0
    %v3473 = vadd.f32 0.0, %v3472
    %v3474 = vpop.f32.mrb[0].mxu0
    %3475 = vmatprep.mubr.bf16.mxu0 0
    %3476 = vmatmul.mubr.bf16.gmra.mrb[0].mxu0 %v3427
    %v3477 = vpop.f32.mrb[0].mxu0
    %v3478 = vadd.f32 0.0, %v3477
    %v3479 = vpop.f32.mrb[0].mxu0
    %v3480 = vpop.f32.mrb[0].mxu0
    %v3481 = vpop.f32.mrb[0].mxu0
    %3482 = vdwg.mxu0
    %3483 = vrot.lane.b32.xlu0 %v2733, 112
    %v3484 = vpop.permute.xlu0 %3483
    %3485 = vrot.lane.b32.xlu0 %v2734, 112
    %v3486 = vpop.permute.xlu0 %3485
    %3487 = vrot.lane.b32.xlu0 %v2733, 80
    %v3488 = vpop.permute.xlu0 %3487
    %3489 = vrot.lane.b32.xlu0 %v2734, 80
    %v3490 = vpop.permute.xlu0 %3489
    %v3492 = vsel %vm637, %v3484, 0
    %v3495 = vsel %vm637, %v3486, 0
    %v3498 = vsel %vm637, %v3488, 0
    %v3501 = vsel %vm637, %v3490, 0
    %3503 = vmatprep.subr.bf16.mxu0 0
    %3504 = vmatpush1.bf16.xpose.msra.mxu0 %v3498
    %3505 = vmatprep.subr.bf16.mxu0 0
    %3506 = vmatpush1.bf16.xpose.msra.mxu0 %v3501
    %3507 = vmatprep.subr.bf16.mxu0 0
    %3508 = vmatpush1.bf16.xpose.msra.mxu0 0
    %3509 = vmatprep.subr.bf16.mxu0 0
    %3510 = vmatpush1.bf16.xpose.msra.mxu0 0
    %3511 = vmatprep.subr.bf16.mxu0 0
    %3512 = vmatpush1.bf16.xpose.msra.mxu0 0
    %3513 = vmatprep.subr.bf16.mxu0 0
    %3514 = vmatpush1.bf16.xpose.msra.mxu0 0
    %3515 = vmatprep.subr.bf16.mxu0 0
    %3516 = vmatpush1.bf16.xpose.msra.mxu0 0
    %3517 = vmatprep.subr.bf16.mxu0 0
    %3518 = vmatpush1.bf16.xpose.msra.mxu0 0
    %3519 = vmatprep.subr.bf16.mxu0 0
    %3520 = vmatpush1.bf16.xpose.msra.mxu0 0
    %3521 = vmatprep.subr.bf16.mxu0 0
    %3522 = vmatpush1.bf16.xpose.msra.mxu0 0
    %3523 = vmatprep.subr.bf16.mxu0 0
    %3524 = vmatpush1.bf16.xpose.msra.mxu0 0
    %3525 = vmatprep.subr.bf16.mxu0 0
    %3526 = vmatpush1.bf16.xpose.msra.mxu0 0
    %3527 = vmatprep.subr.bf16.mxu0 0
    %3528 = vmatpush1.bf16.xpose.msra.mxu0 0
    %3529 = vmatprep.subr.bf16.mxu0 0
    %3530 = vmatpush1.bf16.xpose.msra.mxu0 0
    %3531 = vmatprep.subr.bf16.mxu0 0
    %3532 = vmatpush1.bf16.xpose.msra.mxu0 0
    %3533 = vmatprep.subr.bf16.mxu0 0
    %3534 = vmatpush1.bf16.xpose.msra.mxu0 0
    %3535 = vmatprep.mubr.bf16.mxu0 0
    %3536 = vmatmul.mubr.bf16.gmra.mrb[0].mxu0 %v3492
    %v3537 = vpop.f32.mrb[0].mxu0
    %v3538 = vadd.f32 0.0, %v3537
    %v3539 = vpop.f32.mrb[0].mxu0
    %v3540 = vpop.f32.mrb[0].mxu0
    %v3541 = vadd.f32 0.0, %v3540
    %v3542 = vpop.f32.mrb[0].mxu0
    %3543 = vmatprep.mubr.bf16.mxu0 0
    %3544 = vmatmul.mubr.bf16.gmra.mrb[0].mxu0 %v3495
    %v3545 = vpop.f32.mrb[0].mxu0
    %v3546 = vadd.f32 0.0, %v3545
    %v3547 = vpop.f32.mrb[0].mxu0
    %v3548 = vpop.f32.mrb[0].mxu0
    %v3549 = vpop.f32.mrb[0].mxu0
    %3550 = vdwg.mxu0
    %v3551 = vmul.f32 %v3470, 0.35355338
    %v3552 = vmul.f32 %v3473, 0.35355338
    %v3553 = vmul.f32 %v3478, 0.35355338
    %v3554 = vmul.f32 %v3538, 0.35355338
    %v3555 = vmul.f32 %v3541, 0.35355338
    %v3556 = vmul.f32 %v3546, 0.35355338
    %v3557 = vadd.f32 %v3551, %v437
    %v3558 = vadd.f32 %v3552, %v437
    %v3559 = vadd.f32 %v3553, %v437
    %v3560 = vadd.f32 %v3554, %v437
    %v3561 = vadd.f32 %v3555, %v437
    %v3562 = vadd.f32 %v3556, %v437
    %v3563 = vsel %vm776, %v3557, -inf
    %3564 = vmax.xlane.f32.xlu0 %v3563
    %v3565 = vpop.xlane.xlu0 %3564
    %v3566 = vsel %vm776, %v3558, -inf
    %3567 = vmax.xlane.f32.xlu0 %v3566
    %v3568 = vpop.xlane.xlu0 %3567
    %v3569 = vsel %vm776, %v3559, -inf
    %3570 = vmax.xlane.f32.xlu0 %v3569
    %v3571 = vpop.xlane.xlu0 %3570
    %v3572 = vsel %vm776, %v3560, -inf
    %3573 = vmax.xlane.f32.xlu0 %v3572
    %v3574 = vpop.xlane.xlu0 %3573
    %v3575 = vsel %vm776, %v3561, -inf
    %3576 = vmax.xlane.f32.xlu0 %v3575
    %v3577 = vpop.xlane.xlu0 %3576
    %v3578 = vsel %vm776, %v3562, -inf
    %3579 = vmax.xlane.f32.xlu0 %v3578
    %v3580 = vpop.xlane.xlu0 %3579
    %v3581 = vsub.f32 %v3557, %v3565
    %v3582 = vsub.f32 %v3558, %v3568
    %v3583 = vsub.f32 %v3559, %v3571
    %v3584 = vsub.f32 %v3560, %v3574
    %v3585 = vsub.f32 %v3561, %v3577
    %v3586 = vsub.f32 %v3562, %v3580
    %v3587 = vmul.f32 %v3581, 1.442695
    %v3588 = vpow.pop %v3587
    %v3589 = vmul.f32 %v3582, 1.442695
    %v3590 = vpow.pop %v3589
    %v3591 = vmul.f32 %v3583, 1.442695
    %v3592 = vpow.pop %v3591
    %v3593 = vmul.f32 %v3584, 1.442695
    %v3594 = vpow.pop %v3593
    %v3595 = vmul.f32 %v3585, 1.442695
    %v3596 = vpow.pop %v3595
    %v3597 = vmul.f32 %v3586, 1.442695
    %v3598 = vpow.pop %v3597
    %v3599 = vsel %vm776, %v3588, 0.0
    %3600 = vadd.xlane.f32.xlu0 %v3599
    %v3601 = vpop.xlane.xlu0 %3600
    %v3602 = vsel %vm776, %v3590, 0.0
    %3603 = vadd.xlane.f32.xlu0 %v3602
    %v3604 = vpop.xlane.xlu0 %3603
    %v3605 = vsel %vm776, %v3592, 0.0
    %3606 = vadd.xlane.f32.xlu0 %v3605
    %v3607 = vpop.xlane.xlu0 %3606
    %v3608 = vsel %vm776, %v3594, 0.0
    %3609 = vadd.xlane.f32.xlu0 %v3608
    %v3610 = vpop.xlane.xlu0 %3609
    %v3611 = vsel %vm776, %v3596, 0.0
    %3612 = vadd.xlane.f32.xlu0 %v3611
    %v3613 = vpop.xlane.xlu0 %3612
    %v3614 = vsel %vm776, %v3598, 0.0
    %3615 = vadd.xlane.f32.xlu0 %v3614
    %v3616 = vpop.xlane.xlu0 %3615
    %v3617 = vrcp.pop %v3601
    %v3618 = vrcp.pop %v3604
    %v3619 = vrcp.pop %v3607
    %v3620 = vrcp.pop %v3610
    %v3621 = vrcp.pop %v3613
    %v3622 = vrcp.pop %v3616
    %v3623 = vmul.f32 %v3588, %v3617
    %v3624 = vmul.f32 %v3590, %v3618
    %v3625 = vmul.f32 %v3592, %v3619
    %v3626 = vmul.f32 %v3594, %v3620
    %v3627 = vmul.f32 %v3596, %v3621
    %v3628 = vmul.f32 %v3598, %v3622
    %v3629 = vpack.c.bf16 %v3624, %v3623
    %v3630 = vpack.c.bf16 %v3625, %v3625
    %v3631 = vpack.c.bf16 %v3627, %v3626
    %v3632 = vpack.c.bf16 %v3628, %v3628
    %3633 = vrot.lane.b32.xlu0 %v2731, 48
    %v3634 = vpop.permute.xlu0 %3633
    %3635 = vrot.lane.b32.xlu0 %v2732, 48
    %v3636 = vpop.permute.xlu0 %3635
    %v3639 = vsel %vm776, %v3629, 0
    %v3642 = vsel %vm776, %v3630, 0
    %v3645 = vsel %vm858, %v3636, 0
    %3647 = vmatprep.subr.bf16.mxu0 0
    %3648 = vmatpush1.bf16.msra.mxu0 %v3634
    %3649 = vmatprep.subr.bf16.mxu0 0
    %3650 = vmatpush1.bf16.msra.mxu0 %v3645
    %3651 = vmatprep.subr.bf16.mxu0 0
    %3652 = vmatpush1.bf16.msra.mxu0 0
    %3653 = vmatprep.subr.bf16.mxu0 0
    %3654 = vmatpush1.bf16.msra.mxu0 0
    %3655 = vmatprep.subr.bf16.mxu0 0
    %3656 = vmatpush1.bf16.msra.mxu0 0
    %3657 = vmatprep.subr.bf16.mxu0 0
    %3658 = vmatpush1.bf16.msra.mxu0 0
    %3659 = vmatprep.subr.bf16.mxu0 0
    %3660 = vmatpush1.bf16.msra.mxu0 0
    %3661 = vmatprep.subr.bf16.mxu0 0
    %3662 = vmatpush1.bf16.msra.mxu0 0
    %3663 = vmatprep.subr.bf16.mxu0 0
    %3664 = vmatpush1.bf16.msra.mxu0 0
    %3665 = vmatprep.subr.bf16.mxu0 0
    %3666 = vmatpush1.bf16.msra.mxu0 0
    %3667 = vmatprep.subr.bf16.mxu0 0
    %3668 = vmatpush1.bf16.msra.mxu0 0
    %3669 = vmatprep.subr.bf16.mxu0 0
    %3670 = vmatpush1.bf16.msra.mxu0 0
    %3671 = vmatprep.subr.bf16.mxu0 0
    %3672 = vmatpush1.bf16.msra.mxu0 0
    %3673 = vmatprep.subr.bf16.mxu0 0
    %3674 = vmatpush1.bf16.msra.mxu0 0
    %3675 = vmatprep.subr.bf16.mxu0 0
    %3676 = vmatpush1.bf16.msra.mxu0 0
    %3677 = vmatprep.subr.bf16.mxu0 0
    %3678 = vmatpush1.bf16.msra.mxu0 0
    %3679 = vmatprep.mubr.bf16.mxu0 0
    %3680 = vmatmul.mubr.bf16.gmra.mrb[0].mxu0 %v3639
    %v3681 = vpop.f32.mrb[0].mxu0
    %v3682 = vadd.f32 0.0, %v3681
    %v3683 = vpop.f32.mrb[0].mxu0
    %v3684 = vpop.f32.mrb[0].mxu0
    %v3685 = vadd.f32 0.0, %v3684
    %v3686 = vpop.f32.mrb[0].mxu0
    %3687 = vmatprep.mubr.bf16.mxu0 0
    %3688 = vmatmul.mubr.bf16.gmra.mrb[0].mxu0 %v3642
    %v3689 = vpop.f32.mrb[0].mxu0
    %v3690 = vadd.f32 0.0, %v3689
    %v3691 = vpop.f32.mrb[0].mxu0
    %v3692 = vpop.f32.mrb[0].mxu0
    %v3693 = vpop.f32.mrb[0].mxu0
    %3694 = vdwg.mxu0
    %3695 = vrot.lane.b32.xlu0 %v2733, 48
    %v3696 = vpop.permute.xlu0 %3695
    %3697 = vrot.lane.b32.xlu0 %v2734, 48
    %v3698 = vpop.permute.xlu0 %3697
    %v3701 = vsel %vm776, %v3631, 0
    %v3704 = vsel %vm776, %v3632, 0
    %v3707 = vsel %vm858, %v3698, 0
    %3709 = vmatprep.subr.bf16.mxu0 0
    %3710 = vmatpush1.bf16.msra.mxu0 %v3696
    %3711 = vmatprep.subr.bf16.mxu0 0
    %3712 = vmatpush1.bf16.msra.mxu0 %v3707
    %3713 = vmatprep.subr.bf16.mxu0 0
    %3714 = vmatpush1.bf16.msra.mxu0 0
    %3715 = vmatprep.subr.bf16.mxu0 0
    %3716 = vmatpush1.bf16.msra.mxu0 0
    %3717 = vmatprep.subr.bf16.mxu0 0
    %3718 = vmatpush1.bf16.msra.mxu0 0
    %3719 = vmatprep.subr.bf16.mxu0 0
    %3720 = vmatpush1.bf16.msra.mxu0 0
    %3721 = vmatprep.subr.bf16.mxu0 0
    %3722 = vmatpush1.bf16.msra.mxu0 0
    %3723 = vmatprep.subr.bf16.mxu0 0
    %3724 = vmatpush1.bf16.msra.mxu0 0
    %3725 = vmatprep.subr.bf16.mxu0 0
    %3726 = vmatpush1.bf16.msra.mxu0 0
    %3727 = vmatprep.subr.bf16.mxu0 0
    %3728 = vmatpush1.bf16.msra.mxu0 0
    %3729 = vmatprep.subr.bf16.mxu0 0
    %3730 = vmatpush1.bf16.msra.mxu0 0
    %3731 = vmatprep.subr.bf16.mxu0 0
    %3732 = vmatpush1.bf16.msra.mxu0 0
    %3733 = vmatprep.subr.bf16.mxu0 0
    %3734 = vmatpush1.bf16.msra.mxu0 0
    %3735 = vmatprep.subr.bf16.mxu0 0
    %3736 = vmatpush1.bf16.msra.mxu0 0
    %3737 = vmatprep.subr.bf16.mxu0 0
    %3738 = vmatpush1.bf16.msra.mxu0 0
    %3739 = vmatprep.subr.bf16.mxu0 0
    %3740 = vmatpush1.bf16.msra.mxu0 0
    %3741 = vmatprep.mubr.bf16.mxu0 0
    %3742 = vmatmul.mubr.bf16.gmra.mrb[0].mxu0 %v3701
    %v3743 = vpop.f32.mrb[0].mxu0
    %v3744 = vadd.f32 0.0, %v3743
    %v3745 = vpop.f32.mrb[0].mxu0
    %v3746 = vpop.f32.mrb[0].mxu0
    %v3747 = vadd.f32 0.0, %v3746
    %v3748 = vpop.f32.mrb[0].mxu0
    %3749 = vmatprep.mubr.bf16.mxu0 0
    %3750 = vmatmul.mubr.bf16.gmra.mrb[0].mxu0 %v3704
    %v3751 = vpop.f32.mrb[0].mxu0
    %v3752 = vadd.f32 0.0, %v3751
    %v3753 = vpop.f32.mrb[0].mxu0
    %v3754 = vpop.f32.mrb[0].mxu0
    %v3755 = vpop.f32.mrb[0].mxu0
    %3756 = vdwg.mxu0
    %3757 = vrot.lane.b32.xlu0 %v2731, 104
    %v3758 = vpop.permute.xlu0 %3757
    %3759 = vrot.lane.b32.xlu0 %v2732, 104
    %v3760 = vpop.permute.xlu0 %3759
    %3761 = vrot.lane.b32.xlu0 %v2731, 72
    %v3762 = vpop.permute.xlu0 %3761
    %3763 = vrot.lane.b32.xlu0 %v2732, 72
    %v3764 = vpop.permute.xlu0 %3763
    %v3766 = vsel %vm637, %v3758, 0
    %v3769 = vsel %vm637, %v3760, 0
    %v3772 = vsel %vm637, %v3762, 0
    %v3775 = vsel %vm637, %v3764, 0
    %3777 = vmatprep.subr.bf16.mxu0 0
    %3778 = vmatpush1.bf16.xpose.msra.mxu0 %v3772
    %3779 = vmatprep.subr.bf16.mxu0 0
    %3780 = vmatpush1.bf16.xpose.msra.mxu0 %v3775
    %3781 = vmatprep.subr.bf16.mxu0 0
    %3782 = vmatpush1.bf16.xpose.msra.mxu0 0
    %3783 = vmatprep.subr.bf16.mxu0 0
    %3784 = vmatpush1.bf16.xpose.msra.mxu0 0
    %3785 = vmatprep.subr.bf16.mxu0 0
    %3786 = vmatpush1.bf16.xpose.msra.mxu0 0
    %3787 = vmatprep.subr.bf16.mxu0 0
    %3788 = vmatpush1.bf16.xpose.msra.mxu0 0
    %3789 = vmatprep.subr.bf16.mxu0 0
    %3790 = vmatpush1.bf16.xpose.msra.mxu0 0
    %3791 = vmatprep.subr.bf16.mxu0 0
    %3792 = vmatpush1.bf16.xpose.msra.mxu0 0
    %3793 = vmatprep.subr.bf16.mxu0 0
    %3794 = vmatpush1.bf16.xpose.msra.mxu0 0
    %3795 = vmatprep.subr.bf16.mxu0 0
    %3796 = vmatpush1.bf16.xpose.msra.mxu0 0
    %3797 = vmatprep.subr.bf16.mxu0 0
    %3798 = vmatpush1.bf16.xpose.msra.mxu0 0
    %3799 = vmatprep.subr.bf16.mxu0 0
    %3800 = vmatpush1.bf16.xpose.msra.mxu0 0
    %3801 = vmatprep.subr.bf16.mxu0 0
    %3802 = vmatpush1.bf16.xpose.msra.mxu0 0
    %3803 = vmatprep.subr.bf16.mxu0 0
    %3804 = vmatpush1.bf16.xpose.msra.mxu0 0
    %3805 = vmatprep.subr.bf16.mxu0 0
    %3806 = vmatpush1.bf16.xpose.msra.mxu0 0
    %3807 = vmatprep.subr.bf16.mxu0 0
    %3808 = vmatpush1.bf16.xpose.msra.mxu0 0
    %3809 = vmatprep.mubr.bf16.mxu0 0
    %3810 = vmatmul.mubr.bf16.gmra.mrb[0].mxu0 %v3766
    %v3811 = vpop.f32.mrb[0].mxu0
    %v3812 = vadd.f32 0.0, %v3811
    %v3813 = vpop.f32.mrb[0].mxu0
    %v3814 = vpop.f32.mrb[0].mxu0
    %v3815 = vadd.f32 0.0, %v3814
    %v3816 = vpop.f32.mrb[0].mxu0
    %3817 = vmatprep.mubr.bf16.mxu0 0
    %3818 = vmatmul.mubr.bf16.gmra.mrb[0].mxu0 %v3769
    %v3819 = vpop.f32.mrb[0].mxu0
    %v3820 = vadd.f32 0.0, %v3819
    %v3821 = vpop.f32.mrb[0].mxu0
    %v3822 = vpop.f32.mrb[0].mxu0
    %v3823 = vpop.f32.mrb[0].mxu0
    %3824 = vdwg.mxu0
    %3825 = vrot.lane.b32.xlu0 %v2733, 104
    %v3826 = vpop.permute.xlu0 %3825
    %3827 = vrot.lane.b32.xlu0 %v2734, 104
    %v3828 = vpop.permute.xlu0 %3827
    %3829 = vrot.lane.b32.xlu0 %v2733, 72
    %v3830 = vpop.permute.xlu0 %3829
    %3831 = vrot.lane.b32.xlu0 %v2734, 72
    %v3832 = vpop.permute.xlu0 %3831
    %v3834 = vsel %vm637, %v3826, 0
    %v3837 = vsel %vm637, %v3828, 0
    %v3840 = vsel %vm637, %v3830, 0
    %v3843 = vsel %vm637, %v3832, 0
    %3845 = vmatprep.subr.bf16.mxu0 0
    %3846 = vmatpush1.bf16.xpose.msra.mxu0 %v3840
    %3847 = vmatprep.subr.bf16.mxu0 0
    %3848 = vmatpush1.bf16.xpose.msra.mxu0 %v3843
    %3849 = vmatprep.subr.bf16.mxu0 0
    %3850 = vmatpush1.bf16.xpose.msra.mxu0 0
    %3851 = vmatprep.subr.bf16.mxu0 0
    %3852 = vmatpush1.bf16.xpose.msra.mxu0 0
    %3853 = vmatprep.subr.bf16.mxu0 0
    %3854 = vmatpush1.bf16.xpose.msra.mxu0 0
    %3855 = vmatprep.subr.bf16.mxu0 0
    %3856 = vmatpush1.bf16.xpose.msra.mxu0 0
    %3857 = vmatprep.subr.bf16.mxu0 0
    %3858 = vmatpush1.bf16.xpose.msra.mxu0 0
    %3859 = vmatprep.subr.bf16.mxu0 0
    %3860 = vmatpush1.bf16.xpose.msra.mxu0 0
    %3861 = vmatprep.subr.bf16.mxu0 0
    %3862 = vmatpush1.bf16.xpose.msra.mxu0 0
    %3863 = vmatprep.subr.bf16.mxu0 0
    %3864 = vmatpush1.bf16.xpose.msra.mxu0 0
    %3865 = vmatprep.subr.bf16.mxu0 0
    %3866 = vmatpush1.bf16.xpose.msra.mxu0 0
    %3867 = vmatprep.subr.bf16.mxu0 0
    %3868 = vmatpush1.bf16.xpose.msra.mxu0 0
    %3869 = vmatprep.subr.bf16.mxu0 0
    %3870 = vmatpush1.bf16.xpose.msra.mxu0 0
    %3871 = vmatprep.subr.bf16.mxu0 0
    %3872 = vmatpush1.bf16.xpose.msra.mxu0 0
    %3873 = vmatprep.subr.bf16.mxu0 0
    %3874 = vmatpush1.bf16.xpose.msra.mxu0 0
    %3875 = vmatprep.subr.bf16.mxu0 0
    %3876 = vmatpush1.bf16.xpose.msra.mxu0 0
    %3877 = vmatprep.mubr.bf16.mxu0 0
    %3878 = vmatmul.mubr.bf16.gmra.mrb[0].mxu0 %v3834
    %v3879 = vpop.f32.mrb[0].mxu0
    %v3880 = vadd.f32 0.0, %v3879
    %v3881 = vpop.f32.mrb[0].mxu0
    %v3882 = vpop.f32.mrb[0].mxu0
    %v3883 = vadd.f32 0.0, %v3882
    %v3884 = vpop.f32.mrb[0].mxu0
    %3885 = vmatprep.mubr.bf16.mxu0 0
    %3886 = vmatmul.mubr.bf16.gmra.mrb[0].mxu0 %v3837
    %v3887 = vpop.f32.mrb[0].mxu0
    %v3888 = vadd.f32 0.0, %v3887
    %v3889 = vpop.f32.mrb[0].mxu0
    %v3890 = vpop.f32.mrb[0].mxu0
    %v3891 = vpop.f32.mrb[0].mxu0
    %3892 = vdwg.mxu0
    %v3893 = vmul.f32 %v3812, 0.35355338
    %v3894 = vmul.f32 %v3815, 0.35355338
    %v3895 = vmul.f32 %v3820, 0.35355338
    %v3896 = vmul.f32 %v3880, 0.35355338
    %v3897 = vmul.f32 %v3883, 0.35355338
    %v3898 = vmul.f32 %v3888, 0.35355338
    %v3899 = vadd.f32 %v3893, %v437
    %v3900 = vadd.f32 %v3894, %v437
    %v3901 = vadd.f32 %v3895, %v437
    %v3902 = vadd.f32 %v3896, %v437
    %v3903 = vadd.f32 %v3897, %v437
    %v3904 = vadd.f32 %v3898, %v437
    %v3905 = vsel %vm776, %v3899, -inf
    %3906 = vmax.xlane.f32.xlu0 %v3905
    %v3907 = vpop.xlane.xlu0 %3906
    %v3908 = vsel %vm776, %v3900, -inf
    %3909 = vmax.xlane.f32.xlu0 %v3908
    %v3910 = vpop.xlane.xlu0 %3909
    %v3911 = vsel %vm776, %v3901, -inf
    %3912 = vmax.xlane.f32.xlu0 %v3911
    %v3913 = vpop.xlane.xlu0 %3912
    %v3914 = vsel %vm776, %v3902, -inf
    %3915 = vmax.xlane.f32.xlu0 %v3914
    %v3916 = vpop.xlane.xlu0 %3915
    %v3917 = vsel %vm776, %v3903, -inf
    %3918 = vmax.xlane.f32.xlu0 %v3917
    %v3919 = vpop.xlane.xlu0 %3918
    %v3920 = vsel %vm776, %v3904, -inf
    %3921 = vmax.xlane.f32.xlu0 %v3920
    %v3922 = vpop.xlane.xlu0 %3921
    %v3923 = vsub.f32 %v3899, %v3907
    %v3924 = vsub.f32 %v3900, %v3910
    %v3925 = vsub.f32 %v3901, %v3913
    %v3926 = vsub.f32 %v3902, %v3916
    %v3927 = vsub.f32 %v3903, %v3919
    %v3928 = vsub.f32 %v3904, %v3922
    %v3929 = vmul.f32 %v3923, 1.442695
    %v3930 = vpow.pop %v3929
    %v3931 = vmul.f32 %v3924, 1.442695
    %v3932 = vpow.pop %v3931
    %v3933 = vmul.f32 %v3925, 1.442695
    %v3934 = vpow.pop %v3933
    %v3935 = vmul.f32 %v3926, 1.442695
    %v3936 = vpow.pop %v3935
    %v3937 = vmul.f32 %v3927, 1.442695
    %v3938 = vpow.pop %v3937
    %v3939 = vmul.f32 %v3928, 1.442695
    %v3940 = vpow.pop %v3939
    %v3941 = vsel %vm776, %v3930, 0.0
    %3942 = vadd.xlane.f32.xlu0 %v3941
    %v3943 = vpop.xlane.xlu0 %3942
    %v3944 = vsel %vm776, %v3932, 0.0
    %3945 = vadd.xlane.f32.xlu0 %v3944
    %v3946 = vpop.xlane.xlu0 %3945
    %v3947 = vsel %vm776, %v3934, 0.0
    %3948 = vadd.xlane.f32.xlu0 %v3947
    %v3949 = vpop.xlane.xlu0 %3948
    %v3950 = vsel %vm776, %v3936, 0.0
    %3951 = vadd.xlane.f32.xlu0 %v3950
    %v3952 = vpop.xlane.xlu0 %3951
    %v3953 = vsel %vm776, %v3938, 0.0
    %3954 = vadd.xlane.f32.xlu0 %v3953
    %v3955 = vpop.xlane.xlu0 %3954
    %v3956 = vsel %vm776, %v3940, 0.0
    %3957 = vadd.xlane.f32.xlu0 %v3956
    %v3958 = vpop.xlane.xlu0 %3957
    %v3959 = vrcp.pop %v3943
    %v3960 = vrcp.pop %v3946
    %v3961 = vrcp.pop %v3949
    %v3962 = vrcp.pop %v3952
    %v3963 = vrcp.pop %v3955
    %v3964 = vrcp.pop %v3958
    %v3965 = vmul.f32 %v3930, %v3959
    %v3966 = vmul.f32 %v3932, %v3960
    %v3967 = vmul.f32 %v3934, %v3961
    %v3968 = vmul.f32 %v3936, %v3962
    %v3969 = vmul.f32 %v3938, %v3963
    %v3970 = vmul.f32 %v3940, %v3964
    %v3971 = vpack.c.bf16 %v3966, %v3965
    %v3972 = vpack.c.bf16 %v3967, %v3967
    %v3973 = vpack.c.bf16 %v3969, %v3968
    %v3974 = vpack.c.bf16 %v3970, %v3970
    %3975 = vrot.lane.b32.xlu0 %v2731, 40
    %v3976 = vpop.permute.xlu0 %3975
    %3977 = vrot.lane.b32.xlu0 %v2732, 40
    %v3978 = vpop.permute.xlu0 %3977
    %v3981 = vsel %vm776, %v3971, 0
    %v3984 = vsel %vm776, %v3972, 0
    %v3987 = vsel %vm858, %v3978, 0
    %3989 = vmatprep.subr.bf16.mxu0 0
    %3990 = vmatpush1.bf16.msra.mxu0 %v3976
    %3991 = vmatprep.subr.bf16.mxu0 0
    %3992 = vmatpush1.bf16.msra.mxu0 %v3987
    %3993 = vmatprep.subr.bf16.mxu0 0
    %3994 = vmatpush1.bf16.msra.mxu0 0
    %3995 = vmatprep.subr.bf16.mxu0 0
    %3996 = vmatpush1.bf16.msra.mxu0 0
    %3997 = vmatprep.subr.bf16.mxu0 0
    %3998 = vmatpush1.bf16.msra.mxu0 0
    %3999 = vmatprep.subr.bf16.mxu0 0
    %4000 = vmatpush1.bf16.msra.mxu0 0
    %4001 = vmatprep.subr.bf16.mxu0 0
    %4002 = vmatpush1.bf16.msra.mxu0 0
    %4003 = vmatprep.subr.bf16.mxu0 0
    %4004 = vmatpush1.bf16.msra.mxu0 0
    %4005 = vmatprep.subr.bf16.mxu0 0
    %4006 = vmatpush1.bf16.msra.mxu0 0
    %4007 = vmatprep.subr.bf16.mxu0 0
    %4008 = vmatpush1.bf16.msra.mxu0 0
    %4009 = vmatprep.subr.bf16.mxu0 0
    %4010 = vmatpush1.bf16.msra.mxu0 0
    %4011 = vmatprep.subr.bf16.mxu0 0
    %4012 = vmatpush1.bf16.msra.mxu0 0
    %4013 = vmatprep.subr.bf16.mxu0 0
    %4014 = vmatpush1.bf16.msra.mxu0 0
    %4015 = vmatprep.subr.bf16.mxu0 0
    %4016 = vmatpush1.bf16.msra.mxu0 0
    %4017 = vmatprep.subr.bf16.mxu0 0
    %4018 = vmatpush1.bf16.msra.mxu0 0
    %4019 = vmatprep.subr.bf16.mxu0 0
    %4020 = vmatpush1.bf16.msra.mxu0 0
    %4021 = vmatprep.mubr.bf16.mxu0 0
    %4022 = vmatmul.mubr.bf16.gmra.mrb[0].mxu0 %v3981
    %v4023 = vpop.f32.mrb[0].mxu0
    %v4024 = vadd.f32 0.0, %v4023
    %v4025 = vpop.f32.mrb[0].mxu0
    %v4026 = vpop.f32.mrb[0].mxu0
    %v4027 = vadd.f32 0.0, %v4026
    %v4028 = vpop.f32.mrb[0].mxu0
    %4029 = vmatprep.mubr.bf16.mxu0 0
    %4030 = vmatmul.mubr.bf16.gmra.mrb[0].mxu0 %v3984
    %v4031 = vpop.f32.mrb[0].mxu0
    %v4032 = vadd.f32 0.0, %v4031
    %v4033 = vpop.f32.mrb[0].mxu0
    %v4034 = vpop.f32.mrb[0].mxu0
    %v4035 = vpop.f32.mrb[0].mxu0
    %4036 = vdwg.mxu0
    %4037 = vrot.lane.b32.xlu0 %v2733, 40
    %v4038 = vpop.permute.xlu0 %4037
    %4039 = vrot.lane.b32.xlu0 %v2734, 40
    %v4040 = vpop.permute.xlu0 %4039
    %v4043 = vsel %vm776, %v3973, 0
    %v4046 = vsel %vm776, %v3974, 0
    %v4049 = vsel %vm858, %v4040, 0
    %4051 = vmatprep.subr.bf16.mxu0 0
    %4052 = vmatpush1.bf16.msra.mxu0 %v4038
    %4053 = vmatprep.subr.bf16.mxu0 0
    %4054 = vmatpush1.bf16.msra.mxu0 %v4049
    %4055 = vmatprep.subr.bf16.mxu0 0
    %4056 = vmatpush1.bf16.msra.mxu0 0
    %4057 = vmatprep.subr.bf16.mxu0 0
    %4058 = vmatpush1.bf16.msra.mxu0 0
    %4059 = vmatprep.subr.bf16.mxu0 0
    %4060 = vmatpush1.bf16.msra.mxu0 0
    %4061 = vmatprep.subr.bf16.mxu0 0
    %4062 = vmatpush1.bf16.msra.mxu0 0
    %4063 = vmatprep.subr.bf16.mxu0 0
    %4064 = vmatpush1.bf16.msra.mxu0 0
    %4065 = vmatprep.subr.bf16.mxu0 0
    %4066 = vmatpush1.bf16.msra.mxu0 0
    %4067 = vmatprep.subr.bf16.mxu0 0
    %4068 = vmatpush1.bf16.msra.mxu0 0
    %4069 = vmatprep.subr.bf16.mxu0 0
    %4070 = vmatpush1.bf16.msra.mxu0 0
    %4071 = vmatprep.subr.bf16.mxu0 0
    %4072 = vmatpush1.bf16.msra.mxu0 0
    %4073 = vmatprep.subr.bf16.mxu0 0
    %4074 = vmatpush1.bf16.msra.mxu0 0
    %4075 = vmatprep.subr.bf16.mxu0 0
    %4076 = vmatpush1.bf16.msra.mxu0 0
    %4077 = vmatprep.subr.bf16.mxu0 0
    %4078 = vmatpush1.bf16.msra.mxu0 0
    %4079 = vmatprep.subr.bf16.mxu0 0
    %4080 = vmatpush1.bf16.msra.mxu0 0
    %4081 = vmatprep.subr.bf16.mxu0 0
    %4082 = vmatpush1.bf16.msra.mxu0 0
    %4083 = vmatprep.mubr.bf16.mxu0 0
    %4084 = vmatmul.mubr.bf16.gmra.mrb[0].mxu0 %v4043
    %v4085 = vpop.f32.mrb[0].mxu0
    %v4086 = vadd.f32 0.0, %v4085
    %v4087 = vpop.f32.mrb[0].mxu0
    %v4088 = vpop.f32.mrb[0].mxu0
    %v4089 = vadd.f32 0.0, %v4088
    %v4090 = vpop.f32.mrb[0].mxu0
    %4091 = vmatprep.mubr.bf16.mxu0 0
    %4092 = vmatmul.mubr.bf16.gmra.mrb[0].mxu0 %v4046
    %v4093 = vpop.f32.mrb[0].mxu0
    %v4094 = vadd.f32 0.0, %v4093
    %v4095 = vpop.f32.mrb[0].mxu0
    %v4096 = vpop.f32.mrb[0].mxu0
    %v4097 = vpop.f32.mrb[0].mxu0
    %4098 = vdwg.mxu0
    %4105 = vrot.lane.b32.xlu0 %v3340, 8
    %v4106 = vpop.permute.xlu0 %4105
    %4107 = vrot.lane.b32.xlu0 %v3343, 8
    %v4108 = vpop.permute.xlu0 %4107
    %4109 = vrot.lane.b32.xlu0 %v3348, 8
    %v4110 = vpop.permute.xlu0 %4109
    %4111 = vrot.lane.b32.xlu0 %v3402, 8
    %v4112 = vpop.permute.xlu0 %4111
    %4113 = vrot.lane.b32.xlu0 %v3405, 8
    %v4114 = vpop.permute.xlu0 %4113
    %4115 = vrot.lane.b32.xlu0 %v3410, 8
    %v4116 = vpop.permute.xlu0 %4115
    %4129 = vrot.lane.b32.xlu0 %v3682, 16
    %v4130 = vpop.permute.xlu0 %4129
    %4131 = vrot.lane.b32.xlu0 %v3685, 16
    %v4132 = vpop.permute.xlu0 %4131
    %4133 = vrot.lane.b32.xlu0 %v3690, 16
    %v4134 = vpop.permute.xlu0 %4133
    %4135 = vrot.lane.b32.xlu0 %v3744, 16
    %v4136 = vpop.permute.xlu0 %4135
    %4137 = vrot.lane.b32.xlu0 %v3747, 16
    %v4138 = vpop.permute.xlu0 %4137
    %4139 = vrot.lane.b32.xlu0 %v3752, 16
    %v4140 = vpop.permute.xlu0 %4139
    %4153 = vrot.lane.b32.xlu0 %v4024, 24
    %v4154 = vpop.permute.xlu0 %4153
    %4155 = vrot.lane.b32.xlu0 %v4027, 24
    %v4156 = vpop.permute.xlu0 %4155
    %4157 = vrot.lane.b32.xlu0 %v4032, 24
    %v4158 = vpop.permute.xlu0 %4157
    %4159 = vrot.lane.b32.xlu0 %v4086, 24
    %v4160 = vpop.permute.xlu0 %4159
    %4161 = vrot.lane.b32.xlu0 %v4089, 24
    %v4162 = vpop.permute.xlu0 %4161
    %4163 = vrot.lane.b32.xlu0 %v4094, 24
    %v4164 = vpop.permute.xlu0 %4163
    %v4171 = vsel %vm637, %v2998, %v4106
    %v4172 = vsel %vm637, %v3001, %v4108
    %v4173 = vsel %vm637, %v3006, %v4110
    %v4174 = vsel %vm637, %v3060, %v4112
    %v4175 = vsel %vm637, %v3063, %v4114
    %v4176 = vsel %vm637, %v3068, %v4116
    %v4177 = vsel %vm2076, %v4171, %v4130
    %v4178 = vsel %vm2076, %v4172, %v4132
    %v4179 = vsel %vm2076, %v4173, %v4134
    %v4180 = vsel %vm2076, %v4174, %v4136
    %v4181 = vsel %vm2076, %v4175, %v4138
    %v4182 = vsel %vm2076, %v4176, %v4140
    %v4183 = vsel %vm776, %v4177, %v4154
    %v4184 = vsel %vm776, %v4178, %v4156
    %v4185 = vsel %vm776, %v4179, %v4158
    %v4186 = vsel %vm776, %v4180, %v4160
    %v4187 = vsel %vm776, %v4181, %v4162
    %v4188 = vsel %vm776, %v4182, %v4164
    %s4189 = scalar_lea.vmem %s12, 16
    %v4190 = vld [vmem:[%s4189] sm:$0xf]
    %v4191 = vld [vmem:[%s4189 + $0x4] sm:$0xf]
    %v4192 = vld [vmem:[%s4189 + $0x8] sm:$0xf]
    %v4193 = vld [vmem:[%s4189 + $0xc] sm:$0xf]
    %v4194 = vpack.c.bf16 %v4184, %v4183
    %v4195 = vpack.c.bf16 %v4186, %v4185
    %v4196 = vpack.c.bf16 %v4188, %v4187
    %v4201 = vunpack.c.l.b16 %v4190
    %v4202 = vunpack.c.l.b16 %v4191
    %v4203 = vunpack.c.l.b16 %v4192
    %v4204 = vunpack.c.l.b16 %v4193
    %v4205 = vpack.c.b16 %v4202, %v4201
    %v4206 = vpack.c.b16 %v4204, %v4203
    %v4210 = vsel %vm301, %v4194, 0
    %v4213 = vsel %vm301, %v4195, 0
    %v4216 = vsel %vm301, %v4196, 0
    %4218 = vmatprep.subr.bf16.mxu0 0
    %4219 = vmatpush1.bf16.msra.mxu0 %v4205
    %4220 = vmatprep.subr.bf16.mxu0 0
    %4221 = vmatpush1.bf16.msra.mxu0 %v4206
    %4222 = vmatprep.subr.bf16.mxu0 0
    %4223 = vmatpush1.bf16.msra.mxu0 0
    %4224 = vmatprep.subr.bf16.mxu0 0
    %4225 = vmatpush1.bf16.msra.mxu0 0
    %4226 = vmatprep.subr.bf16.mxu0 0
    %4227 = vmatpush1.bf16.msra.mxu0 0
    %4228 = vmatprep.subr.bf16.mxu0 0
    %4229 = vmatpush1.bf16.msra.mxu0 0
    %4230 = vmatprep.subr.bf16.mxu0 0
    %4231 = vmatpush1.bf16.msra.mxu0 0
    %4232 = vmatprep.subr.bf16.mxu0 0
    %4233 = vmatpush1.bf16.msra.mxu0 0
    %4234 = vmatprep.subr.bf16.mxu0 0
    %4235 = vmatpush1.bf16.msra.mxu0 0
    %4236 = vmatprep.subr.bf16.mxu0 0
    %4237 = vmatpush1.bf16.msra.mxu0 0
    %4238 = vmatprep.subr.bf16.mxu0 0
    %4239 = vmatpush1.bf16.msra.mxu0 0
    %4240 = vmatprep.subr.bf16.mxu0 0
    %4241 = vmatpush1.bf16.msra.mxu0 0
    %4242 = vmatprep.subr.bf16.mxu0 0
    %4243 = vmatpush1.bf16.msra.mxu0 0
    %4244 = vmatprep.subr.bf16.mxu0 0
    %4245 = vmatpush1.bf16.msra.mxu0 0
    %4246 = vmatprep.subr.bf16.mxu0 0
    %4247 = vmatpush1.bf16.msra.mxu0 0
    %4248 = vmatprep.subr.bf16.mxu0 0
    %4249 = vmatpush1.bf16.msra.mxu0 0
    %4250 = vmatprep.mubr.bf16.mxu0 0
    %4251 = vmatmul.mubr.bf16.gmra.mrb[0].mxu0 %v4210
    %v4252 = vpop.f32.mrb[0].mxu0
    %v4253 = vadd.f32 0.0, %v4252
    %v4254 = vpop.f32.mrb[0].mxu0
    %v4255 = vpop.f32.mrb[0].mxu0
    %v4256 = vadd.f32 0.0, %v4255
    %v4257 = vpop.f32.mrb[0].mxu0
    %4258 = vmatprep.mubr.bf16.mxu0 0
    %4259 = vmatmul.mubr.bf16.gmra.mrb[0].mxu0 %v4213
    %v4260 = vpop.f32.mrb[0].mxu0
    %v4261 = vadd.f32 0.0, %v4260
    %v4262 = vpop.f32.mrb[0].mxu0
    %v4263 = vpop.f32.mrb[0].mxu0
    %v4264 = vadd.f32 0.0, %v4263
    %v4265 = vpop.f32.mrb[0].mxu0
    %4266 = vmatprep.mubr.bf16.mxu0 0
    %4267 = vmatmul.mubr.bf16.gmra.mrb[0].mxu0 %v4216
    %v4268 = vpop.f32.mrb[0].mxu0
    %v4269 = vadd.f32 0.0, %v4268
    %v4270 = vpop.f32.mrb[0].mxu0
    %v4271 = vpop.f32.mrb[0].mxu0
    %v4272 = vadd.f32 0.0, %v4271
    %v4273 = vpop.f32.mrb[0].mxu0
    %4274 = vdwg.mxu0
    %v4275 = vadd.f32 %v2533, %v4253
    %v4276 = vadd.f32 %v2534, %v4256
    %v4277 = vadd.f32 %v2535, %v4261
    %v4278 = vadd.f32 %v2536, %v4264
    %v4279 = vadd.f32 %v2537, %v4269
    %v4280 = vadd.f32 %v2538, %v4272
    %s4281 = scalar_lea.vmem %s13, 1
    %v4282 = vld [vmem:[%s4281] sm:$0x1]
    %v4284 = vlaneseq
    %v4285 = vshrl.u32 %v4284, 7
    %v4286 = vsub.s32 0, %v4285
    %v4287 = vrot.slane %v4282, %v4286
    %v4289 = vadd.f32 %v4275, %v4287
    %v4290 = vadd.f32 %v4276, %v4287
    %v4291 = vadd.f32 %v4277, %v4287
    %v4292 = vadd.f32 %v4278, %v4287
    %v4293 = vadd.f32 %v4279, %v4287
    %v4294 = vadd.f32 %v4280, %v4287
    %s4295 = scalar_lea.vmem %s14, 1
    %v4296 = vld [vmem:[%s4295] sm:$0x1]
    %s4297 = scalar_lea.vmem %s15, 1
    %v4298 = vld [vmem:[%s4297] sm:$0x1]
    %v4299 = vsel %vm301, %v4289, 0.0
    %4300 = vadd.xlane.f32.xlu0 %v4299
    %v4301 = vpop.xlane.xlu0 %4300
    %v4302 = vsel %vm301, %v4290, 0.0
    %4303 = vadd.xlane.f32.xlu0 %v4302
    %v4304 = vpop.xlane.xlu0 %4303
    %v4305 = vsel %vm301, %v4291, 0.0
    %4306 = vadd.xlane.f32.xlu0 %v4305
    %v4307 = vpop.xlane.xlu0 %4306
    %v4308 = vsel %vm301, %v4292, 0.0
    %4309 = vadd.xlane.f32.xlu0 %v4308
    %v4310 = vpop.xlane.xlu0 %4309
    %v4311 = vsel %vm301, %v4293, 0.0
    %4312 = vadd.xlane.f32.xlu0 %v4311
    %v4313 = vpop.xlane.xlu0 %4312
    %v4314 = vsel %vm301, %v4294, 0.0
    %4315 = vadd.xlane.f32.xlu0 %v4314
    %v4316 = vpop.xlane.xlu0 %4315
    %v4317 = vmul.f32 %v4301, %v320
    %v4318 = vmul.f32 %v4304, %v320
    %v4319 = vmul.f32 %v4307, %v320
    %v4320 = vmul.f32 %v4310, %v320
    %v4321 = vmul.f32 %v4313, %v320
    %v4322 = vmul.f32 %v4316, %v320
    %v4323 = vsub.f32 %v4289, %v4317
    %v4324 = vsub.f32 %v4290, %v4318
    %v4325 = vsub.f32 %v4291, %v4319
    %v4326 = vsub.f32 %v4292, %v4320
    %v4327 = vsub.f32 %v4293, %v4321
    %v4328 = vsub.f32 %v4294, %v4322
    %v4329 = vmul.f32 %v4323, %v4323
    %v4330 = vmul.f32 %v4324, %v4324
    %v4331 = vmul.f32 %v4325, %v4325
    %v4332 = vmul.f32 %v4326, %v4326
    %v4333 = vmul.f32 %v4327, %v4327
    %v4334 = vmul.f32 %v4328, %v4328
    %v4335 = vsel %vm301, %v4329, 0.0
    %4336 = vadd.xlane.f32.xlu0 %v4335
    %v4337 = vpop.xlane.xlu0 %4336
    %v4338 = vsel %vm301, %v4330, 0.0
    %4339 = vadd.xlane.f32.xlu0 %v4338
    %v4340 = vpop.xlane.xlu0 %4339
    %v4341 = vsel %vm301, %v4331, 0.0
    %4342 = vadd.xlane.f32.xlu0 %v4341
    %v4343 = vpop.xlane.xlu0 %4342
    %v4344 = vsel %vm301, %v4332, 0.0
    %4345 = vadd.xlane.f32.xlu0 %v4344
    %v4346 = vpop.xlane.xlu0 %4345
    %v4347 = vsel %vm301, %v4333, 0.0
    %4348 = vadd.xlane.f32.xlu0 %v4347
    %v4349 = vpop.xlane.xlu0 %4348
    %v4350 = vsel %vm301, %v4334, 0.0
    %4351 = vadd.xlane.f32.xlu0 %v4350
    %v4352 = vpop.xlane.xlu0 %4351
    %v4353 = vmul.f32 %v4337, %v320
    %v4354 = vmul.f32 %v4340, %v320
    %v4355 = vmul.f32 %v4343, %v320
    %v4356 = vmul.f32 %v4346, %v320
    %v4357 = vmul.f32 %v4349, %v320
    %v4358 = vmul.f32 %v4352, %v320
    %v4359 = vadd.f32 %v4353, 1e-05
    %v4360 = vadd.f32 %v4354, 1e-05
    %v4361 = vadd.f32 %v4355, 1e-05
    %v4362 = vadd.f32 %v4356, 1e-05
    %v4363 = vadd.f32 %v4357, 1e-05
    %v4364 = vadd.f32 %v4358, 1e-05
    %v4365 = vrsqrt.pop %v4359
    %v4366 = vrsqrt.pop %v4360
    %v4367 = vrsqrt.pop %v4361
    %v4368 = vrsqrt.pop %v4362
    %v4369 = vrsqrt.pop %v4363
    %v4370 = vrsqrt.pop %v4364
    %v4371 = vmul.f32 %v4323, %v4365
    %v4372 = vmul.f32 %v4324, %v4366
    %v4373 = vmul.f32 %v4325, %v4367
    %v4374 = vmul.f32 %v4326, %v4368
    %v4375 = vmul.f32 %v4327, %v4369
    %v4376 = vmul.f32 %v4328, %v4370
    %v4378 = vlaneseq
    %v4379 = vshrl.u32 %v4378, 7
    %v4380 = vsub.s32 0, %v4379
    %v4381 = vrot.slane %v4296, %v4380
    %v4383 = vmul.f32 %v4371, %v4381
    %v4384 = vmul.f32 %v4372, %v4381
    %v4385 = vmul.f32 %v4373, %v4381
    %v4386 = vmul.f32 %v4374, %v4381
    %v4387 = vmul.f32 %v4375, %v4381
    %v4388 = vmul.f32 %v4376, %v4381
    %v4390 = vlaneseq
    %v4391 = vshrl.u32 %v4390, 7
    %v4392 = vsub.s32 0, %v4391
    %v4393 = vrot.slane %v4298, %v4392
    %v4395 = vadd.f32 %v4383, %v4393
    %v4396 = vadd.f32 %v4384, %v4393
    %v4397 = vadd.f32 %v4385, %v4393
    %v4398 = vadd.f32 %v4386, %v4393
    %v4399 = vadd.f32 %v4387, %v4393
    %v4400 = vadd.f32 %v4388, %v4393
    %s4401 = scalar_lea.vmem %s16, 16
    %v4402 = vld [vmem:[%s4401] sm:$0xf]
    %v4403 = vld [vmem:[%s4401 + $0x4] sm:$0xf]
    %v4404 = vld [vmem:[%s4401 + $0x8] sm:$0xf]
    %v4405 = vld [vmem:[%s4401 + $0xc] sm:$0xf]
    %v4406 = vpack.c.bf16 %v4396, %v4395
    %v4407 = vpack.c.bf16 %v4398, %v4397
    %v4408 = vpack.c.bf16 %v4400, %v4399
    %s4409 = scalar_lea.vmem %s17, 1
    %v4410 = vld [vmem:[%s4409] sm:$0x1]
    %v4412 = vlaneseq
    %v4413 = vshrl.u32 %v4412, 7
    %v4414 = vsub.s32 0, %v4413
    %v4415 = vrot.slane %v4410, %v4414
    %v4421 = vunpack.c.l.b16 %v4402
    %v4422 = vunpack.c.l.b16 %v4403
    %v4423 = vunpack.c.l.b16 %v4404
    %v4424 = vunpack.c.l.b16 %v4405
    %v4425 = vpack.c.b16 %v4422, %v4421
    %v4426 = vpack.c.b16 %v4424, %v4423
    %v4430 = vsel %vm301, %v4406, 0
    %v4433 = vsel %vm301, %v4407, 0
    %v4436 = vsel %vm301, %v4408, 0
    %4438 = vmatprep.subr.bf16.mxu0 0
    %4439 = vmatpush1.bf16.msra.mxu0 %v4425
    %4440 = vmatprep.subr.bf16.mxu0 0
    %4441 = vmatpush1.bf16.msra.mxu0 %v4426
    %4442 = vmatprep.subr.bf16.mxu0 0
    %4443 = vmatpush1.bf16.msra.mxu0 0
    %4444 = vmatprep.subr.bf16.mxu0 0
    %4445 = vmatpush1.bf16.msra.mxu0 0
    %4446 = vmatprep.subr.bf16.mxu0 0
    %4447 = vmatpush1.bf16.msra.mxu0 0
    %4448 = vmatprep.subr.bf16.mxu0 0
    %4449 = vmatpush1.bf16.msra.mxu0 0
    %4450 = vmatprep.subr.bf16.mxu0 0
    %4451 = vmatpush1.bf16.msra.mxu0 0
    %4452 = vmatprep.subr.bf16.mxu0 0
    %4453 = vmatpush1.bf16.msra.mxu0 0
    %4454 = vmatprep.subr.bf16.mxu0 0
    %4455 = vmatpush1.bf16.msra.mxu0 0
    %4456 = vmatprep.subr.bf16.mxu0 0
    %4457 = vmatpush1.bf16.msra.mxu0 0
    %4458 = vmatprep.subr.bf16.mxu0 0
    %4459 = vmatpush1.bf16.msra.mxu0 0
    %4460 = vmatprep.subr.bf16.mxu0 0
    %4461 = vmatpush1.bf16.msra.mxu0 0
    %4462 = vmatprep.subr.bf16.mxu0 0
    %4463 = vmatpush1.bf16.msra.mxu0 0
    %4464 = vmatprep.subr.bf16.mxu0 0
    %4465 = vmatpush1.bf16.msra.mxu0 0
    %4466 = vmatprep.subr.bf16.mxu0 0
    %4467 = vmatpush1.bf16.msra.mxu0 0
    %4468 = vmatprep.subr.bf16.mxu0 0
    %4469 = vmatpush1.bf16.msra.mxu0 0
    %4470 = vmatprep.mubr.bf16.mxu0 0
    %4471 = vmatmul.mubr.bf16.gmra.mrb[0].mxu0 %v4430
    %v4472 = vpop.f32.mrb[0].mxu0
    %v4473 = vadd.f32 %v4415, %v4472
    %v4474 = vpop.f32.mrb[0].mxu0
    %v4475 = vpop.f32.mrb[0].mxu0
    %v4476 = vadd.f32 %v4415, %v4475
    %v4477 = vpop.f32.mrb[0].mxu0
    %4478 = vmatprep.mubr.bf16.mxu0 0
    %4479 = vmatmul.mubr.bf16.gmra.mrb[0].mxu0 %v4433
    %v4480 = vpop.f32.mrb[0].mxu0
    %v4481 = vadd.f32 %v4415, %v4480
    %v4482 = vpop.f32.mrb[0].mxu0
    %v4483 = vpop.f32.mrb[0].mxu0
    %v4484 = vadd.f32 %v4415, %v4483
    %v4485 = vpop.f32.mrb[0].mxu0
    %4486 = vmatprep.mubr.bf16.mxu0 0
    %4487 = vmatmul.mubr.bf16.gmra.mrb[0].mxu0 %v4436
    %v4488 = vpop.f32.mrb[0].mxu0
    %v4489 = vadd.f32 %v4415, %v4488
    %v4490 = vpop.f32.mrb[0].mxu0
    %v4491 = vpop.f32.mrb[0].mxu0
    %v4492 = vadd.f32 %v4415, %v4491
    %v4493 = vpop.f32.mrb[0].mxu0
    %4494 = vdwg.mxu0
    %v4495 = vmul.f32 %v4473, 0.5
    %v4496 = vmul.f32 %v4476, 0.5
    %v4497 = vmul.f32 %v4481, 0.5
    %v4498 = vmul.f32 %v4484, 0.5
    %v4499 = vmul.f32 %v4489, 0.5
    %v4500 = vmul.f32 %v4492, 0.5
    %v4501 = vmul.f32 %v4473, 0.70710677
    %v4502 = vmul.f32 %v4476, 0.70710677
    %v4503 = vmul.f32 %v4481, 0.70710677
    %v4504 = vmul.f32 %v4484, 0.70710677
    %v4505 = vmul.f32 %v4489, 0.70710677
    %v4506 = vmul.f32 %v4492, 0.70710677
    %v4507 = verf.f32.pop %v4501
    %v4508 = verf.f32.pop %v4502
    %v4509 = verf.f32.pop %v4503
    %v4510 = verf.f32.pop %v4504
    %v4511 = verf.f32.pop %v4505
    %v4512 = verf.f32.pop %v4506
    %v4513 = vadd.f32 %v4507, 1.0
    %v4514 = vadd.f32 %v4508, 1.0
    %v4515 = vadd.f32 %v4509, 1.0
    %v4516 = vadd.f32 %v4510, 1.0
    %v4517 = vadd.f32 %v4511, 1.0
    %v4518 = vadd.f32 %v4512, 1.0
    %v4519 = vmul.f32 %v4495, %v4513
    %v4520 = vmul.f32 %v4496, %v4514
    %v4521 = vmul.f32 %v4497, %v4515
    %v4522 = vmul.f32 %v4498, %v4516
    %v4523 = vmul.f32 %v4499, %v4517
    %v4524 = vmul.f32 %v4500, %v4518
    %s4525 = scalar_lea.vmem %s18, 32
    %v4526 = vld [vmem:[%s4525] sm:$0xf]
    %v4527 = vld [vmem:[%s4525 + $0x4] sm:$0xf]
    %v4528 = vld [vmem:[%s4525 + $0x8] sm:$0xf]
    %v4529 = vld [vmem:[%s4525 + $0xc] sm:$0xf]
    %v4530 = vld [vmem:[%s4525 + $0x10] sm:$0xf]
    %v4531 = vld [vmem:[%s4525 + $0x14] sm:$0xf]
    %v4532 = vld [vmem:[%s4525 + $0x18] sm:$0xf]
    %v4533 = vld [vmem:[%s4525 + $0x1c] sm:$0xf]
    %v4534 = vpack.c.bf16 %v4520, %v4519
    %v4535 = vpack.c.bf16 %v4522, %v4521
    %v4536 = vpack.c.bf16 %v4524, %v4523
    %v4545 = vunpack.c.l.b16 %v4526
    %v4546 = vunpack.c.l.b16 %v4527
    %v4547 = vunpack.c.l.b16 %v4528
    %v4548 = vunpack.c.l.b16 %v4529
    %v4549 = vunpack.c.l.b16 %v4530
    %v4550 = vunpack.c.l.b16 %v4531
    %v4551 = vunpack.c.l.b16 %v4532
    %v4552 = vunpack.c.l.b16 %v4533
    %v4553 = vpack.c.b16 %v4546, %v4545
    %v4554 = vpack.c.b16 %v4548, %v4547
    %v4555 = vpack.c.b16 %v4550, %v4549
    %v4556 = vpack.c.b16 %v4552, %v4551
    %v4562 = vsel %vm87, %v4534, 0
    %v4565 = vsel %vm87, %v4535, 0
    %v4568 = vsel %vm87, %v4536, 0
    %4570 = vmatprep.subr.bf16.mxu0 0
    %4571 = vmatpush1.bf16.msra.mxu0 %v4553
    %4572 = vmatprep.subr.bf16.mxu0 0
    %4573 = vmatpush1.bf16.msra.mxu0 %v4554
    %4574 = vmatprep.subr.bf16.mxu0 0
    %4575 = vmatpush1.bf16.msra.mxu0 %v4555
    %4576 = vmatprep.subr.bf16.mxu0 0
    %4577 = vmatpush1.bf16.msra.mxu0 %v4556
    %4578 = vmatprep.subr.bf16.mxu0 0
    %4579 = vmatpush1.bf16.msra.mxu0 0
    %4580 = vmatprep.subr.bf16.mxu0 0
    %4581 = vmatpush1.bf16.msra.mxu0 0
    %4582 = vmatprep.subr.bf16.mxu0 0
    %4583 = vmatpush1.bf16.msra.mxu0 0
    %4584 = vmatprep.subr.bf16.mxu0 0
    %4585 = vmatpush1.bf16.msra.mxu0 0
    %4586 = vmatprep.subr.bf16.mxu0 0
    %4587 = vmatpush1.bf16.msra.mxu0 0
    %4588 = vmatprep.subr.bf16.mxu0 0
    %4589 = vmatpush1.bf16.msra.mxu0 0
    %4590 = vmatprep.subr.bf16.mxu0 0
    %4591 = vmatpush1.bf16.msra.mxu0 0
    %4592 = vmatprep.subr.bf16.mxu0 0
    %4593 = vmatpush1.bf16.msra.mxu0 0
    %4594 = vmatprep.subr.bf16.mxu0 0
    %4595 = vmatpush1.bf16.msra.mxu0 0
    %4596 = vmatprep.subr.bf16.mxu0 0
    %4597 = vmatpush1.bf16.msra.mxu0 0
    %4598 = vmatprep.subr.bf16.mxu0 0
    %4599 = vmatpush1.bf16.msra.mxu0 0
    %4600 = vmatprep.subr.bf16.mxu0 0
    %4601 = vmatpush1.bf16.msra.mxu0 0
    %4602 = vmatprep.mubr.bf16.mxu0 0
    %4603 = vmatmul.mubr.bf16.gmra.mrb[0].mxu0 %v4562
    %v4604 = vpop.f32.mrb[0].mxu0
    %v4605 = vadd.f32 0.0, %v4604
    %v4606 = vpop.f32.mrb[0].mxu0
    %v4607 = vpop.f32.mrb[0].mxu0
    %v4608 = vpop.f32.mrb[0].mxu0
    %4609 = vmatprep.mubr.bf16.mxu0 0
    %4610 = vmatmul.mubr.bf16.gmra.mrb[0].mxu0 %v4565
    %v4611 = vpop.f32.mrb[0].mxu0
    %v4612 = vpop.f32.mrb[0].mxu0
    %v4613 = vpop.f32.mrb[0].mxu0
    %v4614 = vadd.f32 0.0, %v4613
    %v4615 = vpop.f32.mrb[0].mxu0
    %4616 = vmatprep.mubr.bf16.mxu0 0
    %4617 = vmatmul.mubr.bf16.gmra.mrb[0].mxu0 %v4568
    %v4618 = vpop.f32.mrb[0].mxu0
    %v4619 = vpop.f32.mrb[0].mxu0
    %v4620 = vpop.f32.mrb[0].mxu0
    %v4621 = vpop.f32.mrb[0].mxu0
    %4622 = vdwg.mxu0
    %v4623 = vadd.f32 %v4289, %v4605
    %v4624 = vadd.f32 %v4292, %v4614
    %s4625 = scalar_lea.vmem %s19, 1
    %v4626 = vld [vmem:[%s4625] sm:$0x1]
    %v4628 = vlaneseq
    %v4629 = vshrl.u32 %v4628, 7
    %v4630 = vsub.s32 0, %v4629
    %v4631 = vrot.slane %v4626, %v4630
    %v4633 = vadd.f32 %v4623, %v4631
    %v4634 = vadd.f32 %v4624, %v4631
    %v4635 = vld [vmem:[%s20] sm:$0x1]
    %v4636 = vld [vmem:[%s21] sm:$0x1]
    %v4637 = vsel %vm301, %v4633, 0.0
    %4638 = vadd.xlane.f32.xlu0 %v4637
    %v4639 = vpop.xlane.xlu0 %4638
    %v4640 = vsel %vm301, %v4634, 0.0
    %4641 = vadd.xlane.f32.xlu0 %v4640
    %v4642 = vpop.xlane.xlu0 %4641
    %v4643 = vmul.f32 %v4639, %v320
    %v4644 = vmul.f32 %v4642, %v320
    %v4645 = vsub.f32 %v4633, %v4643
    %v4646 = vsub.f32 %v4634, %v4644
    %v4647 = vmul.f32 %v4645, %v4645
    %v4648 = vmul.f32 %v4646, %v4646
    %v4649 = vsel %vm301, %v4647, 0.0
    %4650 = vadd.xlane.f32.xlu0 %v4649
    %v4651 = vpop.xlane.xlu0 %4650
    %v4652 = vsel %vm301, %v4648, 0.0
    %4653 = vadd.xlane.f32.xlu0 %v4652
    %v4654 = vpop.xlane.xlu0 %4653
    %v4655 = vmul.f32 %v4651, %v320
    %v4656 = vmul.f32 %v4654, %v320
    %v4657 = vadd.f32 %v4655, 1e-05
    %v4658 = vadd.f32 %v4656, 1e-05
    %v4659 = vrsqrt.pop %v4657
    %v4660 = vrsqrt.pop %v4658
    %v4661 = vmul.f32 %v4645, %v4659
    %v4662 = vmul.f32 %v4646, %v4660
    %v4664 = vlaneseq
    %v4665 = vshrl.u32 %v4664, 7
    %v4666 = vsub.s32 0, %v4665
    %v4667 = vrot.slane %v4635, %v4666
    %v4669 = vmul.f32 %v4661, %v4667
    %v4670 = vmul.f32 %v4662, %v4667
    %v4672 = vlaneseq
    %v4673 = vshrl.u32 %v4672, 7
    %v4674 = vsub.s32 0, %v4673
    %v4675 = vrot.slane %v4636, %v4674
    %v4677 = vadd.f32 %v4669, %v4675
    %v4678 = vadd.f32 %v4670, %v4675
    %v4679 = vld [vmem:[%s22] sm:$0xf]
    %v4680 = vld [vmem:[%s22 + $0x4] sm:$0xf]
    %v4681 = vld [vmem:[%s22 + $0x8] sm:$0xf]
    %v4682 = vld [vmem:[%s22 + $0xc] sm:$0xf]
    %v4683 = vpack.c.bf16 %v4677, %v4677
    %v4684 = vpack.c.bf16 %v4678, %v4678
    %v4685 = vld [vmem:[%s23] sm:$0x1]
    %v4687 = vlaneseq
    %v4688 = vshrl.u32 %v4687, 7
    %v4689 = vsub.s32 0, %v4688
    %v4690 = vrot.slane %v4685, %v4689
    %v4694 = vunpack.c.l.b16 %v4683
    %v4695 = vunpack.c.l.b16 %v4684
    %v4696 = vrot.slane %v4695, 7
    %vm4697 = vcmask 1041409
    %v4698 = vsel %vm4697, %v4696, %v4694
    %v4699 = vpack.c.b16 %v4698, %v4698
    %v4704 = vunpack.c.l.b16 %v4679
    %v4705 = vunpack.c.l.b16 %v4680
    %v4706 = vunpack.c.l.b16 %v4681
    %v4707 = vunpack.c.l.b16 %v4682
    %v4708 = vpack.c.b16 %v4705, %v4704
    %v4709 = vpack.c.b16 %v4707, %v4706
    %v4713 = vsel %vm301, %v4699, 0
    %4715 = vmatprep.subr.bf16.mxu0 0
    %4716 = vmatpush1.bf16.msra.mxu0 %v4708
    %4717 = vmatprep.subr.bf16.mxu0 0
    %4718 = vmatpush1.bf16.msra.mxu0 %v4709
    %4719 = vmatprep.subr.bf16.mxu0 0
    %4720 = vmatpush1.bf16.msra.mxu0 0
    %4721 = vmatprep.subr.bf16.mxu0 0
    %4722 = vmatpush1.bf16.msra.mxu0 0
    %4723 = vmatprep.subr.bf16.mxu0 0
    %4724 = vmatpush1.bf16.msra.mxu0 0
    %4725 = vmatprep.subr.bf16.mxu0 0
    %4726 = vmatpush1.bf16.msra.mxu0 0
    %4727 = vmatprep.subr.bf16.mxu0 0
    %4728 = vmatpush1.bf16.msra.mxu0 0
    %4729 = vmatprep.subr.bf16.mxu0 0
    %4730 = vmatpush1.bf16.msra.mxu0 0
    %4731 = vmatprep.subr.bf16.mxu0 0
    %4732 = vmatpush1.bf16.msra.mxu0 0
    %4733 = vmatprep.subr.bf16.mxu0 0
    %4734 = vmatpush1.bf16.msra.mxu0 0
    %4735 = vmatprep.subr.bf16.mxu0 0
    %4736 = vmatpush1.bf16.msra.mxu0 0
    %4737 = vmatprep.subr.bf16.mxu0 0
    %4738 = vmatpush1.bf16.msra.mxu0 0
    %4739 = vmatprep.subr.bf16.mxu0 0
    %4740 = vmatpush1.bf16.msra.mxu0 0
    %4741 = vmatprep.subr.bf16.mxu0 0
    %4742 = vmatpush1.bf16.msra.mxu0 0
    %4743 = vmatprep.subr.bf16.mxu0 0
    %4744 = vmatpush1.bf16.msra.mxu0 0
    %4745 = vmatprep.subr.bf16.mxu0 0
    %4746 = vmatpush1.bf16.msra.mxu0 0
    %4747 = vmatprep.mubr.bf16.mxu0 0
    %4748 = vmatmul.mubr.bf16.gmra.mrb[0].mxu0 %v4713
    %v4749 = vpop.f32.mrb[0].mxu0
    %v4750 = vadd.f32 %v4690, %v4749
    %v4751 = vpop.f32.mrb[0].mxu0
    %v4752 = vpop.f32.mrb[0].mxu0
    %v4753 = vpop.f32.mrb[0].mxu0
    %4754 = vdwg.mxu0
    %4755 = vst [vmem:[#allocation2] sm:$0x3] %v4750
    // Predicated region
    $region98: #{vit_forward.1} parent=1 // pred_check
      _
    $region99: #{vit_forward.1} parent=1 // pred_check_branch
      %4757 = sbr.rel (0) target = $region101
    $region100: #{vit_forward.1} parent=1 // pred_region
      %s4759 = ssub.s32 32, 32
      %4760 = vsyncadd [#allocation3], %s4759
      %s4762 = sshll.u32 [#allocation2], 4
      %s4763 = int_to_ptr.vmem [resolvable:$true] %s4762
      %4765 = dma.vmem_to_hbm [thread:$0]  %s4763, 32, %s24, [#allocation3]
    $region101: #{vit_forward.1} parent=1 // pred_fallthru
      _
    // Predicated region
    $region102: #{vit_forward.1} parent=1 // pred_check
      _
    $region103: #{vit_forward.1} parent=1 // pred_check_branch
      %4767 = sbr.rel (0) target = $region105
    $region104: #{vit_forward.1} parent=1 // pred_region
      %4768 = dma.done [#allocation3], 32
    $region105: #{vit_forward.1} parent=1 // pred_fallthru
      _
    %4769 = vsyncpa [#allocation3], 1

</llo_original>
